<compile_context>
chip_gen: v7x
topology: tpu7x:2x2x1
jax: 0.10.0
libtpu: 0.0.40
codegen_flags: <defaults>
</compile_context>

<pallas_src>
import functools

import numpy as np
import jax
import jax.numpy as jnp
from jax import lax
from jax.experimental import pallas as pl
from jax.experimental.pallas import tpu as pltpu


def _conv_gn_relu_kernel(x_ref, w_ref, gamma_ref, beta_ref, p_ref, pt_ref,
                         o_ref, acc_ref, *, h, w, cin, group_size, eps):
    # x_ref:     (1, H+2, W+2, Cin)  bf16  halo-padded input tile (one sample)
    # w_ref:     (9, Cin, Cpad)      bf16  conv taps, channel-padded
    # gamma/beta:(1, Cpad)           f32   (zero on pad channels)
    # p_ref:     (Cpad, G) f32 one-hot group membership;  pt_ref: (G, Cpad)
    # o_ref:     (1, H*W, Cpad)      lane-dense output tile
    # acc_ref:   (H*W, Cpad)         f32 VMEM scratch (conv result)
    hw = h * w
    cpad = o_ref.shape[-1]

    # --- 3x3 conv as 9 shifted matmuls over the halo tile (no im2col in HBM).
    # The (H, W, Cin) -> (H*W, Cin) reshape is layout-free when W % 8 == 0
    # (lane dim Cin untouched), which holds for typical FPN feature maps.
    xs = x_ref[0].astype(jnp.float32)
    acc = jnp.zeros((hw, cpad), jnp.float32)
    for t in range(9):
        dy, dx = t // 3, t % 3
        win = xs[dy:dy + h, dx:dx + w, :].reshape(hw, cin).astype(jnp.bfloat16)
        acc = acc + jnp.dot(win, w_ref[t], preferred_element_type=jnp.float32)
    acc_ref[...] = acc

    # --- GroupNorm statistics: per-channel sums, skinny one-hot reduce to
    # groups, broadcast back. Pad channels (all-zero rows in P) fall out as 0.
    ch_sum = jnp.sum(acc, axis=0, keepdims=True)          # (1, Cpad)
    ch_sq = jnp.sum(acc * acc, axis=0, keepdims=True)     # (1, Cpad)
    inv_count = 1.0 / float(hw * group_size)
    g_mean = jnp.dot(ch_sum, p_ref[...],
                     preferred_element_type=jnp.float32) * inv_count   # (1, G)
    g_sq = jnp.dot(ch_sq, p_ref[...],
                   preferred_element_type=jnp.float32) * inv_count
    g_var = jnp.maximum(g_sq - g_mean * g_mean, 0.0)      # clamp: no NaN rsqrt
    g_inv = lax.rsqrt(g_var + eps)                        # EUP
    mean_c = jnp.dot(g_mean, pt_ref[...], preferred_element_type=jnp.float32)
    inv_c = jnp.dot(g_inv, pt_ref[...], preferred_element_type=jnp.float32)

    # --- Folded affine + ReLU:  y = max(acc * scale + shift, 0)
    scale = inv_c * gamma_ref[...]
    shift = beta_ref[...] - mean_c * scale
    y = jnp.maximum(acc_ref[...] * scale + shift, 0.0)
    o_ref[0] = y.astype(o_ref.dtype)


def _interp_matrix(out_size, in_size):
    # 1-D linear interpolation matrix, align_corners=True semantics.
    if in_size == 1:
        return jnp.ones((out_size, 1), jnp.float32)
    src = jnp.arange(out_size, dtype=jnp.float32) * (in_size - 1) / (out_size - 1)
    lo = jnp.clip(jnp.floor(src).astype(jnp.int32), 0, in_size - 2)
    frac = src - lo.astype(jnp.float32)
    rows = jnp.arange(out_size)
    m = jnp.zeros((out_size, in_size), jnp.float32)
    m = m.at[rows, lo].add(1.0 - frac)
    m = m.at[rows, lo + 1].add(frac)
    return m


def _bilinear_upsample_x2_align_corners(y_nhwc):
    # TODO(synk): fusing this into the Pallas kernel (two extra MXU matmuls on
    # the resident normalized tile) needs a sublane-crossing (2W,2H,C)->(2H,2W,C)
    # transpose in Mosaic; kept as two small XLA matmuls for now.
    n, h, w, c = y_nhwc.shape
    rh = _interp_matrix(2 * h, h)
    rw = _interp_matrix(2 * w, w)
    t = jnp.einsum('oh,nhwc->nowc', rh, y_nhwc, precision=lax.Precision.HIGHEST)
    return jnp.einsum('pw,nowc->nopc', rw, t, precision=lax.Precision.HIGHEST)


def conv3x3_gn_relu(x_nchw, weight, gamma, beta, *, num_groups=32, eps=1e-5,
                    upsample=False, out_dtype=jnp.float32):
    n, cin, h, w = x_nchw.shape
    cout = weight.shape[0]
    assert cout % num_groups == 0
    group_size = cout // num_groups
    cpad = ((cout + 127) // 128) * 128          # lane-dense output channels

    # NCHW -> NHWC, 1-pixel spatial halo, bf16 matmul inputs (f32 accumulation).
    x = jnp.transpose(x_nchw, (0, 2, 3, 1))
    xp = jnp.pad(x, ((0, 0), (1, 1), (1, 1), (0, 0))).astype(jnp.bfloat16)

    # PyTorch (Cout, Cin, 3, 3) -> 9 taps of (Cin, Cpad), zero-padded channels.
    wt = jnp.transpose(weight, (2, 3, 1, 0)).reshape(9, cin, cout)
    wt = jnp.pad(wt, ((0, 0), (0, 0), (0, cpad - cout))).astype(jnp.bfloat16)

    gamma_p = jnp.pad(gamma.astype(jnp.float32), (0, cpad - cout)).reshape(1, cpad)
    beta_p = jnp.pad(beta.astype(jnp.float32), (0, cpad - cout)).reshape(1, cpad)

    # Skinny group one-hot and its transpose (pad channels -> all-zero rows, so
    # they get mean=0, scale=0 and come out exactly 0 after ReLU).
    ch = jnp.arange(cpad)
    pmat = ((ch[:, None] < cout) &
            ((ch[:, None] // group_size) == jnp.arange(num_groups)[None, :]))
    pmat = pmat.astype(jnp.float32)
    pmat_t = pmat.T

    kernel = functools.partial(_conv_gn_relu_kernel, h=h, w=w, cin=cin,
                               group_size=group_size, eps=eps)

    # Explicit VMEM budget: double-buffered blocks + f32 conv scratch + headroom.
    out_itemsize = np.dtype(out_dtype).itemsize
    in_bytes = ((h + 2) * (w + 2) * cin * 2 + 9 * cin * cpad * 2
                + 2 * cpad * 4 + 2 * cpad * num_groups * 4)
    out_bytes = h * w * cpad * out_itemsize
    vmem_bytes = 2 * (in_bytes + out_bytes) + h * w * cpad * 4 + (4 << 20)
    vmem_bytes = int(min(max(vmem_bytes, 32 << 20), 56 << 20))

    # TODO(synk): for large H*W (v7x: 64 MiB VMEM) tile the spatial axis with a
    # two-pass GroupNorm (conv+stats pass, normalize+ReLU pass) instead of one
    # full-sample resident tile; that also gives >=2 parallel grid steps when
    # N == 1 so both v7x TensorCores stay busy.
    out = pl.pallas_call(
        kernel,
        out_shape=jax.ShapeDtypeStruct((n, h * w, cpad), out_dtype),
        grid_spec=pltpu.PrefetchScalarGridSpec(
            num_scalar_prefetch=0,
            grid=(n,),
            in_specs=[
                pl.BlockSpec((1, h + 2, w + 2, cin), lambda i: (i, 0, 0, 0)),
                pl.BlockSpec((9, cin, cpad), lambda i: (0, 0, 0)),
                pl.BlockSpec((1, cpad), lambda i: (0, 0)),
                pl.BlockSpec((1, cpad), lambda i: (0, 0)),
                pl.BlockSpec((cpad, num_groups), lambda i: (0, 0)),
                pl.BlockSpec((num_groups, cpad), lambda i: (0, 0)),
            ],
            out_specs=pl.BlockSpec((1, h * w, cpad), lambda i: (i, 0, 0)),
            scratch_shapes=[pltpu.VMEM((h * w, cpad), jnp.float32)],
        ),
        compiler_params=pltpu.CompilerParams(
            dimension_semantics=("parallel",),
            vmem_limit_bytes=vmem_bytes,
        ),
    )(xp, wt, gamma_p, beta_p, pmat, pmat_t)

    y = out[:, :, :cout].reshape(n, h, w, cout)
    if upsample:
        y = _bilinear_upsample_x2_align_corners(y)
    return jnp.transpose(y, (0, 3, 1, 2))  # back to NCHW


def _reference(x, weight, gamma, beta, num_groups=32, eps=1e-5):
    # Pure-JAX reference of the PyTorch block (no upsample).
    conv = lax.conv_general_dilated(x, weight, window_strides=(1, 1),
                                    padding=((1, 1), (1, 1)),
                                    dimension_numbers=('NCHW', 'OIHW', 'NCHW'),
                                    precision=lax.Precision.HIGHEST)
    n, c, h, w = conv.shape
    g = conv.reshape(n, num_groups, c // num_groups, h, w)
    mean = g.mean(axis=(2, 3, 4), keepdims=True)
    var = g.var(axis=(2, 3, 4), keepdims=True)
    g = (g - mean) / jnp.sqrt(var + eps)
    y = g.reshape(n, c, h, w) * gamma[None, :, None, None] + beta[None, :, None, None]
    return jnp.maximum(y, 0.0)


if __name__ == "__main__":
    key = jax.random.PRNGKey(0)
    k1, k2, k3, k4 = jax.random.split(key, 4)

    N, CIN, H, W = 2, 4, 16, 16
    COUT, NUM_GROUPS = 32, 32  # GroupNorm(32, out_channels) needs Cout % 32 == 0

    x = jax.random.normal(k1, (N, CIN, H, W), jnp.float32)
    weight = 0.1 * jax.random.normal(k2, (COUT, CIN, 3, 3), jnp.float32)
    gamma = 1.0 + 0.1 * jax.random.normal(k3, (COUT,), jnp.float32)
    beta = 0.1 * jax.random.normal(k4, (COUT,), jnp.float32)

    out = jax.block_until_ready(
        conv3x3_gn_relu(x, weight, gamma, beta, num_groups=NUM_GROUPS))
    assert out.shape == (N, COUT, H, W)

    # Tight check vs a reference fed the same bf16-rounded conv inputs.
    x_q = x.astype(jnp.bfloat16).astype(jnp.float32)
    w_q = weight.astype(jnp.bfloat16).astype(jnp.float32)
    ref_q = _reference(x_q, w_q, gamma, beta, num_groups=NUM_GROUPS)
    assert jnp.allclose(out, ref_q, atol=2e-3, rtol=2e-3), "mismatch vs bf16-input reference"

    # Loose check vs the exact-f32 PyTorch-semantics reference (covers the
    # bf16 input-rounding that the perf feedback asked for).
    ref = _reference(x, weight, gamma, beta, num_groups=NUM_GROUPS)
    assert jnp.allclose(out, ref, atol=5e-2, rtol=5e-2), "mismatch vs f32 reference"

    # Upsample path: shape + numeric check (same align_corners interp matrices).
    out_up = jax.block_until_ready(
        conv3x3_gn_relu(x, weight, gamma, beta, num_groups=NUM_GROUPS, upsample=True))
    assert out_up.shape == (N, COUT, 2 * H, 2 * W)
    rh = _interp_matrix(2 * H, H)
    rw = _interp_matrix(2 * W, W)
    ref_up = jnp.einsum('oh,nchw->ncow', rh, ref_q, precision=lax.Precision.HIGHEST)
    ref_up = jnp.einsum('pw,ncow->ncop', rw, ref_up, precision=lax.Precision.HIGHEST)
    assert jnp.allclose(out_up, ref_up, atol=2e-3, rtol=2e-3), "mismatch vs upsampled reference"

    print("KERNEL_OK")
</pallas_src>

<mosaic_0001>
module attributes {stable_mosaic.version = 11 : i64} {
  func.func @_conv_gn_relu_kernel(%arg0: i32, %arg1: memref<1x18x18x4xbf16, #tpu.memory_space<vmem>>, %arg2: memref<9x4x128xbf16, #tpu.memory_space<vmem>>, %arg3: memref<1x128xf32, #tpu.memory_space<vmem>>, %arg4: memref<1x128xf32, #tpu.memory_space<vmem>>, %arg5: memref<128x32xf32, #tpu.memory_space<vmem>>, %arg6: memref<32x128xf32, #tpu.memory_space<vmem>>, %arg7: memref<1x256x128xf32, #tpu.memory_space<vmem>>, %arg8: memref<256x128xf32, #tpu.memory_space<vmem>>) attributes {dimension_semantics = [#tpu.dimension_semantics<parallel>], iteration_bounds = array<i64: 2>, scalar_prefetch = 0 : i64, scratch_operands = 1 : i64, tpu.core_type = #tpu.core_type<tc>, window_params = [{transform_indices = @transform_0, window_bounds = array<i64: 1, 18, 18, 4>}, {pipeline_mode = #tpu.pipeline_mode<synchronous>, transform_indices = @transform_1, window_bounds = array<i64: 9, 4, 128>}, {pipeline_mode = #tpu.pipeline_mode<synchronous>, transform_indices = @transform_2, window_bounds = array<i64: 1, 128>}, {pipeline_mode = #tpu.pipeline_mode<synchronous>, transform_indices = @transform_3, window_bounds = array<i64: 1, 128>}, {pipeline_mode = #tpu.pipeline_mode<synchronous>, transform_indices = @transform_4, window_bounds = array<i64: 128, 32>}, {pipeline_mode = #tpu.pipeline_mode<synchronous>, transform_indices = @transform_5, window_bounds = array<i64: 32, 128>}, {transform_indices = @transform_6, window_bounds = array<i64: 1, 256, 128>}]} {
    %c0 = arith.constant 0 : index
    %c0_0 = arith.constant 0 : index
    %c0_1 = arith.constant 0 : index
    %c0_2 = arith.constant 0 : index
    %0 = vector.load %arg1[%c0, %c0_0, %c0_1, %c0_2] : memref<1x18x18x4xbf16, #tpu.memory_space<vmem>>, vector<1x18x18x4xbf16>
    %1 = vector.shape_cast %0 : vector<1x18x18x4xbf16> to vector<18x18x4xbf16>
    %2 = arith.extf %1 : vector<18x18x4xbf16> to vector<18x18x4xf32>
    %cst = arith.constant 0.000000e+00 : f32
    %3 = vector.broadcast %cst : f32 to vector<256x128xf32>
    %4 = vector.extract_strided_slice %2 {offsets = [0, 0, 0], sizes = [16, 16, 4], strides = [1, 1, 1]} : vector<18x18x4xf32> to vector<16x16x4xf32>
    %5 = vector.shape_cast %4 : vector<16x16x4xf32> to vector<256x4xf32>
    %6 = arith.truncf %5 : vector<256x4xf32> to vector<256x4xbf16>
    %c0_3 = arith.constant 0 : index
    %c0_4 = arith.constant 0 : index
    %c0_5 = arith.constant 0 : index
    %7 = vector.load %arg2[%c0_3, %c0_4, %c0_5] : memref<9x4x128xbf16, #tpu.memory_space<vmem>>, vector<1x4x128xbf16>
    %8 = vector.shape_cast %7 : vector<1x4x128xbf16> to vector<4x128xbf16>
    %cst_6 = arith.constant dense<0.000000e+00> : vector<256x128xf32>
    %9 = tpu.matmul %6, %8, %cst_6 {dimension_numbers = #tpu.dot_dimension_numbers<[1], [0], [0], [1], [0, 0, 1, 1], [], []>} : vector<256x4xbf16>, vector<4x128xbf16>, vector<256x128xf32> -> vector<256x128xf32>
    %10 = arith.addf %3, %9 : vector<256x128xf32>
    %11 = vector.extract_strided_slice %2 {offsets = [0, 1, 0], sizes = [16, 16, 4], strides = [1, 1, 1]} : vector<18x18x4xf32> to vector<16x16x4xf32>
    %12 = vector.shape_cast %11 : vector<16x16x4xf32> to vector<256x4xf32>
    %13 = arith.truncf %12 : vector<256x4xf32> to vector<256x4xbf16>
    %c1 = arith.constant 1 : index
    %c0_7 = arith.constant 0 : index
    %c0_8 = arith.constant 0 : index
    %14 = vector.load %arg2[%c1, %c0_7, %c0_8] : memref<9x4x128xbf16, #tpu.memory_space<vmem>>, vector<1x4x128xbf16>
    %15 = vector.shape_cast %14 : vector<1x4x128xbf16> to vector<4x128xbf16>
    %cst_9 = arith.constant dense<0.000000e+00> : vector<256x128xf32>
    %16 = tpu.matmul %13, %15, %cst_9 {dimension_numbers = #tpu.dot_dimension_numbers<[1], [0], [0], [1], [0, 0, 1, 1], [], []>} : vector<256x4xbf16>, vector<4x128xbf16>, vector<256x128xf32> -> vector<256x128xf32>
    %17 = arith.addf %10, %16 : vector<256x128xf32>
    %18 = vector.extract_strided_slice %2 {offsets = [0, 2, 0], sizes = [16, 16, 4], strides = [1, 1, 1]} : vector<18x18x4xf32> to vector<16x16x4xf32>
    %19 = vector.shape_cast %18 : vector<16x16x4xf32> to vector<256x4xf32>
    %20 = arith.truncf %19 : vector<256x4xf32> to vector<256x4xbf16>
    %c2 = arith.constant 2 : index
    %c0_10 = arith.constant 0 : index
    %c0_11 = arith.constant 0 : index
    %21 = vector.load %arg2[%c2, %c0_10, %c0_11] : memref<9x4x128xbf16, #tpu.memory_space<vmem>>, vector<1x4x128xbf16>
    %22 = vector.shape_cast %21 : vector<1x4x128xbf16> to vector<4x128xbf16>
    %cst_12 = arith.constant dense<0.000000e+00> : vector<256x128xf32>
    %23 = tpu.matmul %20, %22, %cst_12 {dimension_numbers = #tpu.dot_dimension_numbers<[1], [0], [0], [1], [0, 0, 1, 1], [], []>} : vector<256x4xbf16>, vector<4x128xbf16>, vector<256x128xf32> -> vector<256x128xf32>
    %24 = arith.addf %17, %23 : vector<256x128xf32>
    %25 = vector.extract_strided_slice %2 {offsets = [1, 0, 0], sizes = [16, 16, 4], strides = [1, 1, 1]} : vector<18x18x4xf32> to vector<16x16x4xf32>
    %26 = vector.shape_cast %25 : vector<16x16x4xf32> to vector<256x4xf32>
    %27 = arith.truncf %26 : vector<256x4xf32> to vector<256x4xbf16>
    %c3 = arith.constant 3 : index
    %c0_13 = arith.constant 0 : index
    %c0_14 = arith.constant 0 : index
    %28 = vector.load %arg2[%c3, %c0_13, %c0_14] : memref<9x4x128xbf16, #tpu.memory_space<vmem>>, vector<1x4x128xbf16>
    %29 = vector.shape_cast %28 : vector<1x4x128xbf16> to vector<4x128xbf16>
    %cst_15 = arith.constant dense<0.000000e+00> : vector<256x128xf32>
    %30 = tpu.matmul %27, %29, %cst_15 {dimension_numbers = #tpu.dot_dimension_numbers<[1], [0], [0], [1], [0, 0, 1, 1], [], []>} : vector<256x4xbf16>, vector<4x128xbf16>, vector<256x128xf32> -> vector<256x128xf32>
    %31 = arith.addf %24, %30 : vector<256x128xf32>
    %32 = vector.extract_strided_slice %2 {offsets = [1, 1, 0], sizes = [16, 16, 4], strides = [1, 1, 1]} : vector<18x18x4xf32> to vector<16x16x4xf32>
    %33 = vector.shape_cast %32 : vector<16x16x4xf32> to vector<256x4xf32>
    %34 = arith.truncf %33 : vector<256x4xf32> to vector<256x4xbf16>
    %c4 = arith.constant 4 : index
    %c0_16 = arith.constant 0 : index
    %c0_17 = arith.constant 0 : index
    %35 = vector.load %arg2[%c4, %c0_16, %c0_17] : memref<9x4x128xbf16, #tpu.memory_space<vmem>>, vector<1x4x128xbf16>
    %36 = vector.shape_cast %35 : vector<1x4x128xbf16> to vector<4x128xbf16>
    %cst_18 = arith.constant dense<0.000000e+00> : vector<256x128xf32>
    %37 = tpu.matmul %34, %36, %cst_18 {dimension_numbers = #tpu.dot_dimension_numbers<[1], [0], [0], [1], [0, 0, 1, 1], [], []>} : vector<256x4xbf16>, vector<4x128xbf16>, vector<256x128xf32> -> vector<256x128xf32>
    %38 = arith.addf %31, %37 : vector<256x128xf32>
    %39 = vector.extract_strided_slice %2 {offsets = [1, 2, 0], sizes = [16, 16, 4], strides = [1, 1, 1]} : vector<18x18x4xf32> to vector<16x16x4xf32>
    %40 = vector.shape_cast %39 : vector<16x16x4xf32> to vector<256x4xf32>
    %41 = arith.truncf %40 : vector<256x4xf32> to vector<256x4xbf16>
    %c5 = arith.constant 5 : index
    %c0_19 = arith.constant 0 : index
    %c0_20 = arith.constant 0 : index
    %42 = vector.load %arg2[%c5, %c0_19, %c0_20] : memref<9x4x128xbf16, #tpu.memory_space<vmem>>, vector<1x4x128xbf16>
    %43 = vector.shape_cast %42 : vector<1x4x128xbf16> to vector<4x128xbf16>
    %cst_21 = arith.constant dense<0.000000e+00> : vector<256x128xf32>
    %44 = tpu.matmul %41, %43, %cst_21 {dimension_numbers = #tpu.dot_dimension_numbers<[1], [0], [0], [1], [0, 0, 1, 1], [], []>} : vector<256x4xbf16>, vector<4x128xbf16>, vector<256x128xf32> -> vector<256x128xf32>
    %45 = arith.addf %38, %44 : vector<256x128xf32>
    %46 = vector.extract_strided_slice %2 {offsets = [2, 0, 0], sizes = [16, 16, 4], strides = [1, 1, 1]} : vector<18x18x4xf32> to vector<16x16x4xf32>
    %47 = vector.shape_cast %46 : vector<16x16x4xf32> to vector<256x4xf32>
    %48 = arith.truncf %47 : vector<256x4xf32> to vector<256x4xbf16>
    %c6 = arith.constant 6 : index
    %c0_22 = arith.constant 0 : index
    %c0_23 = arith.constant 0 : index
    %49 = vector.load %arg2[%c6, %c0_22, %c0_23] : memref<9x4x128xbf16, #tpu.memory_space<vmem>>, vector<1x4x128xbf16>
    %50 = vector.shape_cast %49 : vector<1x4x128xbf16> to vector<4x128xbf16>
    %cst_24 = arith.constant dense<0.000000e+00> : vector<256x128xf32>
    %51 = tpu.matmul %48, %50, %cst_24 {dimension_numbers = #tpu.dot_dimension_numbers<[1], [0], [0], [1], [0, 0, 1, 1], [], []>} : vector<256x4xbf16>, vector<4x128xbf16>, vector<256x128xf32> -> vector<256x128xf32>
    %52 = arith.addf %45, %51 : vector<256x128xf32>
    %53 = vector.extract_strided_slice %2 {offsets = [2, 1, 0], sizes = [16, 16, 4], strides = [1, 1, 1]} : vector<18x18x4xf32> to vector<16x16x4xf32>
    %54 = vector.shape_cast %53 : vector<16x16x4xf32> to vector<256x4xf32>
    %55 = arith.truncf %54 : vector<256x4xf32> to vector<256x4xbf16>
    %c7 = arith.constant 7 : index
    %c0_25 = arith.constant 0 : index
    %c0_26 = arith.constant 0 : index
    %56 = vector.load %arg2[%c7, %c0_25, %c0_26] : memref<9x4x128xbf16, #tpu.memory_space<vmem>>, vector<1x4x128xbf16>
    %57 = vector.shape_cast %56 : vector<1x4x128xbf16> to vector<4x128xbf16>
    %cst_27 = arith.constant dense<0.000000e+00> : vector<256x128xf32>
    %58 = tpu.matmul %55, %57, %cst_27 {dimension_numbers = #tpu.dot_dimension_numbers<[1], [0], [0], [1], [0, 0, 1, 1], [], []>} : vector<256x4xbf16>, vector<4x128xbf16>, vector<256x128xf32> -> vector<256x128xf32>
    %59 = arith.addf %52, %58 : vector<256x128xf32>
    %60 = vector.extract_strided_slice %2 {offsets = [2, 2, 0], sizes = [16, 16, 4], strides = [1, 1, 1]} : vector<18x18x4xf32> to vector<16x16x4xf32>
    %61 = vector.shape_cast %60 : vector<16x16x4xf32> to vector<256x4xf32>
    %62 = arith.truncf %61 : vector<256x4xf32> to vector<256x4xbf16>
    %c8 = arith.constant 8 : index
    %c0_28 = arith.constant 0 : index
    %c0_29 = arith.constant 0 : index
    %63 = vector.load %arg2[%c8, %c0_28, %c0_29] : memref<9x4x128xbf16, #tpu.memory_space<vmem>>, vector<1x4x128xbf16>
    %64 = vector.shape_cast %63 : vector<1x4x128xbf16> to vector<4x128xbf16>
    %cst_30 = arith.constant dense<0.000000e+00> : vector<256x128xf32>
    %65 = tpu.matmul %62, %64, %cst_30 {dimension_numbers = #tpu.dot_dimension_numbers<[1], [0], [0], [1], [0, 0, 1, 1], [], []>} : vector<256x4xbf16>, vector<4x128xbf16>, vector<256x128xf32> -> vector<256x128xf32>
    %66 = arith.addf %59, %65 : vector<256x128xf32>
    %c0_31 = arith.constant 0 : index
    %c0_32 = arith.constant 0 : index
    %67 = vector.load %arg8[%c0_31, %c0_32] : memref<256x128xf32, #tpu.memory_space<vmem>>, vector<256x128xf32>
    tpu.vector_store %arg8[%c0_31, %c0_32], %66 {strides = array<i32>} : memref<256x128xf32, #tpu.memory_space<vmem>>, vector<256x128xf32>,
    %cst_33 = arith.constant dense<0.000000e+00> : vector<128xf32>
    %68 = vector.multi_reduction <add>, %66, %cst_33 [0] : vector<256x128xf32> to vector<128xf32>
    %69 = vector.shape_cast %68 : vector<128xf32> to vector<1x128xf32>
    %70 = arith.mulf %66, %66 : vector<256x128xf32>
    %cst_34 = arith.constant dense<0.000000e+00> : vector<128xf32>
    %71 = vector.multi_reduction <add>, %70, %cst_34 [0] : vector<256x128xf32> to vector<128xf32>
    %72 = vector.shape_cast %71 : vector<128xf32> to vector<1x128xf32>
    %c0_35 = arith.constant 0 : index
    %c0_36 = arith.constant 0 : index
    %73 = vector.load %arg5[%c0_35, %c0_36] : memref<128x32xf32, #tpu.memory_space<vmem>>, vector<128x32xf32>
    %cst_37 = arith.constant dense<0.000000e+00> : vector<1x32xf32>
    %74 = tpu.matmul %69, %73, %cst_37 {dimension_numbers = #tpu.dot_dimension_numbers<[1], [0], [0], [1], [0, 0, 1, 1], [], []>} : vector<1x128xf32>, vector<128x32xf32>, vector<1x32xf32> -> vector<1x32xf32>
    %cst_38 = arith.constant 3.906250e-03 : f32
    %75 = vector.broadcast %cst_38 : f32 to vector<1x32xf32>
    %76 = arith.mulf %74, %75 : vector<1x32xf32>
    %c0_39 = arith.constant 0 : index
    %c0_40 = arith.constant 0 : index
    %77 = vector.load %arg5[%c0_39, %c0_40] : memref<128x32xf32, #tpu.memory_space<vmem>>, vector<128x32xf32>
    %cst_41 = arith.constant dense<0.000000e+00> : vector<1x32xf32>
    %78 = tpu.matmul %72, %77, %cst_41 {dimension_numbers = #tpu.dot_dimension_numbers<[1], [0], [0], [1], [0, 0, 1, 1], [], []>} : vector<1x128xf32>, vector<128x32xf32>, vector<1x32xf32> -> vector<1x32xf32>
    %cst_42 = arith.constant 3.906250e-03 : f32
    %79 = vector.broadcast %cst_42 : f32 to vector<1x32xf32>
    %80 = arith.mulf %78, %79 : vector<1x32xf32>
    %81 = arith.mulf %76, %76 : vector<1x32xf32>
    %82 = arith.subf %80, %81 : vector<1x32xf32>
    %cst_43 = arith.constant 0.000000e+00 : f32
    %83 = vector.broadcast %cst_43 : f32 to vector<1x32xf32>
    %84 = arith.maximumf %82, %83 : vector<1x32xf32>
    %cst_44 = arith.constant 9.99999974E-6 : f32
    %85 = vector.broadcast %cst_44 : f32 to vector<1x32xf32>
    %86 = arith.addf %84, %85 : vector<1x32xf32>
    %87 = math.rsqrt %86 : vector<1x32xf32>
    %c0_45 = arith.constant 0 : index
    %c0_46 = arith.constant 0 : index
    %88 = vector.load %arg6[%c0_45, %c0_46] : memref<32x128xf32, #tpu.memory_space<vmem>>, vector<32x128xf32>
    %cst_47 = arith.constant dense<0.000000e+00> : vector<1x128xf32>
    %89 = tpu.matmul %76, %88, %cst_47 {dimension_numbers = #tpu.dot_dimension_numbers<[1], [0], [0], [1], [0, 0, 1, 1], [], []>} : vector<1x32xf32>, vector<32x128xf32>, vector<1x128xf32> -> vector<1x128xf32>
    %c0_48 = arith.constant 0 : index
    %c0_49 = arith.constant 0 : index
    %90 = vector.load %arg6[%c0_48, %c0_49] : memref<32x128xf32, #tpu.memory_space<vmem>>, vector<32x128xf32>
    %cst_50 = arith.constant dense<0.000000e+00> : vector<1x128xf32>
    %91 = tpu.matmul %87, %90, %cst_50 {dimension_numbers = #tpu.dot_dimension_numbers<[1], [0], [0], [1], [0, 0, 1, 1], [], []>} : vector<1x32xf32>, vector<32x128xf32>, vector<1x128xf32> -> vector<1x128xf32>
    %c0_51 = arith.constant 0 : index
    %c0_52 = arith.constant 0 : index
    %92 = vector.load %arg3[%c0_51, %c0_52] : memref<1x128xf32, #tpu.memory_space<vmem>>, vector<1x128xf32>
    %93 = arith.mulf %91, %92 : vector<1x128xf32>
    %c0_53 = arith.constant 0 : index
    %c0_54 = arith.constant 0 : index
    %94 = vector.load %arg4[%c0_53, %c0_54] : memref<1x128xf32, #tpu.memory_space<vmem>>, vector<1x128xf32>
    %95 = arith.mulf %89, %93 : vector<1x128xf32>
    %96 = arith.subf %94, %95 : vector<1x128xf32>
    %c0_55 = arith.constant 0 : index
    %c0_56 = arith.constant 0 : index
    %97 = vector.load %arg8[%c0_55, %c0_56] : memref<256x128xf32, #tpu.memory_space<vmem>>, vector<256x128xf32>
    %98 = vector.broadcast %93 : vector<1x128xf32> to vector<256x128xf32>
    %99 = arith.mulf %97, %98 : vector<256x128xf32>
    %100 = vector.broadcast %96 : vector<1x128xf32> to vector<256x128xf32>
    %101 = arith.addf %99, %100 : vector<256x128xf32>
    %cst_57 = arith.constant 0.000000e+00 : f32
    %102 = vector.broadcast %cst_57 : f32 to vector<256x128xf32>
    %103 = arith.maximumf %101, %102 : vector<256x128xf32>
    %c0_58 = arith.constant 0 : index
    %c0_59 = arith.constant 0 : index
    %c0_60 = arith.constant 0 : index
    %104 = vector.load %arg7[%c0_58, %c0_59, %c0_60] : memref<1x256x128xf32, #tpu.memory_space<vmem>>, vector<1x256x128xf32>
    %105 = vector.shape_cast %104 : vector<1x256x128xf32> to vector<256x128xf32>
    %106 = vector.shape_cast %103 : vector<256x128xf32> to vector<1x256x128xf32>
    tpu.vector_store %arg7[%c0_58, %c0_59, %c0_60], %106 {strides = array<i32>} : memref<1x256x128xf32, #tpu.memory_space<vmem>>, vector<1x256x128xf32>,
    return
  }
  func.func @transform_0(%arg0: i32) -> (i32, i32, i32, i32) {
    %c0_i32 = arith.constant 0 : i32
    %c0_i32_0 = arith.constant 0 : i32
    %c0_i32_1 = arith.constant 0 : i32
    %c0_i32_2 = arith.constant 0 : i32
    return %arg0, %c0_i32, %c0_i32_0, %c0_i32_1 : i32, i32, i32, i32
  }
  func.func @transform_1(%arg0: i32) -> (i32, i32, i32) {
    %c0_i32 = arith.constant 0 : i32
    %c0_i32_0 = arith.constant 0 : i32
    %c0_i32_1 = arith.constant 0 : i32
    %c0_i32_2 = arith.constant 0 : i32
    return %c0_i32, %c0_i32_0, %c0_i32_1 : i32, i32, i32
  }
  func.func @transform_2(%arg0: i32) -> (i32, i32) {
    %c0_i32 = arith.constant 0 : i32
    %c0_i32_0 = arith.constant 0 : i32
    %c0_i32_1 = arith.constant 0 : i32
    return %c0_i32, %c0_i32_0 : i32, i32
  }
  func.func @transform_3(%arg0: i32) -> (i32, i32) {
    %c0_i32 = arith.constant 0 : i32
    %c0_i32_0 = arith.constant 0 : i32
    %c0_i32_1 = arith.constant 0 : i32
    return %c0_i32, %c0_i32_0 : i32, i32
  }
  func.func @transform_4(%arg0: i32) -> (i32, i32) {
    %c0_i32 = arith.constant 0 : i32
    %c0_i32_0 = arith.constant 0 : i32
    %c0_i32_1 = arith.constant 0 : i32
    return %c0_i32, %c0_i32_0 : i32, i32
  }
  func.func @transform_5(%arg0: i32) -> (i32, i32) {
    %c0_i32 = arith.constant 0 : i32
    %c0_i32_0 = arith.constant 0 : i32
    %c0_i32_1 = arith.constant 0 : i32
    return %c0_i32, %c0_i32_0 : i32, i32
  }
  func.func @transform_6(%arg0: i32) -> (i32, i32, i32) {
    %c0_i32 = arith.constant 0 : i32
    %c0_i32_0 = arith.constant 0 : i32
    %c0_i32_1 = arith.constant 0 : i32
    return %arg0, %c0_i32, %c0_i32_0 : i32, i32, i32
  }
}

</mosaic_0001>

<llo_original>
// kernel: tpu_custom_call.1
$region0: #{tpu_custom_call.1}
  #allocation0 [shape = 'u32[]', space=smem, size = 0x4, offset = 0x4, fixed_abs, tag = 'smem constant byte address 0x4 - core index']
  #allocation1 [shape = 'u32[144,128]{1,0:T(1,128)}', space=vmem, size = 0x12000, scoped, tag = 'internal scratch']
  #allocation2 [shape = 'f32[256,128]{1,0:T(8,128)}', space=vmem, size = 0x20000, scoped, tag = 'scratch operand']
  %s0 = inlined_call_operand.vmem [shape: bf16[2,18,18,4], index: 0, kind: input, shape index: {}]
  %s1 = inlined_call_operand.vmem [shape: bf16[9,4,128], index: 1, kind: input, shape index: {}]
  %s2 = inlined_call_operand.vmem [shape: f32[1,128], index: 2, kind: input, shape index: {}]
  %s3 = inlined_call_operand.vmem [shape: f32[1,128], index: 3, kind: input, shape index: {}]
  %s4 = inlined_call_operand.vmem [shape: f32[128,32], index: 4, kind: input, shape index: {}]
  %s5 = inlined_call_operand.vmem [shape: f32[32,128], index: 5, kind: input, shape index: {}]
  %s6 = inlined_call_operand.hbm [shape: f32[2,256,128], index: 6, kind: output, shape index: {}]
  %s7 = sld [smem:[#allocation0]]
  $region57: #{tpu_custom_call.1} parent=0
    _
  %s9 = ssub.s32 1, %s7
  %s10 = scalar_select 0, %s9, %s7
  $region1: #{tpu_custom_call.1} parent=0
    #allocation3 [shape = 'u8[262144]{0}', space=vmem, size = 0x40000, scoped, tag = 'output window, operand 0']
    #allocation4 [shape = 's32[2]{0}', space=sflag, size = 0x8, scoped, tag = 'scoped memory for tpu_custom_call.1']
    %11 = vsyncpa [#allocation4], 0
    %s12 = scalar_lea.sflag [#allocation4], 1
    %13 = vsyncpa %s12, 0
    loop: start=0, step=1, limit=4
    $region2: #{tpu_custom_call.1} parent=1 // loop_pre_header
      _
    $region3: #{tpu_custom_call.1} parent=1 // loop_header
      %s15 = sphi 0, %s19
      %p16 = scmp.ge.s32.totalorder %s15, 4
      %s25 = sphi 0, %s27
      %s28 = sphi 0, %s25
      %s29 = sphi 0, %s28
      %s45 = sphi 0, %s29
      %s49 = sphi 0, %s49
      %s51 = sphi 0, %s49
      %s52 = sphi 0, %s51
      %s66 = sphi 0, %s52
      %s70 = sphi 0, %s70
      %s72 = sphi 0, %s70
      %s73 = sphi 0, %s72
      %s87 = sphi 0, %s73
      %s91 = sphi 0, %s91
      %s93 = sphi 0, %s91
      %s94 = sphi 0, %s93
      %s108 = sphi 0, %s94
      %s112 = sphi 0, %s112
      %s114 = sphi 0, %s112
      %s115 = sphi 0, %s114
      %s129 = sphi 0, %s115
      %s133 = sphi 0, %s133
      %s135 = sphi 0, %s133
      %s136 = sphi 0, %s135
      %s150 = sphi 0, %s136
      %s156 = sphi 0, %s158
      %s159 = sphi 0, %s156
      %s160 = sphi 0, %s159
      %s176 = sphi 0, %s160
    $region4: #{tpu_custom_call.1} parent=1 // loop_header_branch
      %18 = sbr.rel (%p16) target = $region8
    $region5: #{tpu_custom_call.1} parent=1 // loop_body
      %s20 = ssub.s32 %s15, 1
      %s21 = ssub.s32 %s15, 2
      %s22 = sadd.s32 %s15, 1
      %s23 = ssub.s32 %s15, %s22
      %p24 = scmp.eq.s32.totalorder %s23, 0
      %s26 = sadd.s32 %s25, 1
      %s27 = scalar_select %p24, %s25, %s26
      %p30 = pneg %p24
      %p31 = scmp.eq.s32.totalorder %s15, 1
      %p32 = por %p30, %p31
      %p33 = scmp.ne.s32.totalorder %s25, %s28
      %p34 = scmp.eq.s32.totalorder %s15, 0
      %p35 = por %p33, %p34
      %p36 = scmp.ne.s32.totalorder %s25, %s28
      %p37 = scmp.eq.s32.totalorder %s20, 1
      %p38 = por %p36, %p37
      %p39 = scmp.ne.s32.totalorder %s28, %s29
      %p40 = scmp.eq.s32.totalorder %s20, 0
      %p41 = por %p39, %p40
      %p42 = scmp.ne.s32.totalorder %s28, %s29
      %p43 = scmp.eq.s32.totalorder %s21, 1
      %p44 = por %p42, %p43
      %p46 = scmp.ne.s32.totalorder %s29, %s45
      %p47 = scmp.eq.s32.totalorder %s21, 0
      %p48 = por %p46, %p47
      %s50 = sadd.s32 %s49, 1
      %p53 = scmp.eq.s32.totalorder %s15, 1
      %p54 = scmp.ne.s32.totalorder %s49, %s51
      %p55 = scmp.eq.s32.totalorder %s15, 0
      %p56 = por %p54, %p55
      %p57 = scmp.ne.s32.totalorder %s49, %s51
      %p58 = scmp.eq.s32.totalorder %s20, 1
      %p59 = por %p57, %p58
      %p60 = scmp.ne.s32.totalorder %s51, %s52
      %p61 = scmp.eq.s32.totalorder %s20, 0
      %p62 = por %p60, %p61
      %p63 = scmp.ne.s32.totalorder %s51, %s52
      %p64 = scmp.eq.s32.totalorder %s21, 1
      %p65 = por %p63, %p64
      %p67 = scmp.ne.s32.totalorder %s52, %s66
      %p68 = scmp.eq.s32.totalorder %s21, 0
      %p69 = por %p67, %p68
      %s71 = sadd.s32 %s70, 1
      %p74 = scmp.eq.s32.totalorder %s15, 1
      %p75 = scmp.ne.s32.totalorder %s70, %s72
      %p76 = scmp.eq.s32.totalorder %s15, 0
      %p77 = por %p75, %p76
      %p78 = scmp.ne.s32.totalorder %s70, %s72
      %p79 = scmp.eq.s32.totalorder %s20, 1
      %p80 = por %p78, %p79
      %p81 = scmp.ne.s32.totalorder %s72, %s73
      %p82 = scmp.eq.s32.totalorder %s20, 0
      %p83 = por %p81, %p82
      %p84 = scmp.ne.s32.totalorder %s72, %s73
      %p85 = scmp.eq.s32.totalorder %s21, 1
      %p86 = por %p84, %p85
      %p88 = scmp.ne.s32.totalorder %s73, %s87
      %p89 = scmp.eq.s32.totalorder %s21, 0
      %p90 = por %p88, %p89
      %s92 = sadd.s32 %s91, 1
      %p95 = scmp.eq.s32.totalorder %s15, 1
      %p96 = scmp.ne.s32.totalorder %s91, %s93
      %p97 = scmp.eq.s32.totalorder %s15, 0
      %p98 = por %p96, %p97
      %p99 = scmp.ne.s32.totalorder %s91, %s93
      %p100 = scmp.eq.s32.totalorder %s20, 1
      %p101 = por %p99, %p100
      %p102 = scmp.ne.s32.totalorder %s93, %s94
      %p103 = scmp.eq.s32.totalorder %s20, 0
      %p104 = por %p102, %p103
      %p105 = scmp.ne.s32.totalorder %s93, %s94
      %p106 = scmp.eq.s32.totalorder %s21, 1
      %p107 = por %p105, %p106
      %p109 = scmp.ne.s32.totalorder %s94, %s108
      %p110 = scmp.eq.s32.totalorder %s21, 0
      %p111 = por %p109, %p110
      %s113 = sadd.s32 %s112, 1
      %p116 = scmp.eq.s32.totalorder %s15, 1
      %p117 = scmp.ne.s32.totalorder %s112, %s114
      %p118 = scmp.eq.s32.totalorder %s15, 0
      %p119 = por %p117, %p118
      %p120 = scmp.ne.s32.totalorder %s112, %s114
      %p121 = scmp.eq.s32.totalorder %s20, 1
      %p122 = por %p120, %p121
      %p123 = scmp.ne.s32.totalorder %s114, %s115
      %p124 = scmp.eq.s32.totalorder %s20, 0
      %p125 = por %p123, %p124
      %p126 = scmp.ne.s32.totalorder %s114, %s115
      %p127 = scmp.eq.s32.totalorder %s21, 1
      %p128 = por %p126, %p127
      %p130 = scmp.ne.s32.totalorder %s115, %s129
      %p131 = scmp.eq.s32.totalorder %s21, 0
      %p132 = por %p130, %p131
      %s134 = sadd.s32 %s133, 1
      %p137 = scmp.eq.s32.totalorder %s15, 1
      %p138 = scmp.ne.s32.totalorder %s133, %s135
      %p139 = scmp.eq.s32.totalorder %s15, 0
      %p140 = por %p138, %p139
      %p141 = scmp.ne.s32.totalorder %s133, %s135
      %p142 = scmp.eq.s32.totalorder %s20, 1
      %p143 = por %p141, %p142
      %p144 = scmp.ne.s32.totalorder %s135, %s136
      %p145 = scmp.eq.s32.totalorder %s20, 0
      %p146 = por %p144, %p145
      %p147 = scmp.ne.s32.totalorder %s135, %s136
      %p148 = scmp.eq.s32.totalorder %s21, 1
      %p149 = por %p147, %p148
      %p151 = scmp.ne.s32.totalorder %s136, %s150
      %p152 = scmp.eq.s32.totalorder %s21, 0
      %p153 = por %p151, %p152
      %s154 = ssub.s32 %s15, %s22
      %p155 = scmp.eq.s32.totalorder %s154, 0
      %s157 = sadd.s32 %s156, 1
      %s158 = scalar_select %p155, %s156, %s157
      %p161 = pneg %p155
      %p162 = scmp.eq.s32.totalorder %s15, 1
      %p163 = por %p161, %p162
      %p164 = scmp.ne.s32.totalorder %s156, %s159
      %p165 = scmp.eq.s32.totalorder %s15, 0
      %p166 = por %p164, %p165
      %p167 = scmp.ne.s32.totalorder %s156, %s159
      %p168 = scmp.eq.s32.totalorder %s20, 1
      %p169 = por %p167, %p168
      %p170 = scmp.ne.s32.totalorder %s159, %s160
      %p171 = scmp.eq.s32.totalorder %s20, 0
      %p172 = por %p170, %p171
      %p173 = scmp.ne.s32.totalorder %s159, %s160
      %p174 = scmp.eq.s32.totalorder %s21, 1
      %p175 = por %p173, %p174
      %p177 = scmp.ne.s32.totalorder %s160, %s176
      %p178 = scmp.eq.s32.totalorder %s21, 0
      %p179 = por %p177, %p178
      %p180 = scmp.le.s32.totalorder 1, %s15
      %p181 = scmp.lt.s32.totalorder %s15, 3
      %p182 = pnand %p180, %p181
      %p183 = pneg %p182
      // Predicated region
      $region9: #{tpu_custom_call.1} parent=5 // pred_check
        _
      $region10: #{tpu_custom_call.1} parent=5 // pred_check_branch
        %185 = sbr.rel (%p182) target = $region12
      $region11: #{tpu_custom_call.1} parent=5 // pred_region
        %s186 = ssub.s32 %s15, 1
        // Predicated region
        $region13: #{tpu_custom_call.1} parent=11 // pred_check
          %p187 = pneg %p62
        $region14: #{tpu_custom_call.1} parent=11 // pred_check_branch
          %189 = sbr.rel (%p187) target = $region16
        $region15: #{tpu_custom_call.1} parent=11 // pred_region
          _
        $region16: #{tpu_custom_call.1} parent=11 // pred_fallthru
          _
        // Predicated region
        $region17: #{tpu_custom_call.1} parent=11 // pred_check
          %p190 = pneg %p83
        $region18: #{tpu_custom_call.1} parent=11 // pred_check_branch
          %192 = sbr.rel (%p190) target = $region20
        $region19: #{tpu_custom_call.1} parent=11 // pred_region
          _
        $region20: #{tpu_custom_call.1} parent=11 // pred_fallthru
          _
        // Predicated region
        $region21: #{tpu_custom_call.1} parent=11 // pred_check
          %p193 = pneg %p104
        $region22: #{tpu_custom_call.1} parent=11 // pred_check_branch
          %195 = sbr.rel (%p193) target = $region24
        $region23: #{tpu_custom_call.1} parent=11 // pred_region
          _
        $region24: #{tpu_custom_call.1} parent=11 // pred_fallthru
          _
        // Predicated region
        $region25: #{tpu_custom_call.1} parent=11 // pred_check
          %p196 = pneg %p125
        $region26: #{tpu_custom_call.1} parent=11 // pred_check_branch
          %198 = sbr.rel (%p196) target = $region28
        $region27: #{tpu_custom_call.1} parent=11 // pred_region
          _
        $region28: #{tpu_custom_call.1} parent=11 // pred_fallthru
          _
        // Predicated region
        $region29: #{tpu_custom_call.1} parent=11 // pred_check
          %p199 = pneg %p146
        $region30: #{tpu_custom_call.1} parent=11 // pred_check_branch
          %201 = sbr.rel (%p199) target = $region32
        $region31: #{tpu_custom_call.1} parent=11 // pred_region
          _
        $region32: #{tpu_custom_call.1} parent=11 // pred_fallthru
          _
      $region12: #{tpu_custom_call.1} parent=5 // pred_fallthru
        _
      %p202 = scmp.lt.s32.totalorder %s15, 2
      // Predicated region
      $region33: #{tpu_custom_call.1} parent=5 // pred_check
        %p203 = pneg %p202
      $region34: #{tpu_custom_call.1} parent=5 // pred_check_branch
        %205 = sbr.rel (%p203) target = $region36
      $region35: #{tpu_custom_call.1} parent=5 // pred_region
        // Predicated region
        $region37: #{tpu_custom_call.1} parent=35 // pred_check
          %p206 = pneg %p35
        $region38: #{tpu_custom_call.1} parent=35 // pred_check_branch
          %208 = sbr.rel (%p206) target = $region40
        $region39: #{tpu_custom_call.1} parent=35 // pred_region
          %p209 = scmp.lt.s32.totalorder %s15, 1
          %s210 = scalar_select %p209, %s15, 1
          %s211 = smul.addr %s210, 54
          %s212 = smul.addr %s211, 4
          %s213 = scalar_lea.vmem %s0, %s212
        $region40: #{tpu_custom_call.1} parent=35 // pred_fallthru
          _
      $region36: #{tpu_custom_call.1} parent=5 // pred_fallthru
        _
      %p214 = scmp.le.s32.totalorder 1, %s15
      %p215 = scmp.lt.s32.totalorder %s15, 3
      %p216 = pnand %p214, %p215
      %p217 = pneg %p216
      // Predicated region
      $region41: #{tpu_custom_call.1} parent=5 // pred_check
        _
      $region42: #{tpu_custom_call.1} parent=5 // pred_check_branch
        %219 = sbr.rel (%p216) target = $region44
      $region43: #{tpu_custom_call.1} parent=5 // pred_region
        %s220 = ssub.s32 %s15, 1
        %p221 = scmp.lt.s32.totalorder %s20, 1
        %s222 = scalar_select %p221, %s20, 1
        %s223 = smul.addr %s222, 54
        %s224 = smul.addr %s223, 4
        %s225 = scalar_lea.vmem %s0, %s224
        %p226 = pneg %p41
        %p227 = pneg %p38
        %p228 = pneg %p62
        %p229 = pneg %p59
        %p230 = pneg %p83
        %p231 = pneg %p80
        %p232 = pneg %p104
        %p233 = pneg %p101
        %p234 = pneg %p125
        %p235 = pneg %p122
        %p236 = pneg %p146
        %p237 = pneg %p143
        %p238 = pneg %p172
        %p239 = pneg %p169
        %s240 = sand.u32 %s159, 1
        %s241 = scalar_lea.sflag [#allocation4], %s240
        %s242 = sand.u32 %s159, 1
        %s243 = smul.addr %s242, 256
        %s244 = scalar_lea.vmem [#allocation3], %s243
        %p245 = scmp.lt.s32.totalorder %s20, 1
        %s246 = scalar_select %p245, %s20, 1
        %s247 = smul.addr %s246, 54
        %s248 = smul.addr %s247, 4
        %s249 = scalar_lea.vmem %s0, %s248
        %v251 = vld [vmem:[%s249] sm:$0xf]
        %v252 = vld [vmem:[%s249 + $0x4] sm:$0xf]
        %v253 = vld [vmem:[%s249 + $0x8] sm:$0x1]
        %v254 = vld [vmem:[%s249 + $0xc] sm:$0xf]
        %v255 = vld [vmem:[%s249 + $0x10] sm:$0xf]
        %v256 = vld [vmem:[%s249 + $0x14] sm:$0x1]
        %v257 = vld [vmem:[%s249 + $0x18] sm:$0xf]
        %v258 = vld [vmem:[%s249 + $0x1c] sm:$0xf]
        %v259 = vld [vmem:[%s249 + $0x20] sm:$0x1]
        %v260 = vld [vmem:[%s249 + $0x24] sm:$0xf]
        %v261 = vld [vmem:[%s249 + $0x28] sm:$0xf]
        %v262 = vld [vmem:[%s249 + $0x2c] sm:$0x1]
        %v263 = vld [vmem:[%s249 + $0x30] sm:$0xf]
        %v264 = vld [vmem:[%s249 + $0x34] sm:$0xf]
        %v265 = vld [vmem:[%s249 + $0x38] sm:$0x1]
        %v266 = vld [vmem:[%s249 + $0x3c] sm:$0xf]
        %v267 = vld [vmem:[%s249 + $0x40] sm:$0xf]
        %v268 = vld [vmem:[%s249 + $0x44] sm:$0x1]
        %v269 = vld [vmem:[%s249 + $0x48] sm:$0xf]
        %v270 = vld [vmem:[%s249 + $0x4c] sm:$0xf]
        %v271 = vld [vmem:[%s249 + $0x50] sm:$0x1]
        %v272 = vld [vmem:[%s249 + $0x54] sm:$0xf]
        %v273 = vld [vmem:[%s249 + $0x58] sm:$0xf]
        %v274 = vld [vmem:[%s249 + $0x5c] sm:$0x1]
        %v275 = vld [vmem:[%s249 + $0x60] sm:$0xf]
        %v276 = vld [vmem:[%s249 + $0x64] sm:$0xf]
        %v277 = vld [vmem:[%s249 + $0x68] sm:$0x1]
        %v278 = vld [vmem:[%s249 + $0x6c] sm:$0xf]
        %v279 = vld [vmem:[%s249 + $0x70] sm:$0xf]
        %v280 = vld [vmem:[%s249 + $0x74] sm:$0x1]
        %v281 = vld [vmem:[%s249 + $0x78] sm:$0xf]
        %v282 = vld [vmem:[%s249 + $0x7c] sm:$0xf]
        %v283 = vld [vmem:[%s249 + $0x80] sm:$0x1]
        %v284 = vld [vmem:[%s249 + $0x84] sm:$0xf]
        %v285 = vld [vmem:[%s249 + $0x88] sm:$0xf]
        %v286 = vld [vmem:[%s249 + $0x8c] sm:$0x1]
        %v287 = vld [vmem:[%s249 + $0x90] sm:$0xf]
        %v288 = vld [vmem:[%s249 + $0x94] sm:$0xf]
        %v289 = vld [vmem:[%s249 + $0x98] sm:$0x1]
        %v290 = vld [vmem:[%s249 + $0x9c] sm:$0xf]
        %v291 = vld [vmem:[%s249 + $0xa0] sm:$0xf]
        %v292 = vld [vmem:[%s249 + $0xa4] sm:$0x1]
        %v293 = vld [vmem:[%s249 + $0xa8] sm:$0xf]
        %v294 = vld [vmem:[%s249 + $0xac] sm:$0xf]
        %v295 = vld [vmem:[%s249 + $0xb0] sm:$0x1]
        %v296 = vld [vmem:[%s249 + $0xb4] sm:$0xf]
        %v297 = vld [vmem:[%s249 + $0xb8] sm:$0xf]
        %v298 = vld [vmem:[%s249 + $0xbc] sm:$0x1]
        %v299 = vld [vmem:[%s249 + $0xc0] sm:$0xf]
        %v300 = vld [vmem:[%s249 + $0xc4] sm:$0xf]
        %v301 = vld [vmem:[%s249 + $0xc8] sm:$0x1]
        %v302 = vld [vmem:[%s249 + $0xcc] sm:$0xf]
        %v303 = vld [vmem:[%s249 + $0xd0] sm:$0xf]
        %v304 = vld [vmem:[%s249 + $0xd4] sm:$0x1]
        %v305 = vunpack.c.l.bf16 %v251
        %v306 = vunpack.c.l.bf16 %v252
        %v307 = vunpack.c.l.bf16 %v253
        %v308 = vunpack.c.l.bf16 %v254
        %v309 = vunpack.c.l.bf16 %v255
        %v310 = vunpack.c.l.bf16 %v256
        %v311 = vunpack.c.l.bf16 %v257
        %v312 = vunpack.c.l.bf16 %v258
        %v313 = vunpack.c.l.bf16 %v259
        %v314 = vunpack.c.l.bf16 %v260
        %v315 = vunpack.c.l.bf16 %v261
        %v316 = vunpack.c.l.bf16 %v262
        %v317 = vunpack.c.l.bf16 %v263
        %v318 = vunpack.c.l.bf16 %v264
        %v319 = vunpack.c.l.bf16 %v265
        %v320 = vunpack.c.l.bf16 %v266
        %v321 = vunpack.c.l.bf16 %v267
        %v322 = vunpack.c.l.bf16 %v268
        %v323 = vunpack.c.l.bf16 %v269
        %v324 = vunpack.c.l.bf16 %v270
        %v325 = vunpack.c.l.bf16 %v271
        %v326 = vunpack.c.l.bf16 %v272
        %v327 = vunpack.c.l.bf16 %v273
        %v328 = vunpack.c.l.bf16 %v274
        %v329 = vunpack.c.l.bf16 %v275
        %v330 = vunpack.c.l.bf16 %v276
        %v331 = vunpack.c.l.bf16 %v277
        %v332 = vunpack.c.l.bf16 %v278
        %v333 = vunpack.c.l.bf16 %v279
        %v334 = vunpack.c.l.bf16 %v280
        %v335 = vunpack.c.l.bf16 %v281
        %v336 = vunpack.c.l.bf16 %v282
        %v337 = vunpack.c.l.bf16 %v283
        %v338 = vunpack.c.l.bf16 %v284
        %v339 = vunpack.c.l.bf16 %v285
        %v340 = vunpack.c.l.bf16 %v286
        %v341 = vunpack.c.l.bf16 %v287
        %v342 = vunpack.c.l.bf16 %v288
        %v343 = vunpack.c.l.bf16 %v289
        %v344 = vunpack.c.l.bf16 %v290
        %v345 = vunpack.c.l.bf16 %v291
        %v346 = vunpack.c.l.bf16 %v292
        %v347 = vunpack.c.l.bf16 %v293
        %v348 = vunpack.c.l.bf16 %v294
        %v349 = vunpack.c.l.bf16 %v295
        %v350 = vunpack.c.l.bf16 %v296
        %v351 = vunpack.c.l.bf16 %v297
        %v352 = vunpack.c.l.bf16 %v298
        %v353 = vunpack.c.l.bf16 %v299
        %v354 = vunpack.c.l.bf16 %v300
        %v355 = vunpack.c.l.bf16 %v301
        %v356 = vunpack.c.l.bf16 %v302
        %v357 = vunpack.c.l.bf16 %v303
        %v358 = vunpack.c.l.bf16 %v304
        %v359 = vpack.c.bf16 %v306, %v305
        %v360 = vpack.c.bf16 %v309, %v308
        %v361 = vpack.c.bf16 %v312, %v311
        %v362 = vpack.c.bf16 %v315, %v314
        %v363 = vpack.c.bf16 %v318, %v317
        %v364 = vpack.c.bf16 %v321, %v320
        %v365 = vpack.c.bf16 %v324, %v323
        %v366 = vpack.c.bf16 %v327, %v326
        %v367 = vpack.c.bf16 %v330, %v329
        %v368 = vpack.c.bf16 %v333, %v332
        %v369 = vpack.c.bf16 %v336, %v335
        %v370 = vpack.c.bf16 %v339, %v338
        %v371 = vpack.c.bf16 %v342, %v341
        %v372 = vpack.c.bf16 %v345, %v344
        %v373 = vpack.c.bf16 %v348, %v347
        %v374 = vpack.c.bf16 %v351, %v350
        %v375 = vld [vmem:[%s1] sm:$0x3]
        %vm424 = vcmask 1046528
        %v425 = vrot.slane %v305, 1
        %v426 = vrot.slane %v306, 1
        %v427 = vsel %vm424, %v425, %v426
        %v428 = vrot.slane %v307, 1
        %v429 = vsel %vm424, %v426, %v428
        %v430 = vrot.slane %v308, 1
        %v431 = vrot.slane %v309, 1
        %v432 = vsel %vm424, %v430, %v431
        %v433 = vrot.slane %v310, 1
        %v434 = vsel %vm424, %v431, %v433
        %v435 = vrot.slane %v311, 1
        %v436 = vrot.slane %v312, 1
        %v437 = vsel %vm424, %v435, %v436
        %v438 = vrot.slane %v313, 1
        %v439 = vsel %vm424, %v436, %v438
        %v440 = vrot.slane %v314, 1
        %v441 = vrot.slane %v315, 1
        %v442 = vsel %vm424, %v440, %v441
        %v443 = vrot.slane %v316, 1
        %v444 = vsel %vm424, %v441, %v443
        %v445 = vrot.slane %v317, 1
        %v446 = vrot.slane %v318, 1
        %v447 = vsel %vm424, %v445, %v446
        %v448 = vrot.slane %v319, 1
        %v449 = vsel %vm424, %v446, %v448
        %v450 = vrot.slane %v320, 1
        %v451 = vrot.slane %v321, 1
        %v452 = vsel %vm424, %v450, %v451
        %v453 = vrot.slane %v322, 1
        %v454 = vsel %vm424, %v451, %v453
        %v455 = vrot.slane %v323, 1
        %v456 = vrot.slane %v324, 1
        %v457 = vsel %vm424, %v455, %v456
        %v458 = vrot.slane %v325, 1
        %v459 = vsel %vm424, %v456, %v458
        %v460 = vrot.slane %v326, 1
        %v461 = vrot.slane %v327, 1
        %v462 = vsel %vm424, %v460, %v461
        %v463 = vrot.slane %v328, 1
        %v464 = vsel %vm424, %v461, %v463
        %v465 = vrot.slane %v329, 1
        %v466 = vrot.slane %v330, 1
        %v467 = vsel %vm424, %v465, %v466
        %v468 = vrot.slane %v331, 1
        %v469 = vsel %vm424, %v466, %v468
        %v470 = vrot.slane %v332, 1
        %v471 = vrot.slane %v333, 1
        %v472 = vsel %vm424, %v470, %v471
        %v473 = vrot.slane %v334, 1
        %v474 = vsel %vm424, %v471, %v473
        %v475 = vrot.slane %v335, 1
        %v476 = vrot.slane %v336, 1
        %v477 = vsel %vm424, %v475, %v476
        %v478 = vrot.slane %v337, 1
        %v479 = vsel %vm424, %v476, %v478
        %v480 = vrot.slane %v338, 1
        %v481 = vrot.slane %v339, 1
        %v482 = vsel %vm424, %v480, %v481
        %v483 = vrot.slane %v340, 1
        %v484 = vsel %vm424, %v481, %v483
        %v485 = vrot.slane %v341, 1
        %v486 = vrot.slane %v342, 1
        %v487 = vsel %vm424, %v485, %v486
        %v488 = vrot.slane %v343, 1
        %v489 = vsel %vm424, %v486, %v488
        %v490 = vrot.slane %v344, 1
        %v491 = vrot.slane %v345, 1
        %v492 = vsel %vm424, %v490, %v491
        %v493 = vrot.slane %v346, 1
        %v494 = vsel %vm424, %v491, %v493
        %v495 = vrot.slane %v347, 1
        %v496 = vrot.slane %v348, 1
        %v497 = vsel %vm424, %v495, %v496
        %v498 = vrot.slane %v349, 1
        %v499 = vsel %vm424, %v496, %v498
        %v500 = vrot.slane %v350, 1
        %v501 = vrot.slane %v351, 1
        %v502 = vsel %vm424, %v500, %v501
        %v503 = vrot.slane %v352, 1
        %v504 = vsel %vm424, %v501, %v503
        %v537 = vpack.c.bf16 %v429, %v427
        %v538 = vpack.c.bf16 %v434, %v432
        %v539 = vpack.c.bf16 %v439, %v437
        %v540 = vpack.c.bf16 %v444, %v442
        %v541 = vpack.c.bf16 %v449, %v447
        %v542 = vpack.c.bf16 %v454, %v452
        %v543 = vpack.c.bf16 %v459, %v457
        %v544 = vpack.c.bf16 %v464, %v462
        %v545 = vpack.c.bf16 %v469, %v467
        %v546 = vpack.c.bf16 %v474, %v472
        %v547 = vpack.c.bf16 %v479, %v477
        %v548 = vpack.c.bf16 %v484, %v482
        %v549 = vpack.c.bf16 %v489, %v487
        %v550 = vpack.c.bf16 %v494, %v492
        %v551 = vpack.c.bf16 %v499, %v497
        %v552 = vpack.c.bf16 %v504, %v502
        %s553 = scalar_lea.vmem %s1, 2
        %v554 = vld [vmem:[%s553] sm:$0x3]
        %vm555 = vcmask 31744
        %v557 = vsel %vm555, %v537, 0
        %v560 = vsel %vm555, %v538, 0
        %v563 = vsel %vm555, %v539, 0
        %v566 = vsel %vm555, %v540, 0
        %v569 = vsel %vm555, %v541, 0
        %v572 = vsel %vm555, %v542, 0
        %v575 = vsel %vm555, %v543, 0
        %v578 = vsel %vm555, %v544, 0
        %v581 = vsel %vm555, %v545, 0
        %v584 = vsel %vm555, %v546, 0
        %v587 = vsel %vm555, %v547, 0
        %v590 = vsel %vm555, %v548, 0
        %v593 = vsel %vm555, %v549, 0
        %v596 = vsel %vm555, %v550, 0
        %v599 = vsel %vm555, %v551, 0
        %v602 = vsel %vm555, %v552, 0
        %vm604 = vcmask 1041408
        %v606 = vsel %vm604, %v554, 0
        %608 = vmatprep.subr.bf16.mxu0 0
        %609 = vmatpush1.bf16.msra.mxu0 %v606
        %610 = vmatprep.subr.bf16.mxu0 0
        %611 = vmatpush1.bf16.msra.mxu0 0
        %612 = vmatprep.subr.bf16.mxu0 0
        %613 = vmatpush1.bf16.msra.mxu0 0
        %614 = vmatprep.subr.bf16.mxu0 0
        %615 = vmatpush1.bf16.msra.mxu0 0
        %616 = vmatprep.subr.bf16.mxu0 0
        %617 = vmatpush1.bf16.msra.mxu0 0
        %618 = vmatprep.subr.bf16.mxu0 0
        %619 = vmatpush1.bf16.msra.mxu0 0
        %620 = vmatprep.subr.bf16.mxu0 0
        %621 = vmatpush1.bf16.msra.mxu0 0
        %622 = vmatprep.subr.bf16.mxu0 0
        %623 = vmatpush1.bf16.msra.mxu0 0
        %624 = vmatprep.subr.bf16.mxu0 0
        %625 = vmatpush1.bf16.msra.mxu0 0
        %626 = vmatprep.subr.bf16.mxu0 0
        %627 = vmatpush1.bf16.msra.mxu0 0
        %628 = vmatprep.subr.bf16.mxu0 0
        %629 = vmatpush1.bf16.msra.mxu0 0
        %630 = vmatprep.subr.bf16.mxu0 0
        %631 = vmatpush1.bf16.msra.mxu0 0
        %632 = vmatprep.subr.bf16.mxu0 0
        %633 = vmatpush1.bf16.msra.mxu0 0
        %634 = vmatprep.subr.bf16.mxu0 0
        %635 = vmatpush1.bf16.msra.mxu0 0
        %636 = vmatprep.subr.bf16.mxu0 0
        %637 = vmatpush1.bf16.msra.mxu0 0
        %638 = vmatprep.subr.bf16.mxu0 0
        %639 = vmatpush1.bf16.msra.mxu0 0
        %640 = vmatprep.mubr.bf16.mxu0 0
        %641 = vmatmul.mubr.bf16.gmra.mrb[0].mxu0 %v557
        %v642 = vpop.f32.mrb[0].mxu0
        %v643 = vadd.f32 0.0, %v642
        %v644 = vpop.f32.mrb[0].mxu0
        %v645 = vpop.f32.mrb[0].mxu0
        %v646 = vadd.f32 0.0, %v645
        %v647 = vpop.f32.mrb[0].mxu0
        %648 = vmatprep.mubr.bf16.mxu0 0
        %649 = vmatmul.mubr.bf16.gmra.mrb[0].mxu0 %v560
        %v650 = vpop.f32.mrb[0].mxu0
        %v651 = vadd.f32 0.0, %v650
        %v652 = vpop.f32.mrb[0].mxu0
        %v653 = vpop.f32.mrb[0].mxu0
        %v654 = vadd.f32 0.0, %v653
        %v655 = vpop.f32.mrb[0].mxu0
        %656 = vmatprep.mubr.bf16.mxu0 0
        %657 = vmatmul.mubr.bf16.gmra.mrb[0].mxu0 %v563
        %v658 = vpop.f32.mrb[0].mxu0
        %v659 = vadd.f32 0.0, %v658
        %v660 = vpop.f32.mrb[0].mxu0
        %v661 = vpop.f32.mrb[0].mxu0
        %v662 = vadd.f32 0.0, %v661
        %v663 = vpop.f32.mrb[0].mxu0
        %664 = vmatprep.mubr.bf16.mxu0 0
        %665 = vmatmul.mubr.bf16.gmra.mrb[0].mxu0 %v566
        %v666 = vpop.f32.mrb[0].mxu0
        %v667 = vadd.f32 0.0, %v666
        %v668 = vpop.f32.mrb[0].mxu0
        %v669 = vpop.f32.mrb[0].mxu0
        %v670 = vadd.f32 0.0, %v669
        %v671 = vpop.f32.mrb[0].mxu0
        %672 = vmatprep.mubr.bf16.mxu0 0
        %673 = vmatmul.mubr.bf16.gmra.mrb[0].mxu0 %v569
        %v674 = vpop.f32.mrb[0].mxu0
        %v675 = vadd.f32 0.0, %v674
        %v676 = vpop.f32.mrb[0].mxu0
        %v677 = vpop.f32.mrb[0].mxu0
        %v678 = vadd.f32 0.0, %v677
        %v679 = vpop.f32.mrb[0].mxu0
        %680 = vmatprep.mubr.bf16.mxu0 0
        %681 = vmatmul.mubr.bf16.gmra.mrb[0].mxu0 %v572
        %v682 = vpop.f32.mrb[0].mxu0
        %v683 = vadd.f32 0.0, %v682
        %v684 = vpop.f32.mrb[0].mxu0
        %v685 = vpop.f32.mrb[0].mxu0
        %v686 = vadd.f32 0.0, %v685
        %v687 = vpop.f32.mrb[0].mxu0
        %688 = vmatprep.mubr.bf16.mxu0 0
        %689 = vmatmul.mubr.bf16.gmra.mrb[0].mxu0 %v575
        %v690 = vpop.f32.mrb[0].mxu0
        %v691 = vadd.f32 0.0, %v690
        %v692 = vpop.f32.mrb[0].mxu0
        %v693 = vpop.f32.mrb[0].mxu0
        %v694 = vadd.f32 0.0, %v693
        %v695 = vpop.f32.mrb[0].mxu0
        %696 = vmatprep.mubr.bf16.mxu0 0
        %697 = vmatmul.mubr.bf16.gmra.mrb[0].mxu0 %v578
        %v698 = vpop.f32.mrb[0].mxu0
        %v699 = vadd.f32 0.0, %v698
        %v700 = vpop.f32.mrb[0].mxu0
        %v701 = vpop.f32.mrb[0].mxu0
        %v702 = vadd.f32 0.0, %v701
        %v703 = vpop.f32.mrb[0].mxu0
        %704 = vmatprep.mubr.bf16.mxu0 0
        %705 = vmatmul.mubr.bf16.gmra.mrb[0].mxu0 %v581
        %v706 = vpop.f32.mrb[0].mxu0
        %v707 = vadd.f32 0.0, %v706
        %v708 = vpop.f32.mrb[0].mxu0
        %v709 = vpop.f32.mrb[0].mxu0
        %v710 = vadd.f32 0.0, %v709
        %v711 = vpop.f32.mrb[0].mxu0
        %712 = vmatprep.mubr.bf16.mxu0 0
        %713 = vmatmul.mubr.bf16.gmra.mrb[0].mxu0 %v584
        %v714 = vpop.f32.mrb[0].mxu0
        %v715 = vadd.f32 0.0, %v714
        %v716 = vpop.f32.mrb[0].mxu0
        %v717 = vpop.f32.mrb[0].mxu0
        %v718 = vadd.f32 0.0, %v717
        %v719 = vpop.f32.mrb[0].mxu0
        %720 = vmatprep.mubr.bf16.mxu0 0
        %721 = vmatmul.mubr.bf16.gmra.mrb[0].mxu0 %v587
        %v722 = vpop.f32.mrb[0].mxu0
        %v723 = vadd.f32 0.0, %v722
        %v724 = vpop.f32.mrb[0].mxu0
        %v725 = vpop.f32.mrb[0].mxu0
        %v726 = vadd.f32 0.0, %v725
        %v727 = vpop.f32.mrb[0].mxu0
        %728 = vmatprep.mubr.bf16.mxu0 0
        %729 = vmatmul.mubr.bf16.gmra.mrb[0].mxu0 %v590
        %v730 = vpop.f32.mrb[0].mxu0
        %v731 = vadd.f32 0.0, %v730
        %v732 = vpop.f32.mrb[0].mxu0
        %v733 = vpop.f32.mrb[0].mxu0
        %v734 = vadd.f32 0.0, %v733
        %v735 = vpop.f32.mrb[0].mxu0
        %736 = vmatprep.mubr.bf16.mxu0 0
        %737 = vmatmul.mubr.bf16.gmra.mrb[0].mxu0 %v593
        %v738 = vpop.f32.mrb[0].mxu0
        %v739 = vadd.f32 0.0, %v738
        %v740 = vpop.f32.mrb[0].mxu0
        %v741 = vpop.f32.mrb[0].mxu0
        %v742 = vadd.f32 0.0, %v741
        %v743 = vpop.f32.mrb[0].mxu0
        %744 = vmatprep.mubr.bf16.mxu0 0
        %745 = vmatmul.mubr.bf16.gmra.mrb[0].mxu0 %v596
        %v746 = vpop.f32.mrb[0].mxu0
        %v747 = vadd.f32 0.0, %v746
        %v748 = vpop.f32.mrb[0].mxu0
        %v749 = vpop.f32.mrb[0].mxu0
        %v750 = vadd.f32 0.0, %v749
        %v751 = vpop.f32.mrb[0].mxu0
        %752 = vmatprep.mubr.bf16.mxu0 0
        %753 = vmatmul.mubr.bf16.gmra.mrb[0].mxu0 %v599
        %v754 = vpop.f32.mrb[0].mxu0
        %v755 = vadd.f32 0.0, %v754
        %v756 = vpop.f32.mrb[0].mxu0
        %v757 = vpop.f32.mrb[0].mxu0
        %v758 = vadd.f32 0.0, %v757
        %v759 = vpop.f32.mrb[0].mxu0
        %760 = vmatprep.mubr.bf16.mxu0 0
        %761 = vmatmul.mubr.bf16.gmra.mrb[0].mxu0 %v602
        %v762 = vpop.f32.mrb[0].mxu0
        %v763 = vadd.f32 0.0, %v762
        %v764 = vpop.f32.mrb[0].mxu0
        %v765 = vpop.f32.mrb[0].mxu0
        %v766 = vadd.f32 0.0, %v765
        %v767 = vpop.f32.mrb[0].mxu0
        %768 = vdwg.mxu0
        %v770 = vsel %vm555, %v359, 0
        %v773 = vsel %vm555, %v360, 0
        %v776 = vsel %vm555, %v361, 0
        %v779 = vsel %vm555, %v362, 0
        %v782 = vsel %vm555, %v363, 0
        %v785 = vsel %vm555, %v364, 0
        %v788 = vsel %vm555, %v365, 0
        %v791 = vsel %vm555, %v366, 0
        %v794 = vsel %vm555, %v367, 0
        %v797 = vsel %vm555, %v368, 0
        %v800 = vsel %vm555, %v369, 0
        %v803 = vsel %vm555, %v370, 0
        %v806 = vsel %vm555, %v371, 0
        %v809 = vsel %vm555, %v372, 0
        %v812 = vsel %vm555, %v373, 0
        %v815 = vsel %vm555, %v374, 0
        %v818 = vsel %vm604, %v375, 0
        %820 = vmatprep.subr.bf16.mxu0 0
        %821 = vmatpush1.bf16.msra.mxu0 %v818
        %822 = vmatprep.subr.bf16.mxu0 0
        %823 = vmatpush1.bf16.msra.mxu0 0
        %824 = vmatprep.subr.bf16.mxu0 0
        %825 = vmatpush1.bf16.msra.mxu0 0
        %826 = vmatprep.subr.bf16.mxu0 0
        %827 = vmatpush1.bf16.msra.mxu0 0
        %828 = vmatprep.subr.bf16.mxu0 0
        %829 = vmatpush1.bf16.msra.mxu0 0
        %830 = vmatprep.subr.bf16.mxu0 0
        %831 = vmatpush1.bf16.msra.mxu0 0
        %832 = vmatprep.subr.bf16.mxu0 0
        %833 = vmatpush1.bf16.msra.mxu0 0
        %834 = vmatprep.subr.bf16.mxu0 0
        %835 = vmatpush1.bf16.msra.mxu0 0
        %836 = vmatprep.subr.bf16.mxu0 0
        %837 = vmatpush1.bf16.msra.mxu0 0
        %838 = vmatprep.subr.bf16.mxu0 0
        %839 = vmatpush1.bf16.msra.mxu0 0
        %840 = vmatprep.subr.bf16.mxu0 0
        %841 = vmatpush1.bf16.msra.mxu0 0
        %842 = vmatprep.subr.bf16.mxu0 0
        %843 = vmatpush1.bf16.msra.mxu0 0
        %844 = vmatprep.subr.bf16.mxu0 0
        %845 = vmatpush1.bf16.msra.mxu0 0
        %846 = vmatprep.subr.bf16.mxu0 0
        %847 = vmatpush1.bf16.msra.mxu0 0
        %848 = vmatprep.subr.bf16.mxu0 0
        %849 = vmatpush1.bf16.msra.mxu0 0
        %850 = vmatprep.subr.bf16.mxu0 0
        %851 = vmatpush1.bf16.msra.mxu0 0
        %852 = vmatprep.mubr.bf16.mxu0 0
        %853 = vmatmul.mubr.bf16.gmra.mrb[0].mxu0 %v770
        %v854 = vpop.f32.mrb[0].mxu0
        %v855 = vadd.f32 %v643, %v854
        %v856 = vpop.f32.mrb[0].mxu0
        %v857 = vpop.f32.mrb[0].mxu0
        %v858 = vadd.f32 %v646, %v857
        %v859 = vpop.f32.mrb[0].mxu0
        %860 = vmatprep.mubr.bf16.mxu0 0
        %861 = vmatmul.mubr.bf16.gmra.mrb[0].mxu0 %v773
        %v862 = vpop.f32.mrb[0].mxu0
        %v863 = vadd.f32 %v651, %v862
        %v864 = vpop.f32.mrb[0].mxu0
        %v865 = vpop.f32.mrb[0].mxu0
        %v866 = vadd.f32 %v654, %v865
        %v867 = vpop.f32.mrb[0].mxu0
        %868 = vmatprep.mubr.bf16.mxu0 0
        %869 = vmatmul.mubr.bf16.gmra.mrb[0].mxu0 %v776
        %v870 = vpop.f32.mrb[0].mxu0
        %v871 = vadd.f32 %v659, %v870
        %v872 = vpop.f32.mrb[0].mxu0
        %v873 = vpop.f32.mrb[0].mxu0
        %v874 = vadd.f32 %v662, %v873
        %v875 = vpop.f32.mrb[0].mxu0
        %876 = vmatprep.mubr.bf16.mxu0 0
        %877 = vmatmul.mubr.bf16.gmra.mrb[0].mxu0 %v779
        %v878 = vpop.f32.mrb[0].mxu0
        %v879 = vadd.f32 %v667, %v878
        %v880 = vpop.f32.mrb[0].mxu0
        %v881 = vpop.f32.mrb[0].mxu0
        %v882 = vadd.f32 %v670, %v881
        %v883 = vpop.f32.mrb[0].mxu0
        %884 = vmatprep.mubr.bf16.mxu0 0
        %885 = vmatmul.mubr.bf16.gmra.mrb[0].mxu0 %v782
        %v886 = vpop.f32.mrb[0].mxu0
        %v887 = vadd.f32 %v675, %v886
        %v888 = vpop.f32.mrb[0].mxu0
        %v889 = vpop.f32.mrb[0].mxu0
        %v890 = vadd.f32 %v678, %v889
        %v891 = vpop.f32.mrb[0].mxu0
        %892 = vmatprep.mubr.bf16.mxu0 0
        %893 = vmatmul.mubr.bf16.gmra.mrb[0].mxu0 %v785
        %v894 = vpop.f32.mrb[0].mxu0
        %v895 = vadd.f32 %v683, %v894
        %v896 = vpop.f32.mrb[0].mxu0
        %v897 = vpop.f32.mrb[0].mxu0
        %v898 = vadd.f32 %v686, %v897
        %v899 = vpop.f32.mrb[0].mxu0
        %900 = vmatprep.mubr.bf16.mxu0 0
        %901 = vmatmul.mubr.bf16.gmra.mrb[0].mxu0 %v788
        %v902 = vpop.f32.mrb[0].mxu0
        %v903 = vadd.f32 %v691, %v902
        %v904 = vpop.f32.mrb[0].mxu0
        %v905 = vpop.f32.mrb[0].mxu0
        %v906 = vadd.f32 %v694, %v905
        %v907 = vpop.f32.mrb[0].mxu0
        %908 = vmatprep.mubr.bf16.mxu0 0
        %909 = vmatmul.mubr.bf16.gmra.mrb[0].mxu0 %v791
        %v910 = vpop.f32.mrb[0].mxu0
        %v911 = vadd.f32 %v699, %v910
        %v912 = vpop.f32.mrb[0].mxu0
        %v913 = vpop.f32.mrb[0].mxu0
        %v914 = vadd.f32 %v702, %v913
        %v915 = vpop.f32.mrb[0].mxu0
        %916 = vmatprep.mubr.bf16.mxu0 0
        %917 = vmatmul.mubr.bf16.gmra.mrb[0].mxu0 %v794
        %v918 = vpop.f32.mrb[0].mxu0
        %v919 = vadd.f32 %v707, %v918
        %v920 = vpop.f32.mrb[0].mxu0
        %v921 = vpop.f32.mrb[0].mxu0
        %v922 = vadd.f32 %v710, %v921
        %v923 = vpop.f32.mrb[0].mxu0
        %924 = vmatprep.mubr.bf16.mxu0 0
        %925 = vmatmul.mubr.bf16.gmra.mrb[0].mxu0 %v797
        %v926 = vpop.f32.mrb[0].mxu0
        %v927 = vadd.f32 %v715, %v926
        %v928 = vpop.f32.mrb[0].mxu0
        %v929 = vpop.f32.mrb[0].mxu0
        %v930 = vadd.f32 %v718, %v929
        %v931 = vpop.f32.mrb[0].mxu0
        %932 = vmatprep.mubr.bf16.mxu0 0
        %933 = vmatmul.mubr.bf16.gmra.mrb[0].mxu0 %v800
        %v934 = vpop.f32.mrb[0].mxu0
        %v935 = vadd.f32 %v723, %v934
        %v936 = vpop.f32.mrb[0].mxu0
        %v937 = vpop.f32.mrb[0].mxu0
        %v938 = vadd.f32 %v726, %v937
        %v939 = vpop.f32.mrb[0].mxu0
        %940 = vmatprep.mubr.bf16.mxu0 0
        %941 = vmatmul.mubr.bf16.gmra.mrb[0].mxu0 %v803
        %v942 = vpop.f32.mrb[0].mxu0
        %v943 = vadd.f32 %v731, %v942
        %v944 = vpop.f32.mrb[0].mxu0
        %v945 = vpop.f32.mrb[0].mxu0
        %v946 = vadd.f32 %v734, %v945
        %v947 = vpop.f32.mrb[0].mxu0
        %948 = vmatprep.mubr.bf16.mxu0 0
        %949 = vmatmul.mubr.bf16.gmra.mrb[0].mxu0 %v806
        %v950 = vpop.f32.mrb[0].mxu0
        %v951 = vadd.f32 %v739, %v950
        %v952 = vpop.f32.mrb[0].mxu0
        %v953 = vpop.f32.mrb[0].mxu0
        %v954 = vadd.f32 %v742, %v953
        %v955 = vpop.f32.mrb[0].mxu0
        %956 = vmatprep.mubr.bf16.mxu0 0
        %957 = vmatmul.mubr.bf16.gmra.mrb[0].mxu0 %v809
        %v958 = vpop.f32.mrb[0].mxu0
        %v959 = vadd.f32 %v747, %v958
        %v960 = vpop.f32.mrb[0].mxu0
        %v961 = vpop.f32.mrb[0].mxu0
        %v962 = vadd.f32 %v750, %v961
        %v963 = vpop.f32.mrb[0].mxu0
        %964 = vmatprep.mubr.bf16.mxu0 0
        %965 = vmatmul.mubr.bf16.gmra.mrb[0].mxu0 %v812
        %v966 = vpop.f32.mrb[0].mxu0
        %v967 = vadd.f32 %v755, %v966
        %v968 = vpop.f32.mrb[0].mxu0
        %v969 = vpop.f32.mrb[0].mxu0
        %v970 = vadd.f32 %v758, %v969
        %v971 = vpop.f32.mrb[0].mxu0
        %972 = vmatprep.mubr.bf16.mxu0 0
        %973 = vmatmul.mubr.bf16.gmra.mrb[0].mxu0 %v815
        %v974 = vpop.f32.mrb[0].mxu0
        %v975 = vadd.f32 %v763, %v974
        %v976 = vpop.f32.mrb[0].mxu0
        %v977 = vpop.f32.mrb[0].mxu0
        %v978 = vadd.f32 %v766, %v977
        %v979 = vpop.f32.mrb[0].mxu0
        %980 = vdwg.mxu0
        %vm981 = vcmask 1045504
        %v982 = vrot.slane %v305, 2
        %v983 = vrot.slane %v306, 2
        %v984 = vsel %vm981, %v982, %v983
        %v985 = vrot.slane %v307, 2
        %v986 = vsel %vm981, %v983, %v985
        %v987 = vrot.slane %v308, 2
        %v988 = vrot.slane %v309, 2
        %v989 = vsel %vm981, %v987, %v988
        %v990 = vrot.slane %v310, 2
        %v991 = vsel %vm981, %v988, %v990
        %v992 = vrot.slane %v311, 2
        %v993 = vrot.slane %v312, 2
        %v994 = vsel %vm981, %v992, %v993
        %v995 = vrot.slane %v313, 2
        %v996 = vsel %vm981, %v993, %v995
        %v997 = vrot.slane %v314, 2
        %v998 = vrot.slane %v315, 2
        %v999 = vsel %vm981, %v997, %v998
        %v1000 = vrot.slane %v316, 2
        %v1001 = vsel %vm981, %v998, %v1000
        %v1002 = vrot.slane %v317, 2
        %v1003 = vrot.slane %v318, 2
        %v1004 = vsel %vm981, %v1002, %v1003
        %v1005 = vrot.slane %v319, 2
        %v1006 = vsel %vm981, %v1003, %v1005
        %v1007 = vrot.slane %v320, 2
        %v1008 = vrot.slane %v321, 2
        %v1009 = vsel %vm981, %v1007, %v1008
        %v1010 = vrot.slane %v322, 2
        %v1011 = vsel %vm981, %v1008, %v1010
        %v1012 = vrot.slane %v323, 2
        %v1013 = vrot.slane %v324, 2
        %v1014 = vsel %vm981, %v1012, %v1013
        %v1015 = vrot.slane %v325, 2
        %v1016 = vsel %vm981, %v1013, %v1015
        %v1017 = vrot.slane %v326, 2
        %v1018 = vrot.slane %v327, 2
        %v1019 = vsel %vm981, %v1017, %v1018
        %v1020 = vrot.slane %v328, 2
        %v1021 = vsel %vm981, %v1018, %v1020
        %v1022 = vrot.slane %v329, 2
        %v1023 = vrot.slane %v330, 2
        %v1024 = vsel %vm981, %v1022, %v1023
        %v1025 = vrot.slane %v331, 2
        %v1026 = vsel %vm981, %v1023, %v1025
        %v1027 = vrot.slane %v332, 2
        %v1028 = vrot.slane %v333, 2
        %v1029 = vsel %vm981, %v1027, %v1028
        %v1030 = vrot.slane %v334, 2
        %v1031 = vsel %vm981, %v1028, %v1030
        %v1032 = vrot.slane %v335, 2
        %v1033 = vrot.slane %v336, 2
        %v1034 = vsel %vm981, %v1032, %v1033
        %v1035 = vrot.slane %v337, 2
        %v1036 = vsel %vm981, %v1033, %v1035
        %v1037 = vrot.slane %v338, 2
        %v1038 = vrot.slane %v339, 2
        %v1039 = vsel %vm981, %v1037, %v1038
        %v1040 = vrot.slane %v340, 2
        %v1041 = vsel %vm981, %v1038, %v1040
        %v1042 = vrot.slane %v341, 2
        %v1043 = vrot.slane %v342, 2
        %v1044 = vsel %vm981, %v1042, %v1043
        %v1045 = vrot.slane %v343, 2
        %v1046 = vsel %vm981, %v1043, %v1045
        %v1047 = vrot.slane %v344, 2
        %v1048 = vrot.slane %v345, 2
        %v1049 = vsel %vm981, %v1047, %v1048
        %v1050 = vrot.slane %v346, 2
        %v1051 = vsel %vm981, %v1048, %v1050
        %v1052 = vrot.slane %v347, 2
        %v1053 = vrot.slane %v348, 2
        %v1054 = vsel %vm981, %v1052, %v1053
        %v1055 = vrot.slane %v349, 2
        %v1056 = vsel %vm981, %v1053, %v1055
        %v1057 = vrot.slane %v350, 2
        %v1058 = vrot.slane %v351, 2
        %v1059 = vsel %vm981, %v1057, %v1058
        %v1060 = vrot.slane %v352, 2
        %v1061 = vsel %vm981, %v1058, %v1060
        %v1094 = vpack.c.bf16 %v986, %v984
        %v1095 = vpack.c.bf16 %v991, %v989
        %v1096 = vpack.c.bf16 %v996, %v994
        %v1097 = vpack.c.bf16 %v1001, %v999
        %v1098 = vpack.c.bf16 %v1006, %v1004
        %v1099 = vpack.c.bf16 %v1011, %v1009
        %v1100 = vpack.c.bf16 %v1016, %v1014
        %v1101 = vpack.c.bf16 %v1021, %v1019
        %v1102 = vpack.c.bf16 %v1026, %v1024
        %v1103 = vpack.c.bf16 %v1031, %v1029
        %v1104 = vpack.c.bf16 %v1036, %v1034
        %v1105 = vpack.c.bf16 %v1041, %v1039
        %v1106 = vpack.c.bf16 %v1046, %v1044
        %v1107 = vpack.c.bf16 %v1051, %v1049
        %v1108 = vpack.c.bf16 %v1056, %v1054
        %v1109 = vpack.c.bf16 %v1061, %v1059
        %s1110 = scalar_lea.vmem %s1, 4
        %v1111 = vld [vmem:[%s1110] sm:$0x3]
        %v1113 = vsel %vm555, %v1094, 0
        %v1116 = vsel %vm555, %v1095, 0
        %v1119 = vsel %vm555, %v1096, 0
        %v1122 = vsel %vm555, %v1097, 0
        %v1125 = vsel %vm555, %v1098, 0
        %v1128 = vsel %vm555, %v1099, 0
        %v1131 = vsel %vm555, %v1100, 0
        %v1134 = vsel %vm555, %v1101, 0
        %v1137 = vsel %vm555, %v1102, 0
        %v1140 = vsel %vm555, %v1103, 0
        %v1143 = vsel %vm555, %v1104, 0
        %v1146 = vsel %vm555, %v1105, 0
        %v1149 = vsel %vm555, %v1106, 0
        %v1152 = vsel %vm555, %v1107, 0
        %v1155 = vsel %vm555, %v1108, 0
        %v1158 = vsel %vm555, %v1109, 0
        %v1161 = vsel %vm604, %v1111, 0
        %1163 = vmatprep.subr.bf16.mxu0 0
        %1164 = vmatpush1.bf16.msra.mxu0 %v1161
        %1165 = vmatprep.subr.bf16.mxu0 0
        %1166 = vmatpush1.bf16.msra.mxu0 0
        %1167 = vmatprep.subr.bf16.mxu0 0
        %1168 = vmatpush1.bf16.msra.mxu0 0
        %1169 = vmatprep.subr.bf16.mxu0 0
        %1170 = vmatpush1.bf16.msra.mxu0 0
        %1171 = vmatprep.subr.bf16.mxu0 0
        %1172 = vmatpush1.bf16.msra.mxu0 0
        %1173 = vmatprep.subr.bf16.mxu0 0
        %1174 = vmatpush1.bf16.msra.mxu0 0
        %1175 = vmatprep.subr.bf16.mxu0 0
        %1176 = vmatpush1.bf16.msra.mxu0 0
        %1177 = vmatprep.subr.bf16.mxu0 0
        %1178 = vmatpush1.bf16.msra.mxu0 0
        %1179 = vmatprep.subr.bf16.mxu0 0
        %1180 = vmatpush1.bf16.msra.mxu0 0
        %1181 = vmatprep.subr.bf16.mxu0 0
        %1182 = vmatpush1.bf16.msra.mxu0 0
        %1183 = vmatprep.subr.bf16.mxu0 0
        %1184 = vmatpush1.bf16.msra.mxu0 0
        %1185 = vmatprep.subr.bf16.mxu0 0
        %1186 = vmatpush1.bf16.msra.mxu0 0
        %1187 = vmatprep.subr.bf16.mxu0 0
        %1188 = vmatpush1.bf16.msra.mxu0 0
        %1189 = vmatprep.subr.bf16.mxu0 0
        %1190 = vmatpush1.bf16.msra.mxu0 0
        %1191 = vmatprep.subr.bf16.mxu0 0
        %1192 = vmatpush1.bf16.msra.mxu0 0
        %1193 = vmatprep.subr.bf16.mxu0 0
        %1194 = vmatpush1.bf16.msra.mxu0 0
        %1195 = vmatprep.mubr.bf16.mxu0 0
        %1196 = vmatmul.mubr.bf16.gmra.mrb[0].mxu0 %v1113
        %v1197 = vpop.f32.mrb[0].mxu0
        %v1198 = vadd.f32 0.0, %v1197
        %v1199 = vpop.f32.mrb[0].mxu0
        %v1200 = vpop.f32.mrb[0].mxu0
        %v1201 = vadd.f32 0.0, %v1200
        %v1202 = vpop.f32.mrb[0].mxu0
        %1203 = vmatprep.mubr.bf16.mxu0 0
        %1204 = vmatmul.mubr.bf16.gmra.mrb[0].mxu0 %v1116
        %v1205 = vpop.f32.mrb[0].mxu0
        %v1206 = vadd.f32 0.0, %v1205
        %v1207 = vpop.f32.mrb[0].mxu0
        %v1208 = vpop.f32.mrb[0].mxu0
        %v1209 = vadd.f32 0.0, %v1208
        %v1210 = vpop.f32.mrb[0].mxu0
        %1211 = vmatprep.mubr.bf16.mxu0 0
        %1212 = vmatmul.mubr.bf16.gmra.mrb[0].mxu0 %v1119
        %v1213 = vpop.f32.mrb[0].mxu0
        %v1214 = vadd.f32 0.0, %v1213
        %v1215 = vpop.f32.mrb[0].mxu0
        %v1216 = vpop.f32.mrb[0].mxu0
        %v1217 = vadd.f32 0.0, %v1216
        %v1218 = vpop.f32.mrb[0].mxu0
        %1219 = vmatprep.mubr.bf16.mxu0 0
        %1220 = vmatmul.mubr.bf16.gmra.mrb[0].mxu0 %v1122
        %v1221 = vpop.f32.mrb[0].mxu0
        %v1222 = vadd.f32 0.0, %v1221
        %v1223 = vpop.f32.mrb[0].mxu0
        %v1224 = vpop.f32.mrb[0].mxu0
        %v1225 = vadd.f32 0.0, %v1224
        %v1226 = vpop.f32.mrb[0].mxu0
        %1227 = vmatprep.mubr.bf16.mxu0 0
        %1228 = vmatmul.mubr.bf16.gmra.mrb[0].mxu0 %v1125
        %v1229 = vpop.f32.mrb[0].mxu0
        %v1230 = vadd.f32 0.0, %v1229
        %v1231 = vpop.f32.mrb[0].mxu0
        %v1232 = vpop.f32.mrb[0].mxu0
        %v1233 = vadd.f32 0.0, %v1232
        %v1234 = vpop.f32.mrb[0].mxu0
        %1235 = vmatprep.mubr.bf16.mxu0 0
        %1236 = vmatmul.mubr.bf16.gmra.mrb[0].mxu0 %v1128
        %v1237 = vpop.f32.mrb[0].mxu0
        %v1238 = vadd.f32 0.0, %v1237
        %v1239 = vpop.f32.mrb[0].mxu0
        %v1240 = vpop.f32.mrb[0].mxu0
        %v1241 = vadd.f32 0.0, %v1240
        %v1242 = vpop.f32.mrb[0].mxu0
        %1243 = vmatprep.mubr.bf16.mxu0 0
        %1244 = vmatmul.mubr.bf16.gmra.mrb[0].mxu0 %v1131
        %v1245 = vpop.f32.mrb[0].mxu0
        %v1246 = vadd.f32 0.0, %v1245
        %v1247 = vpop.f32.mrb[0].mxu0
        %v1248 = vpop.f32.mrb[0].mxu0
        %v1249 = vadd.f32 0.0, %v1248
        %v1250 = vpop.f32.mrb[0].mxu0
        %1251 = vmatprep.mubr.bf16.mxu0 0
        %1252 = vmatmul.mubr.bf16.gmra.mrb[0].mxu0 %v1134
        %v1253 = vpop.f32.mrb[0].mxu0
        %v1254 = vadd.f32 0.0, %v1253
        %v1255 = vpop.f32.mrb[0].mxu0
        %v1256 = vpop.f32.mrb[0].mxu0
        %v1257 = vadd.f32 0.0, %v1256
        %v1258 = vpop.f32.mrb[0].mxu0
        %1259 = vmatprep.mubr.bf16.mxu0 0
        %1260 = vmatmul.mubr.bf16.gmra.mrb[0].mxu0 %v1137
        %v1261 = vpop.f32.mrb[0].mxu0
        %v1262 = vadd.f32 0.0, %v1261
        %v1263 = vpop.f32.mrb[0].mxu0
        %v1264 = vpop.f32.mrb[0].mxu0
        %v1265 = vadd.f32 0.0, %v1264
        %v1266 = vpop.f32.mrb[0].mxu0
        %1267 = vmatprep.mubr.bf16.mxu0 0
        %1268 = vmatmul.mubr.bf16.gmra.mrb[0].mxu0 %v1140
        %v1269 = vpop.f32.mrb[0].mxu0
        %v1270 = vadd.f32 0.0, %v1269
        %v1271 = vpop.f32.mrb[0].mxu0
        %v1272 = vpop.f32.mrb[0].mxu0
        %v1273 = vadd.f32 0.0, %v1272
        %v1274 = vpop.f32.mrb[0].mxu0
        %1275 = vmatprep.mubr.bf16.mxu0 0
        %1276 = vmatmul.mubr.bf16.gmra.mrb[0].mxu0 %v1143
        %v1277 = vpop.f32.mrb[0].mxu0
        %v1278 = vadd.f32 0.0, %v1277
        %v1279 = vpop.f32.mrb[0].mxu0
        %v1280 = vpop.f32.mrb[0].mxu0
        %v1281 = vadd.f32 0.0, %v1280
        %v1282 = vpop.f32.mrb[0].mxu0
        %1283 = vmatprep.mubr.bf16.mxu0 0
        %1284 = vmatmul.mubr.bf16.gmra.mrb[0].mxu0 %v1146
        %v1285 = vpop.f32.mrb[0].mxu0
        %v1286 = vadd.f32 0.0, %v1285
        %v1287 = vpop.f32.mrb[0].mxu0
        %v1288 = vpop.f32.mrb[0].mxu0
        %v1289 = vadd.f32 0.0, %v1288
        %v1290 = vpop.f32.mrb[0].mxu0
        %1291 = vmatprep.mubr.bf16.mxu0 0
        %1292 = vmatmul.mubr.bf16.gmra.mrb[0].mxu0 %v1149
        %v1293 = vpop.f32.mrb[0].mxu0
        %v1294 = vadd.f32 0.0, %v1293
        %v1295 = vpop.f32.mrb[0].mxu0
        %v1296 = vpop.f32.mrb[0].mxu0
        %v1297 = vadd.f32 0.0, %v1296
        %v1298 = vpop.f32.mrb[0].mxu0
        %1299 = vmatprep.mubr.bf16.mxu0 0
        %1300 = vmatmul.mubr.bf16.gmra.mrb[0].mxu0 %v1152
        %v1301 = vpop.f32.mrb[0].mxu0
        %v1302 = vadd.f32 0.0, %v1301
        %v1303 = vpop.f32.mrb[0].mxu0
        %v1304 = vpop.f32.mrb[0].mxu0
        %v1305 = vadd.f32 0.0, %v1304
        %v1306 = vpop.f32.mrb[0].mxu0
        %1307 = vmatprep.mubr.bf16.mxu0 0
        %1308 = vmatmul.mubr.bf16.gmra.mrb[0].mxu0 %v1155
        %v1309 = vpop.f32.mrb[0].mxu0
        %v1310 = vadd.f32 0.0, %v1309
        %v1311 = vpop.f32.mrb[0].mxu0
        %v1312 = vpop.f32.mrb[0].mxu0
        %v1313 = vadd.f32 0.0, %v1312
        %v1314 = vpop.f32.mrb[0].mxu0
        %1315 = vmatprep.mubr.bf16.mxu0 0
        %1316 = vmatmul.mubr.bf16.gmra.mrb[0].mxu0 %v1158
        %v1317 = vpop.f32.mrb[0].mxu0
        %v1318 = vadd.f32 0.0, %v1317
        %v1319 = vpop.f32.mrb[0].mxu0
        %v1320 = vpop.f32.mrb[0].mxu0
        %v1321 = vadd.f32 0.0, %v1320
        %v1322 = vpop.f32.mrb[0].mxu0
        %1323 = vdwg.mxu0
        %v1324 = vadd.f32 %v855, %v1198
        %v1325 = vadd.f32 %v858, %v1201
        %v1326 = vadd.f32 %v863, %v1206
        %v1327 = vadd.f32 %v866, %v1209
        %v1328 = vadd.f32 %v871, %v1214
        %v1329 = vadd.f32 %v874, %v1217
        %v1330 = vadd.f32 %v879, %v1222
        %v1331 = vadd.f32 %v882, %v1225
        %v1332 = vadd.f32 %v887, %v1230
        %v1333 = vadd.f32 %v890, %v1233
        %v1334 = vadd.f32 %v895, %v1238
        %v1335 = vadd.f32 %v898, %v1241
        %v1336 = vadd.f32 %v903, %v1246
        %v1337 = vadd.f32 %v906, %v1249
        %v1338 = vadd.f32 %v911, %v1254
        %v1339 = vadd.f32 %v914, %v1257
        %v1340 = vadd.f32 %v919, %v1262
        %v1341 = vadd.f32 %v922, %v1265
        %v1342 = vadd.f32 %v927, %v1270
        %v1343 = vadd.f32 %v930, %v1273
        %v1344 = vadd.f32 %v935, %v1278
        %v1345 = vadd.f32 %v938, %v1281
        %v1346 = vadd.f32 %v943, %v1286
        %v1347 = vadd.f32 %v946, %v1289
        %v1348 = vadd.f32 %v951, %v1294
        %v1349 = vadd.f32 %v954, %v1297
        %v1350 = vadd.f32 %v959, %v1302
        %v1351 = vadd.f32 %v962, %v1305
        %v1352 = vadd.f32 %v967, %v1310
        %v1353 = vadd.f32 %v970, %v1313
        %v1354 = vadd.f32 %v975, %v1318
        %v1355 = vadd.f32 %v978, %v1321
        %v1356 = vpack.c.bf16 %v354, %v353
        %s1357 = scalar_lea.vmem %s1, 6
        %v1358 = vld [vmem:[%s1357] sm:$0x3]
        %v1360 = vsel %vm555, %v1356, 0
        %v1363 = vsel %vm604, %v1358, 0
        %1365 = vmatprep.subr.bf16.mxu0 0
        %1366 = vmatpush1.bf16.msra.mxu0 %v1363
        %1367 = vmatprep.subr.bf16.mxu0 0
        %1368 = vmatpush1.bf16.msra.mxu0 0
        %1369 = vmatprep.subr.bf16.mxu0 0
        %1370 = vmatpush1.bf16.msra.mxu0 0
        %1371 = vmatprep.subr.bf16.mxu0 0
        %1372 = vmatpush1.bf16.msra.mxu0 0
        %1373 = vmatprep.subr.bf16.mxu0 0
        %1374 = vmatpush1.bf16.msra.mxu0 0
        %1375 = vmatprep.subr.bf16.mxu0 0
        %1376 = vmatpush1.bf16.msra.mxu0 0
        %1377 = vmatprep.subr.bf16.mxu0 0
        %1378 = vmatpush1.bf16.msra.mxu0 0
        %1379 = vmatprep.subr.bf16.mxu0 0
        %1380 = vmatpush1.bf16.msra.mxu0 0
        %1381 = vmatprep.subr.bf16.mxu0 0
        %1382 = vmatpush1.bf16.msra.mxu0 0
        %1383 = vmatprep.subr.bf16.mxu0 0
        %1384 = vmatpush1.bf16.msra.mxu0 0
        %1385 = vmatprep.subr.bf16.mxu0 0
        %1386 = vmatpush1.bf16.msra.mxu0 0
        %1387 = vmatprep.subr.bf16.mxu0 0
        %1388 = vmatpush1.bf16.msra.mxu0 0
        %1389 = vmatprep.subr.bf16.mxu0 0
        %1390 = vmatpush1.bf16.msra.mxu0 0
        %1391 = vmatprep.subr.bf16.mxu0 0
        %1392 = vmatpush1.bf16.msra.mxu0 0
        %1393 = vmatprep.subr.bf16.mxu0 0
        %1394 = vmatpush1.bf16.msra.mxu0 0
        %1395 = vmatprep.subr.bf16.mxu0 0
        %1396 = vmatpush1.bf16.msra.mxu0 0
        %1397 = vmatprep.mubr.bf16.mxu0 0
        %1398 = vmatmul.mubr.bf16.gmra.mrb[0].mxu0 %v773
        %v1399 = vpop.f32.mrb[0].mxu0
        %v1400 = vadd.f32 0.0, %v1399
        %v1401 = vpop.f32.mrb[0].mxu0
        %v1402 = vpop.f32.mrb[0].mxu0
        %v1403 = vadd.f32 0.0, %v1402
        %v1404 = vpop.f32.mrb[0].mxu0
        %1405 = vmatprep.mubr.bf16.mxu0 0
        %1406 = vmatmul.mubr.bf16.gmra.mrb[0].mxu0 %v776
        %v1407 = vpop.f32.mrb[0].mxu0
        %v1408 = vadd.f32 0.0, %v1407
        %v1409 = vpop.f32.mrb[0].mxu0
        %v1410 = vpop.f32.mrb[0].mxu0
        %v1411 = vadd.f32 0.0, %v1410
        %v1412 = vpop.f32.mrb[0].mxu0
        %1413 = vmatprep.mubr.bf16.mxu0 0
        %1414 = vmatmul.mubr.bf16.gmra.mrb[0].mxu0 %v779
        %v1415 = vpop.f32.mrb[0].mxu0
        %v1416 = vadd.f32 0.0, %v1415
        %v1417 = vpop.f32.mrb[0].mxu0
        %v1418 = vpop.f32.mrb[0].mxu0
        %v1419 = vadd.f32 0.0, %v1418
        %v1420 = vpop.f32.mrb[0].mxu0
        %1421 = vmatprep.mubr.bf16.mxu0 0
        %1422 = vmatmul.mubr.bf16.gmra.mrb[0].mxu0 %v782
        %v1423 = vpop.f32.mrb[0].mxu0
        %v1424 = vadd.f32 0.0, %v1423
        %v1425 = vpop.f32.mrb[0].mxu0
        %v1426 = vpop.f32.mrb[0].mxu0
        %v1427 = vadd.f32 0.0, %v1426
        %v1428 = vpop.f32.mrb[0].mxu0
        %1429 = vmatprep.mubr.bf16.mxu0 0
        %1430 = vmatmul.mubr.bf16.gmra.mrb[0].mxu0 %v785
        %v1431 = vpop.f32.mrb[0].mxu0
        %v1432 = vadd.f32 0.0, %v1431
        %v1433 = vpop.f32.mrb[0].mxu0
        %v1434 = vpop.f32.mrb[0].mxu0
        %v1435 = vadd.f32 0.0, %v1434
        %v1436 = vpop.f32.mrb[0].mxu0
        %1437 = vmatprep.mubr.bf16.mxu0 0
        %1438 = vmatmul.mubr.bf16.gmra.mrb[0].mxu0 %v788
        %v1439 = vpop.f32.mrb[0].mxu0
        %v1440 = vadd.f32 0.0, %v1439
        %v1441 = vpop.f32.mrb[0].mxu0
        %v1442 = vpop.f32.mrb[0].mxu0
        %v1443 = vadd.f32 0.0, %v1442
        %v1444 = vpop.f32.mrb[0].mxu0
        %1445 = vmatprep.mubr.bf16.mxu0 0
        %1446 = vmatmul.mubr.bf16.gmra.mrb[0].mxu0 %v791
        %v1447 = vpop.f32.mrb[0].mxu0
        %v1448 = vadd.f32 0.0, %v1447
        %v1449 = vpop.f32.mrb[0].mxu0
        %v1450 = vpop.f32.mrb[0].mxu0
        %v1451 = vadd.f32 0.0, %v1450
        %v1452 = vpop.f32.mrb[0].mxu0
        %1453 = vmatprep.mubr.bf16.mxu0 0
        %1454 = vmatmul.mubr.bf16.gmra.mrb[0].mxu0 %v794
        %v1455 = vpop.f32.mrb[0].mxu0
        %v1456 = vadd.f32 0.0, %v1455
        %v1457 = vpop.f32.mrb[0].mxu0
        %v1458 = vpop.f32.mrb[0].mxu0
        %v1459 = vadd.f32 0.0, %v1458
        %v1460 = vpop.f32.mrb[0].mxu0
        %1461 = vmatprep.mubr.bf16.mxu0 0
        %1462 = vmatmul.mubr.bf16.gmra.mrb[0].mxu0 %v797
        %v1463 = vpop.f32.mrb[0].mxu0
        %v1464 = vadd.f32 0.0, %v1463
        %v1465 = vpop.f32.mrb[0].mxu0
        %v1466 = vpop.f32.mrb[0].mxu0
        %v1467 = vadd.f32 0.0, %v1466
        %v1468 = vpop.f32.mrb[0].mxu0
        %1469 = vmatprep.mubr.bf16.mxu0 0
        %1470 = vmatmul.mubr.bf16.gmra.mrb[0].mxu0 %v800
        %v1471 = vpop.f32.mrb[0].mxu0
        %v1472 = vadd.f32 0.0, %v1471
        %v1473 = vpop.f32.mrb[0].mxu0
        %v1474 = vpop.f32.mrb[0].mxu0
        %v1475 = vadd.f32 0.0, %v1474
        %v1476 = vpop.f32.mrb[0].mxu0
        %1477 = vmatprep.mubr.bf16.mxu0 0
        %1478 = vmatmul.mubr.bf16.gmra.mrb[0].mxu0 %v803
        %v1479 = vpop.f32.mrb[0].mxu0
        %v1480 = vadd.f32 0.0, %v1479
        %v1481 = vpop.f32.mrb[0].mxu0
        %v1482 = vpop.f32.mrb[0].mxu0
        %v1483 = vadd.f32 0.0, %v1482
        %v1484 = vpop.f32.mrb[0].mxu0
        %1485 = vmatprep.mubr.bf16.mxu0 0
        %1486 = vmatmul.mubr.bf16.gmra.mrb[0].mxu0 %v806
        %v1487 = vpop.f32.mrb[0].mxu0
        %v1488 = vadd.f32 0.0, %v1487
        %v1489 = vpop.f32.mrb[0].mxu0
        %v1490 = vpop.f32.mrb[0].mxu0
        %v1491 = vadd.f32 0.0, %v1490
        %v1492 = vpop.f32.mrb[0].mxu0
        %1493 = vmatprep.mubr.bf16.mxu0 0
        %1494 = vmatmul.mubr.bf16.gmra.mrb[0].mxu0 %v809
        %v1495 = vpop.f32.mrb[0].mxu0
        %v1496 = vadd.f32 0.0, %v1495
        %v1497 = vpop.f32.mrb[0].mxu0
        %v1498 = vpop.f32.mrb[0].mxu0
        %v1499 = vadd.f32 0.0, %v1498
        %v1500 = vpop.f32.mrb[0].mxu0
        %1501 = vmatprep.mubr.bf16.mxu0 0
        %1502 = vmatmul.mubr.bf16.gmra.mrb[0].mxu0 %v812
        %v1503 = vpop.f32.mrb[0].mxu0
        %v1504 = vadd.f32 0.0, %v1503
        %v1505 = vpop.f32.mrb[0].mxu0
        %v1506 = vpop.f32.mrb[0].mxu0
        %v1507 = vadd.f32 0.0, %v1506
        %v1508 = vpop.f32.mrb[0].mxu0
        %1509 = vmatprep.mubr.bf16.mxu0 0
        %1510 = vmatmul.mubr.bf16.gmra.mrb[0].mxu0 %v815
        %v1511 = vpop.f32.mrb[0].mxu0
        %v1512 = vadd.f32 0.0, %v1511
        %v1513 = vpop.f32.mrb[0].mxu0
        %v1514 = vpop.f32.mrb[0].mxu0
        %v1515 = vadd.f32 0.0, %v1514
        %v1516 = vpop.f32.mrb[0].mxu0
        %1517 = vmatprep.mubr.bf16.mxu0 0
        %1518 = vmatmul.mubr.bf16.gmra.mrb[0].mxu0 %v1360
        %v1519 = vpop.f32.mrb[0].mxu0
        %v1520 = vadd.f32 0.0, %v1519
        %v1521 = vpop.f32.mrb[0].mxu0
        %v1522 = vpop.f32.mrb[0].mxu0
        %v1523 = vadd.f32 0.0, %v1522
        %v1524 = vpop.f32.mrb[0].mxu0
        %1525 = vdwg.mxu0
        %v1526 = vadd.f32 %v1324, %v1400
        %v1527 = vadd.f32 %v1325, %v1403
        %v1528 = vadd.f32 %v1326, %v1408
        %v1529 = vadd.f32 %v1327, %v1411
        %v1530 = vadd.f32 %v1328, %v1416
        %v1531 = vadd.f32 %v1329, %v1419
        %v1532 = vadd.f32 %v1330, %v1424
        %v1533 = vadd.f32 %v1331, %v1427
        %v1534 = vadd.f32 %v1332, %v1432
        %v1535 = vadd.f32 %v1333, %v1435
        %v1536 = vadd.f32 %v1334, %v1440
        %v1537 = vadd.f32 %v1335, %v1443
        %v1538 = vadd.f32 %v1336, %v1448
        %v1539 = vadd.f32 %v1337, %v1451
        %v1540 = vadd.f32 %v1338, %v1456
        %v1541 = vadd.f32 %v1339, %v1459
        %v1542 = vadd.f32 %v1340, %v1464
        %v1543 = vadd.f32 %v1341, %v1467
        %v1544 = vadd.f32 %v1342, %v1472
        %v1545 = vadd.f32 %v1343, %v1475
        %v1546 = vadd.f32 %v1344, %v1480
        %v1547 = vadd.f32 %v1345, %v1483
        %v1548 = vadd.f32 %v1346, %v1488
        %v1549 = vadd.f32 %v1347, %v1491
        %v1550 = vadd.f32 %v1348, %v1496
        %v1551 = vadd.f32 %v1349, %v1499
        %v1552 = vadd.f32 %v1350, %v1504
        %v1553 = vadd.f32 %v1351, %v1507
        %v1554 = vadd.f32 %v1352, %v1512
        %v1555 = vadd.f32 %v1353, %v1515
        %v1556 = vadd.f32 %v1354, %v1520
        %v1557 = vadd.f32 %v1355, %v1523
        %v1561 = vrot.slane %v353, 1
        %v1562 = vrot.slane %v354, 1
        %v1563 = vsel %vm424, %v1561, %v1562
        %v1564 = vrot.slane %v355, 1
        %v1565 = vsel %vm424, %v1562, %v1564
        %v1568 = vpack.c.bf16 %v1565, %v1563
        %s1569 = scalar_lea.vmem %s1, 8
        %v1570 = vld [vmem:[%s1569] sm:$0x3]
        %v1572 = vsel %vm555, %v1568, 0
        %v1575 = vsel %vm604, %v1570, 0
        %1577 = vmatprep.subr.bf16.mxu0 0
        %1578 = vmatpush1.bf16.msra.mxu0 %v1575
        %1579 = vmatprep.subr.bf16.mxu0 0
        %1580 = vmatpush1.bf16.msra.mxu0 0
        %1581 = vmatprep.subr.bf16.mxu0 0
        %1582 = vmatpush1.bf16.msra.mxu0 0
        %1583 = vmatprep.subr.bf16.mxu0 0
        %1584 = vmatpush1.bf16.msra.mxu0 0
        %1585 = vmatprep.subr.bf16.mxu0 0
        %1586 = vmatpush1.bf16.msra.mxu0 0
        %1587 = vmatprep.subr.bf16.mxu0 0
        %1588 = vmatpush1.bf16.msra.mxu0 0
        %1589 = vmatprep.subr.bf16.mxu0 0
        %1590 = vmatpush1.bf16.msra.mxu0 0
        %1591 = vmatprep.subr.bf16.mxu0 0
        %1592 = vmatpush1.bf16.msra.mxu0 0
        %1593 = vmatprep.subr.bf16.mxu0 0
        %1594 = vmatpush1.bf16.msra.mxu0 0
        %1595 = vmatprep.subr.bf16.mxu0 0
        %1596 = vmatpush1.bf16.msra.mxu0 0
        %1597 = vmatprep.subr.bf16.mxu0 0
        %1598 = vmatpush1.bf16.msra.mxu0 0
        %1599 = vmatprep.subr.bf16.mxu0 0
        %1600 = vmatpush1.bf16.msra.mxu0 0
        %1601 = vmatprep.subr.bf16.mxu0 0
        %1602 = vmatpush1.bf16.msra.mxu0 0
        %1603 = vmatprep.subr.bf16.mxu0 0
        %1604 = vmatpush1.bf16.msra.mxu0 0
        %1605 = vmatprep.subr.bf16.mxu0 0
        %1606 = vmatpush1.bf16.msra.mxu0 0
        %1607 = vmatprep.subr.bf16.mxu0 0
        %1608 = vmatpush1.bf16.msra.mxu0 0
        %1609 = vmatprep.mubr.bf16.mxu0 0
        %1610 = vmatmul.mubr.bf16.gmra.mrb[0].mxu0 %v560
        %v1611 = vpop.f32.mrb[0].mxu0
        %v1612 = vadd.f32 0.0, %v1611
        %v1613 = vpop.f32.mrb[0].mxu0
        %v1614 = vpop.f32.mrb[0].mxu0
        %v1615 = vadd.f32 0.0, %v1614
        %v1616 = vpop.f32.mrb[0].mxu0
        %1617 = vmatprep.mubr.bf16.mxu0 0
        %1618 = vmatmul.mubr.bf16.gmra.mrb[0].mxu0 %v563
        %v1619 = vpop.f32.mrb[0].mxu0
        %v1620 = vadd.f32 0.0, %v1619
        %v1621 = vpop.f32.mrb[0].mxu0
        %v1622 = vpop.f32.mrb[0].mxu0
        %v1623 = vadd.f32 0.0, %v1622
        %v1624 = vpop.f32.mrb[0].mxu0
        %1625 = vmatprep.mubr.bf16.mxu0 0
        %1626 = vmatmul.mubr.bf16.gmra.mrb[0].mxu0 %v566
        %v1627 = vpop.f32.mrb[0].mxu0
        %v1628 = vadd.f32 0.0, %v1627
        %v1629 = vpop.f32.mrb[0].mxu0
        %v1630 = vpop.f32.mrb[0].mxu0
        %v1631 = vadd.f32 0.0, %v1630
        %v1632 = vpop.f32.mrb[0].mxu0
        %1633 = vmatprep.mubr.bf16.mxu0 0
        %1634 = vmatmul.mubr.bf16.gmra.mrb[0].mxu0 %v569
        %v1635 = vpop.f32.mrb[0].mxu0
        %v1636 = vadd.f32 0.0, %v1635
        %v1637 = vpop.f32.mrb[0].mxu0
        %v1638 = vpop.f32.mrb[0].mxu0
        %v1639 = vadd.f32 0.0, %v1638
        %v1640 = vpop.f32.mrb[0].mxu0
        %1641 = vmatprep.mubr.bf16.mxu0 0
        %1642 = vmatmul.mubr.bf16.gmra.mrb[0].mxu0 %v572
        %v1643 = vpop.f32.mrb[0].mxu0
        %v1644 = vadd.f32 0.0, %v1643
        %v1645 = vpop.f32.mrb[0].mxu0
        %v1646 = vpop.f32.mrb[0].mxu0
        %v1647 = vadd.f32 0.0, %v1646
        %v1648 = vpop.f32.mrb[0].mxu0
        %1649 = vmatprep.mubr.bf16.mxu0 0
        %1650 = vmatmul.mubr.bf16.gmra.mrb[0].mxu0 %v575
        %v1651 = vpop.f32.mrb[0].mxu0
        %v1652 = vadd.f32 0.0, %v1651
        %v1653 = vpop.f32.mrb[0].mxu0
        %v1654 = vpop.f32.mrb[0].mxu0
        %v1655 = vadd.f32 0.0, %v1654
        %v1656 = vpop.f32.mrb[0].mxu0
        %1657 = vmatprep.mubr.bf16.mxu0 0
        %1658 = vmatmul.mubr.bf16.gmra.mrb[0].mxu0 %v578
        %v1659 = vpop.f32.mrb[0].mxu0
        %v1660 = vadd.f32 0.0, %v1659
        %v1661 = vpop.f32.mrb[0].mxu0
        %v1662 = vpop.f32.mrb[0].mxu0
        %v1663 = vadd.f32 0.0, %v1662
        %v1664 = vpop.f32.mrb[0].mxu0
        %1665 = vmatprep.mubr.bf16.mxu0 0
        %1666 = vmatmul.mubr.bf16.gmra.mrb[0].mxu0 %v581
        %v1667 = vpop.f32.mrb[0].mxu0
        %v1668 = vadd.f32 0.0, %v1667
        %v1669 = vpop.f32.mrb[0].mxu0
        %v1670 = vpop.f32.mrb[0].mxu0
        %v1671 = vadd.f32 0.0, %v1670
        %v1672 = vpop.f32.mrb[0].mxu0
        %1673 = vmatprep.mubr.bf16.mxu0 0
        %1674 = vmatmul.mubr.bf16.gmra.mrb[0].mxu0 %v584
        %v1675 = vpop.f32.mrb[0].mxu0
        %v1676 = vadd.f32 0.0, %v1675
        %v1677 = vpop.f32.mrb[0].mxu0
        %v1678 = vpop.f32.mrb[0].mxu0
        %v1679 = vadd.f32 0.0, %v1678
        %v1680 = vpop.f32.mrb[0].mxu0
        %1681 = vmatprep.mubr.bf16.mxu0 0
        %1682 = vmatmul.mubr.bf16.gmra.mrb[0].mxu0 %v587
        %v1683 = vpop.f32.mrb[0].mxu0
        %v1684 = vadd.f32 0.0, %v1683
        %v1685 = vpop.f32.mrb[0].mxu0
        %v1686 = vpop.f32.mrb[0].mxu0
        %v1687 = vadd.f32 0.0, %v1686
        %v1688 = vpop.f32.mrb[0].mxu0
        %1689 = vmatprep.mubr.bf16.mxu0 0
        %1690 = vmatmul.mubr.bf16.gmra.mrb[0].mxu0 %v590
        %v1691 = vpop.f32.mrb[0].mxu0
        %v1692 = vadd.f32 0.0, %v1691
        %v1693 = vpop.f32.mrb[0].mxu0
        %v1694 = vpop.f32.mrb[0].mxu0
        %v1695 = vadd.f32 0.0, %v1694
        %v1696 = vpop.f32.mrb[0].mxu0
        %1697 = vmatprep.mubr.bf16.mxu0 0
        %1698 = vmatmul.mubr.bf16.gmra.mrb[0].mxu0 %v593
        %v1699 = vpop.f32.mrb[0].mxu0
        %v1700 = vadd.f32 0.0, %v1699
        %v1701 = vpop.f32.mrb[0].mxu0
        %v1702 = vpop.f32.mrb[0].mxu0
        %v1703 = vadd.f32 0.0, %v1702
        %v1704 = vpop.f32.mrb[0].mxu0
        %1705 = vmatprep.mubr.bf16.mxu0 0
        %1706 = vmatmul.mubr.bf16.gmra.mrb[0].mxu0 %v596
        %v1707 = vpop.f32.mrb[0].mxu0
        %v1708 = vadd.f32 0.0, %v1707
        %v1709 = vpop.f32.mrb[0].mxu0
        %v1710 = vpop.f32.mrb[0].mxu0
        %v1711 = vadd.f32 0.0, %v1710
        %v1712 = vpop.f32.mrb[0].mxu0
        %1713 = vmatprep.mubr.bf16.mxu0 0
        %1714 = vmatmul.mubr.bf16.gmra.mrb[0].mxu0 %v599
        %v1715 = vpop.f32.mrb[0].mxu0
        %v1716 = vadd.f32 0.0, %v1715
        %v1717 = vpop.f32.mrb[0].mxu0
        %v1718 = vpop.f32.mrb[0].mxu0
        %v1719 = vadd.f32 0.0, %v1718
        %v1720 = vpop.f32.mrb[0].mxu0
        %1721 = vmatprep.mubr.bf16.mxu0 0
        %1722 = vmatmul.mubr.bf16.gmra.mrb[0].mxu0 %v602
        %v1723 = vpop.f32.mrb[0].mxu0
        %v1724 = vadd.f32 0.0, %v1723
        %v1725 = vpop.f32.mrb[0].mxu0
        %v1726 = vpop.f32.mrb[0].mxu0
        %v1727 = vadd.f32 0.0, %v1726
        %v1728 = vpop.f32.mrb[0].mxu0
        %1729 = vmatprep.mubr.bf16.mxu0 0
        %1730 = vmatmul.mubr.bf16.gmra.mrb[0].mxu0 %v1572
        %v1731 = vpop.f32.mrb[0].mxu0
        %v1732 = vadd.f32 0.0, %v1731
        %v1733 = vpop.f32.mrb[0].mxu0
        %v1734 = vpop.f32.mrb[0].mxu0
        %v1735 = vadd.f32 0.0, %v1734
        %v1736 = vpop.f32.mrb[0].mxu0
        %1737 = vdwg.mxu0
        %v1738 = vadd.f32 %v1526, %v1612
        %v1739 = vadd.f32 %v1527, %v1615
        %v1740 = vadd.f32 %v1528, %v1620
        %v1741 = vadd.f32 %v1529, %v1623
        %v1742 = vadd.f32 %v1530, %v1628
        %v1743 = vadd.f32 %v1531, %v1631
        %v1744 = vadd.f32 %v1532, %v1636
        %v1745 = vadd.f32 %v1533, %v1639
        %v1746 = vadd.f32 %v1534, %v1644
        %v1747 = vadd.f32 %v1535, %v1647
        %v1748 = vadd.f32 %v1536, %v1652
        %v1749 = vadd.f32 %v1537, %v1655
        %v1750 = vadd.f32 %v1538, %v1660
        %v1751 = vadd.f32 %v1539, %v1663
        %v1752 = vadd.f32 %v1540, %v1668
        %v1753 = vadd.f32 %v1541, %v1671
        %v1754 = vadd.f32 %v1542, %v1676
        %v1755 = vadd.f32 %v1543, %v1679
        %v1756 = vadd.f32 %v1544, %v1684
        %v1757 = vadd.f32 %v1545, %v1687
        %v1758 = vadd.f32 %v1546, %v1692
        %v1759 = vadd.f32 %v1547, %v1695
        %v1760 = vadd.f32 %v1548, %v1700
        %v1761 = vadd.f32 %v1549, %v1703
        %v1762 = vadd.f32 %v1550, %v1708
        %v1763 = vadd.f32 %v1551, %v1711
        %v1764 = vadd.f32 %v1552, %v1716
        %v1765 = vadd.f32 %v1553, %v1719
        %v1766 = vadd.f32 %v1554, %v1724
        %v1767 = vadd.f32 %v1555, %v1727
        %v1768 = vadd.f32 %v1556, %v1732
        %v1769 = vadd.f32 %v1557, %v1735
        %v1770 = vrot.slane %v353, 2
        %v1771 = vrot.slane %v354, 2
        %v1772 = vsel %vm981, %v1770, %v1771
        %v1773 = vrot.slane %v355, 2
        %v1774 = vsel %vm981, %v1771, %v1773
        %v1777 = vpack.c.bf16 %v1774, %v1772
        %s1778 = scalar_lea.vmem %s1, 10
        %v1779 = vld [vmem:[%s1778] sm:$0x3]
        %v1781 = vsel %vm555, %v1777, 0
        %v1784 = vsel %vm604, %v1779, 0
        %1786 = vmatprep.subr.bf16.mxu0 0
        %1787 = vmatpush1.bf16.msra.mxu0 %v1784
        %1788 = vmatprep.subr.bf16.mxu0 0
        %1789 = vmatpush1.bf16.msra.mxu0 0
        %1790 = vmatprep.subr.bf16.mxu0 0
        %1791 = vmatpush1.bf16.msra.mxu0 0
        %1792 = vmatprep.subr.bf16.mxu0 0
        %1793 = vmatpush1.bf16.msra.mxu0 0
        %1794 = vmatprep.subr.bf16.mxu0 0
        %1795 = vmatpush1.bf16.msra.mxu0 0
        %1796 = vmatprep.subr.bf16.mxu0 0
        %1797 = vmatpush1.bf16.msra.mxu0 0
        %1798 = vmatprep.subr.bf16.mxu0 0
        %1799 = vmatpush1.bf16.msra.mxu0 0
        %1800 = vmatprep.subr.bf16.mxu0 0
        %1801 = vmatpush1.bf16.msra.mxu0 0
        %1802 = vmatprep.subr.bf16.mxu0 0
        %1803 = vmatpush1.bf16.msra.mxu0 0
        %1804 = vmatprep.subr.bf16.mxu0 0
        %1805 = vmatpush1.bf16.msra.mxu0 0
        %1806 = vmatprep.subr.bf16.mxu0 0
        %1807 = vmatpush1.bf16.msra.mxu0 0
        %1808 = vmatprep.subr.bf16.mxu0 0
        %1809 = vmatpush1.bf16.msra.mxu0 0
        %1810 = vmatprep.subr.bf16.mxu0 0
        %1811 = vmatpush1.bf16.msra.mxu0 0
        %1812 = vmatprep.subr.bf16.mxu0 0
        %1813 = vmatpush1.bf16.msra.mxu0 0
        %1814 = vmatprep.subr.bf16.mxu0 0
        %1815 = vmatpush1.bf16.msra.mxu0 0
        %1816 = vmatprep.subr.bf16.mxu0 0
        %1817 = vmatpush1.bf16.msra.mxu0 0
        %1818 = vmatprep.mubr.bf16.mxu0 0
        %1819 = vmatmul.mubr.bf16.gmra.mrb[0].mxu0 %v1116
        %v1820 = vpop.f32.mrb[0].mxu0
        %v1821 = vadd.f32 0.0, %v1820
        %v1822 = vpop.f32.mrb[0].mxu0
        %v1823 = vpop.f32.mrb[0].mxu0
        %v1824 = vadd.f32 0.0, %v1823
        %v1825 = vpop.f32.mrb[0].mxu0
        %1826 = vmatprep.mubr.bf16.mxu0 0
        %1827 = vmatmul.mubr.bf16.gmra.mrb[0].mxu0 %v1119
        %v1828 = vpop.f32.mrb[0].mxu0
        %v1829 = vadd.f32 0.0, %v1828
        %v1830 = vpop.f32.mrb[0].mxu0
        %v1831 = vpop.f32.mrb[0].mxu0
        %v1832 = vadd.f32 0.0, %v1831
        %v1833 = vpop.f32.mrb[0].mxu0
        %1834 = vmatprep.mubr.bf16.mxu0 0
        %1835 = vmatmul.mubr.bf16.gmra.mrb[0].mxu0 %v1122
        %v1836 = vpop.f32.mrb[0].mxu0
        %v1837 = vadd.f32 0.0, %v1836
        %v1838 = vpop.f32.mrb[0].mxu0
        %v1839 = vpop.f32.mrb[0].mxu0
        %v1840 = vadd.f32 0.0, %v1839
        %v1841 = vpop.f32.mrb[0].mxu0
        %1842 = vmatprep.mubr.bf16.mxu0 0
        %1843 = vmatmul.mubr.bf16.gmra.mrb[0].mxu0 %v1125
        %v1844 = vpop.f32.mrb[0].mxu0
        %v1845 = vadd.f32 0.0, %v1844
        %v1846 = vpop.f32.mrb[0].mxu0
        %v1847 = vpop.f32.mrb[0].mxu0
        %v1848 = vadd.f32 0.0, %v1847
        %v1849 = vpop.f32.mrb[0].mxu0
        %1850 = vmatprep.mubr.bf16.mxu0 0
        %1851 = vmatmul.mubr.bf16.gmra.mrb[0].mxu0 %v1128
        %v1852 = vpop.f32.mrb[0].mxu0
        %v1853 = vadd.f32 0.0, %v1852
        %v1854 = vpop.f32.mrb[0].mxu0
        %v1855 = vpop.f32.mrb[0].mxu0
        %v1856 = vadd.f32 0.0, %v1855
        %v1857 = vpop.f32.mrb[0].mxu0
        %1858 = vmatprep.mubr.bf16.mxu0 0
        %1859 = vmatmul.mubr.bf16.gmra.mrb[0].mxu0 %v1131
        %v1860 = vpop.f32.mrb[0].mxu0
        %v1861 = vadd.f32 0.0, %v1860
        %v1862 = vpop.f32.mrb[0].mxu0
        %v1863 = vpop.f32.mrb[0].mxu0
        %v1864 = vadd.f32 0.0, %v1863
        %v1865 = vpop.f32.mrb[0].mxu0
        %1866 = vmatprep.mubr.bf16.mxu0 0
        %1867 = vmatmul.mubr.bf16.gmra.mrb[0].mxu0 %v1134
        %v1868 = vpop.f32.mrb[0].mxu0
        %v1869 = vadd.f32 0.0, %v1868
        %v1870 = vpop.f32.mrb[0].mxu0
        %v1871 = vpop.f32.mrb[0].mxu0
        %v1872 = vadd.f32 0.0, %v1871
        %v1873 = vpop.f32.mrb[0].mxu0
        %1874 = vmatprep.mubr.bf16.mxu0 0
        %1875 = vmatmul.mubr.bf16.gmra.mrb[0].mxu0 %v1137
        %v1876 = vpop.f32.mrb[0].mxu0
        %v1877 = vadd.f32 0.0, %v1876
        %v1878 = vpop.f32.mrb[0].mxu0
        %v1879 = vpop.f32.mrb[0].mxu0
        %v1880 = vadd.f32 0.0, %v1879
        %v1881 = vpop.f32.mrb[0].mxu0
        %1882 = vmatprep.mubr.bf16.mxu0 0
        %1883 = vmatmul.mubr.bf16.gmra.mrb[0].mxu0 %v1140
        %v1884 = vpop.f32.mrb[0].mxu0
        %v1885 = vadd.f32 0.0, %v1884
        %v1886 = vpop.f32.mrb[0].mxu0
        %v1887 = vpop.f32.mrb[0].mxu0
        %v1888 = vadd.f32 0.0, %v1887
        %v1889 = vpop.f32.mrb[0].mxu0
        %1890 = vmatprep.mubr.bf16.mxu0 0
        %1891 = vmatmul.mubr.bf16.gmra.mrb[0].mxu0 %v1143
        %v1892 = vpop.f32.mrb[0].mxu0
        %v1893 = vadd.f32 0.0, %v1892
        %v1894 = vpop.f32.mrb[0].mxu0
        %v1895 = vpop.f32.mrb[0].mxu0
        %v1896 = vadd.f32 0.0, %v1895
        %v1897 = vpop.f32.mrb[0].mxu0
        %1898 = vmatprep.mubr.bf16.mxu0 0
        %1899 = vmatmul.mubr.bf16.gmra.mrb[0].mxu0 %v1146
        %v1900 = vpop.f32.mrb[0].mxu0
        %v1901 = vadd.f32 0.0, %v1900
        %v1902 = vpop.f32.mrb[0].mxu0
        %v1903 = vpop.f32.mrb[0].mxu0
        %v1904 = vadd.f32 0.0, %v1903
        %v1905 = vpop.f32.mrb[0].mxu0
        %1906 = vmatprep.mubr.bf16.mxu0 0
        %1907 = vmatmul.mubr.bf16.gmra.mrb[0].mxu0 %v1149
        %v1908 = vpop.f32.mrb[0].mxu0
        %v1909 = vadd.f32 0.0, %v1908
        %v1910 = vpop.f32.mrb[0].mxu0
        %v1911 = vpop.f32.mrb[0].mxu0
        %v1912 = vadd.f32 0.0, %v1911
        %v1913 = vpop.f32.mrb[0].mxu0
        %1914 = vmatprep.mubr.bf16.mxu0 0
        %1915 = vmatmul.mubr.bf16.gmra.mrb[0].mxu0 %v1152
        %v1916 = vpop.f32.mrb[0].mxu0
        %v1917 = vadd.f32 0.0, %v1916
        %v1918 = vpop.f32.mrb[0].mxu0
        %v1919 = vpop.f32.mrb[0].mxu0
        %v1920 = vadd.f32 0.0, %v1919
        %v1921 = vpop.f32.mrb[0].mxu0
        %1922 = vmatprep.mubr.bf16.mxu0 0
        %1923 = vmatmul.mubr.bf16.gmra.mrb[0].mxu0 %v1155
        %v1924 = vpop.f32.mrb[0].mxu0
        %v1925 = vadd.f32 0.0, %v1924
        %v1926 = vpop.f32.mrb[0].mxu0
        %v1927 = vpop.f32.mrb[0].mxu0
        %v1928 = vadd.f32 0.0, %v1927
        %v1929 = vpop.f32.mrb[0].mxu0
        %1930 = vmatprep.mubr.bf16.mxu0 0
        %1931 = vmatmul.mubr.bf16.gmra.mrb[0].mxu0 %v1158
        %v1932 = vpop.f32.mrb[0].mxu0
        %v1933 = vadd.f32 0.0, %v1932
        %v1934 = vpop.f32.mrb[0].mxu0
        %v1935 = vpop.f32.mrb[0].mxu0
        %v1936 = vadd.f32 0.0, %v1935
        %v1937 = vpop.f32.mrb[0].mxu0
        %1938 = vmatprep.mubr.bf16.mxu0 0
        %1939 = vmatmul.mubr.bf16.gmra.mrb[0].mxu0 %v1781
        %v1940 = vpop.f32.mrb[0].mxu0
        %v1941 = vadd.f32 0.0, %v1940
        %v1942 = vpop.f32.mrb[0].mxu0
        %v1943 = vpop.f32.mrb[0].mxu0
        %v1944 = vadd.f32 0.0, %v1943
        %v1945 = vpop.f32.mrb[0].mxu0
        %1946 = vdwg.mxu0
        %v1947 = vadd.f32 %v1738, %v1821
        %v1948 = vadd.f32 %v1739, %v1824
        %v1949 = vadd.f32 %v1740, %v1829
        %v1950 = vadd.f32 %v1741, %v1832
        %v1951 = vadd.f32 %v1742, %v1837
        %v1952 = vadd.f32 %v1743, %v1840
        %v1953 = vadd.f32 %v1744, %v1845
        %v1954 = vadd.f32 %v1745, %v1848
        %v1955 = vadd.f32 %v1746, %v1853
        %v1956 = vadd.f32 %v1747, %v1856
        %v1957 = vadd.f32 %v1748, %v1861
        %v1958 = vadd.f32 %v1749, %v1864
        %v1959 = vadd.f32 %v1750, %v1869
        %v1960 = vadd.f32 %v1751, %v1872
        %v1961 = vadd.f32 %v1752, %v1877
        %v1962 = vadd.f32 %v1753, %v1880
        %v1963 = vadd.f32 %v1754, %v1885
        %v1964 = vadd.f32 %v1755, %v1888
        %v1965 = vadd.f32 %v1756, %v1893
        %v1966 = vadd.f32 %v1757, %v1896
        %v1967 = vadd.f32 %v1758, %v1901
        %v1968 = vadd.f32 %v1759, %v1904
        %v1969 = vadd.f32 %v1760, %v1909
        %v1970 = vadd.f32 %v1761, %v1912
        %v1971 = vadd.f32 %v1762, %v1917
        %v1972 = vadd.f32 %v1763, %v1920
        %v1973 = vadd.f32 %v1764, %v1925
        %v1974 = vadd.f32 %v1765, %v1928
        %v1975 = vadd.f32 %v1766, %v1933
        %v1976 = vadd.f32 %v1767, %v1936
        %v1977 = vadd.f32 %v1768, %v1941
        %v1978 = vadd.f32 %v1769, %v1944
        %v1979 = vpack.c.bf16 %v357, %v356
        %s1980 = scalar_lea.vmem %s1, 12
        %v1981 = vld [vmem:[%s1980] sm:$0x3]
        %v1983 = vsel %vm555, %v1979, 0
        %v1986 = vsel %vm604, %v1981, 0
        %1988 = vmatprep.subr.bf16.mxu0 0
        %1989 = vmatpush1.bf16.msra.mxu0 %v1986
        %1990 = vmatprep.subr.bf16.mxu0 0
        %1991 = vmatpush1.bf16.msra.mxu0 0
        %1992 = vmatprep.subr.bf16.mxu0 0
        %1993 = vmatpush1.bf16.msra.mxu0 0
        %1994 = vmatprep.subr.bf16.mxu0 0
        %1995 = vmatpush1.bf16.msra.mxu0 0
        %1996 = vmatprep.subr.bf16.mxu0 0
        %1997 = vmatpush1.bf16.msra.mxu0 0
        %1998 = vmatprep.subr.bf16.mxu0 0
        %1999 = vmatpush1.bf16.msra.mxu0 0
        %2000 = vmatprep.subr.bf16.mxu0 0
        %2001 = vmatpush1.bf16.msra.mxu0 0
        %2002 = vmatprep.subr.bf16.mxu0 0
        %2003 = vmatpush1.bf16.msra.mxu0 0
        %2004 = vmatprep.subr.bf16.mxu0 0
        %2005 = vmatpush1.bf16.msra.mxu0 0
        %2006 = vmatprep.subr.bf16.mxu0 0
        %2007 = vmatpush1.bf16.msra.mxu0 0
        %2008 = vmatprep.subr.bf16.mxu0 0
        %2009 = vmatpush1.bf16.msra.mxu0 0
        %2010 = vmatprep.subr.bf16.mxu0 0
        %2011 = vmatpush1.bf16.msra.mxu0 0
        %2012 = vmatprep.subr.bf16.mxu0 0
        %2013 = vmatpush1.bf16.msra.mxu0 0
        %2014 = vmatprep.subr.bf16.mxu0 0
        %2015 = vmatpush1.bf16.msra.mxu0 0
        %2016 = vmatprep.subr.bf16.mxu0 0
        %2017 = vmatpush1.bf16.msra.mxu0 0
        %2018 = vmatprep.subr.bf16.mxu0 0
        %2019 = vmatpush1.bf16.msra.mxu0 0
        %2020 = vmatprep.mubr.bf16.mxu0 0
        %2021 = vmatmul.mubr.bf16.gmra.mrb[0].mxu0 %v776
        %v2022 = vpop.f32.mrb[0].mxu0
        %v2023 = vadd.f32 0.0, %v2022
        %v2024 = vpop.f32.mrb[0].mxu0
        %v2025 = vpop.f32.mrb[0].mxu0
        %v2026 = vadd.f32 0.0, %v2025
        %v2027 = vpop.f32.mrb[0].mxu0
        %2028 = vmatprep.mubr.bf16.mxu0 0
        %2029 = vmatmul.mubr.bf16.gmra.mrb[0].mxu0 %v779
        %v2030 = vpop.f32.mrb[0].mxu0
        %v2031 = vadd.f32 0.0, %v2030
        %v2032 = vpop.f32.mrb[0].mxu0
        %v2033 = vpop.f32.mrb[0].mxu0
        %v2034 = vadd.f32 0.0, %v2033
        %v2035 = vpop.f32.mrb[0].mxu0
        %2036 = vmatprep.mubr.bf16.mxu0 0
        %2037 = vmatmul.mubr.bf16.gmra.mrb[0].mxu0 %v782
        %v2038 = vpop.f32.mrb[0].mxu0
        %v2039 = vadd.f32 0.0, %v2038
        %v2040 = vpop.f32.mrb[0].mxu0
        %v2041 = vpop.f32.mrb[0].mxu0
        %v2042 = vadd.f32 0.0, %v2041
        %v2043 = vpop.f32.mrb[0].mxu0
        %2044 = vmatprep.mubr.bf16.mxu0 0
        %2045 = vmatmul.mubr.bf16.gmra.mrb[0].mxu0 %v785
        %v2046 = vpop.f32.mrb[0].mxu0
        %v2047 = vadd.f32 0.0, %v2046
        %v2048 = vpop.f32.mrb[0].mxu0
        %v2049 = vpop.f32.mrb[0].mxu0
        %v2050 = vadd.f32 0.0, %v2049
        %v2051 = vpop.f32.mrb[0].mxu0
        %2052 = vmatprep.mubr.bf16.mxu0 0
        %2053 = vmatmul.mubr.bf16.gmra.mrb[0].mxu0 %v788
        %v2054 = vpop.f32.mrb[0].mxu0
        %v2055 = vadd.f32 0.0, %v2054
        %v2056 = vpop.f32.mrb[0].mxu0
        %v2057 = vpop.f32.mrb[0].mxu0
        %v2058 = vadd.f32 0.0, %v2057
        %v2059 = vpop.f32.mrb[0].mxu0
        %2060 = vmatprep.mubr.bf16.mxu0 0
        %2061 = vmatmul.mubr.bf16.gmra.mrb[0].mxu0 %v791
        %v2062 = vpop.f32.mrb[0].mxu0
        %v2063 = vadd.f32 0.0, %v2062
        %v2064 = vpop.f32.mrb[0].mxu0
        %v2065 = vpop.f32.mrb[0].mxu0
        %v2066 = vadd.f32 0.0, %v2065
        %v2067 = vpop.f32.mrb[0].mxu0
        %2068 = vmatprep.mubr.bf16.mxu0 0
        %2069 = vmatmul.mubr.bf16.gmra.mrb[0].mxu0 %v794
        %v2070 = vpop.f32.mrb[0].mxu0
        %v2071 = vadd.f32 0.0, %v2070
        %v2072 = vpop.f32.mrb[0].mxu0
        %v2073 = vpop.f32.mrb[0].mxu0
        %v2074 = vadd.f32 0.0, %v2073
        %v2075 = vpop.f32.mrb[0].mxu0
        %2076 = vmatprep.mubr.bf16.mxu0 0
        %2077 = vmatmul.mubr.bf16.gmra.mrb[0].mxu0 %v797
        %v2078 = vpop.f32.mrb[0].mxu0
        %v2079 = vadd.f32 0.0, %v2078
        %v2080 = vpop.f32.mrb[0].mxu0
        %v2081 = vpop.f32.mrb[0].mxu0
        %v2082 = vadd.f32 0.0, %v2081
        %v2083 = vpop.f32.mrb[0].mxu0
        %2084 = vmatprep.mubr.bf16.mxu0 0
        %2085 = vmatmul.mubr.bf16.gmra.mrb[0].mxu0 %v800
        %v2086 = vpop.f32.mrb[0].mxu0
        %v2087 = vadd.f32 0.0, %v2086
        %v2088 = vpop.f32.mrb[0].mxu0
        %v2089 = vpop.f32.mrb[0].mxu0
        %v2090 = vadd.f32 0.0, %v2089
        %v2091 = vpop.f32.mrb[0].mxu0
        %2092 = vmatprep.mubr.bf16.mxu0 0
        %2093 = vmatmul.mubr.bf16.gmra.mrb[0].mxu0 %v803
        %v2094 = vpop.f32.mrb[0].mxu0
        %v2095 = vadd.f32 0.0, %v2094
        %v2096 = vpop.f32.mrb[0].mxu0
        %v2097 = vpop.f32.mrb[0].mxu0
        %v2098 = vadd.f32 0.0, %v2097
        %v2099 = vpop.f32.mrb[0].mxu0
        %2100 = vmatprep.mubr.bf16.mxu0 0
        %2101 = vmatmul.mubr.bf16.gmra.mrb[0].mxu0 %v806
        %v2102 = vpop.f32.mrb[0].mxu0
        %v2103 = vadd.f32 0.0, %v2102
        %v2104 = vpop.f32.mrb[0].mxu0
        %v2105 = vpop.f32.mrb[0].mxu0
        %v2106 = vadd.f32 0.0, %v2105
        %v2107 = vpop.f32.mrb[0].mxu0
        %2108 = vmatprep.mubr.bf16.mxu0 0
        %2109 = vmatmul.mubr.bf16.gmra.mrb[0].mxu0 %v809
        %v2110 = vpop.f32.mrb[0].mxu0
        %v2111 = vadd.f32 0.0, %v2110
        %v2112 = vpop.f32.mrb[0].mxu0
        %v2113 = vpop.f32.mrb[0].mxu0
        %v2114 = vadd.f32 0.0, %v2113
        %v2115 = vpop.f32.mrb[0].mxu0
        %2116 = vmatprep.mubr.bf16.mxu0 0
        %2117 = vmatmul.mubr.bf16.gmra.mrb[0].mxu0 %v812
        %v2118 = vpop.f32.mrb[0].mxu0
        %v2119 = vadd.f32 0.0, %v2118
        %v2120 = vpop.f32.mrb[0].mxu0
        %v2121 = vpop.f32.mrb[0].mxu0
        %v2122 = vadd.f32 0.0, %v2121
        %v2123 = vpop.f32.mrb[0].mxu0
        %2124 = vmatprep.mubr.bf16.mxu0 0
        %2125 = vmatmul.mubr.bf16.gmra.mrb[0].mxu0 %v815
        %v2126 = vpop.f32.mrb[0].mxu0
        %v2127 = vadd.f32 0.0, %v2126
        %v2128 = vpop.f32.mrb[0].mxu0
        %v2129 = vpop.f32.mrb[0].mxu0
        %v2130 = vadd.f32 0.0, %v2129
        %v2131 = vpop.f32.mrb[0].mxu0
        %2132 = vmatprep.mubr.bf16.mxu0 0
        %2133 = vmatmul.mubr.bf16.gmra.mrb[0].mxu0 %v1360
        %v2134 = vpop.f32.mrb[0].mxu0
        %v2135 = vadd.f32 0.0, %v2134
        %v2136 = vpop.f32.mrb[0].mxu0
        %v2137 = vpop.f32.mrb[0].mxu0
        %v2138 = vadd.f32 0.0, %v2137
        %v2139 = vpop.f32.mrb[0].mxu0
        %2140 = vmatprep.mubr.bf16.mxu0 0
        %2141 = vmatmul.mubr.bf16.gmra.mrb[0].mxu0 %v1983
        %v2142 = vpop.f32.mrb[0].mxu0
        %v2143 = vadd.f32 0.0, %v2142
        %v2144 = vpop.f32.mrb[0].mxu0
        %v2145 = vpop.f32.mrb[0].mxu0
        %v2146 = vadd.f32 0.0, %v2145
        %v2147 = vpop.f32.mrb[0].mxu0
        %2148 = vdwg.mxu0
        %v2149 = vadd.f32 %v1947, %v2023
        %v2150 = vadd.f32 %v1948, %v2026
        %v2151 = vadd.f32 %v1949, %v2031
        %v2152 = vadd.f32 %v1950, %v2034
        %v2153 = vadd.f32 %v1951, %v2039
        %v2154 = vadd.f32 %v1952, %v2042
        %v2155 = vadd.f32 %v1953, %v2047
        %v2156 = vadd.f32 %v1954, %v2050
        %v2157 = vadd.f32 %v1955, %v2055
        %v2158 = vadd.f32 %v1956, %v2058
        %v2159 = vadd.f32 %v1957, %v2063
        %v2160 = vadd.f32 %v1958, %v2066
        %v2161 = vadd.f32 %v1959, %v2071
        %v2162 = vadd.f32 %v1960, %v2074
        %v2163 = vadd.f32 %v1961, %v2079
        %v2164 = vadd.f32 %v1962, %v2082
        %v2165 = vadd.f32 %v1963, %v2087
        %v2166 = vadd.f32 %v1964, %v2090
        %v2167 = vadd.f32 %v1965, %v2095
        %v2168 = vadd.f32 %v1966, %v2098
        %v2169 = vadd.f32 %v1967, %v2103
        %v2170 = vadd.f32 %v1968, %v2106
        %v2171 = vadd.f32 %v1969, %v2111
        %v2172 = vadd.f32 %v1970, %v2114
        %v2173 = vadd.f32 %v1971, %v2119
        %v2174 = vadd.f32 %v1972, %v2122
        %v2175 = vadd.f32 %v1973, %v2127
        %v2176 = vadd.f32 %v1974, %v2130
        %v2177 = vadd.f32 %v1975, %v2135
        %v2178 = vadd.f32 %v1976, %v2138
        %v2179 = vadd.f32 %v1977, %v2143
        %v2180 = vadd.f32 %v1978, %v2146
        %v2184 = vrot.slane %v356, 1
        %v2185 = vrot.slane %v357, 1
        %v2186 = vsel %vm424, %v2184, %v2185
        %v2187 = vrot.slane %v358, 1
        %v2188 = vsel %vm424, %v2185, %v2187
        %v2191 = vpack.c.bf16 %v2188, %v2186
        %s2192 = scalar_lea.vmem %s1, 14
        %v2193 = vld [vmem:[%s2192] sm:$0x3]
        %v2195 = vsel %vm555, %v2191, 0
        %v2198 = vsel %vm604, %v2193, 0
        %2200 = vmatprep.subr.bf16.mxu0 0
        %2201 = vmatpush1.bf16.msra.mxu0 %v2198
        %2202 = vmatprep.subr.bf16.mxu0 0
        %2203 = vmatpush1.bf16.msra.mxu0 0
        %2204 = vmatprep.subr.bf16.mxu0 0
        %2205 = vmatpush1.bf16.msra.mxu0 0
        %2206 = vmatprep.subr.bf16.mxu0 0
        %2207 = vmatpush1.bf16.msra.mxu0 0
        %2208 = vmatprep.subr.bf16.mxu0 0
        %2209 = vmatpush1.bf16.msra.mxu0 0
        %2210 = vmatprep.subr.bf16.mxu0 0
        %2211 = vmatpush1.bf16.msra.mxu0 0
        %2212 = vmatprep.subr.bf16.mxu0 0
        %2213 = vmatpush1.bf16.msra.mxu0 0
        %2214 = vmatprep.subr.bf16.mxu0 0
        %2215 = vmatpush1.bf16.msra.mxu0 0
        %2216 = vmatprep.subr.bf16.mxu0 0
        %2217 = vmatpush1.bf16.msra.mxu0 0
        %2218 = vmatprep.subr.bf16.mxu0 0
        %2219 = vmatpush1.bf16.msra.mxu0 0
        %2220 = vmatprep.subr.bf16.mxu0 0
        %2221 = vmatpush1.bf16.msra.mxu0 0
        %2222 = vmatprep.subr.bf16.mxu0 0
        %2223 = vmatpush1.bf16.msra.mxu0 0
        %2224 = vmatprep.subr.bf16.mxu0 0
        %2225 = vmatpush1.bf16.msra.mxu0 0
        %2226 = vmatprep.subr.bf16.mxu0 0
        %2227 = vmatpush1.bf16.msra.mxu0 0
        %2228 = vmatprep.subr.bf16.mxu0 0
        %2229 = vmatpush1.bf16.msra.mxu0 0
        %2230 = vmatprep.subr.bf16.mxu0 0
        %2231 = vmatpush1.bf16.msra.mxu0 0
        %2232 = vmatprep.mubr.bf16.mxu0 0
        %2233 = vmatmul.mubr.bf16.gmra.mrb[0].mxu0 %v563
        %v2234 = vpop.f32.mrb[0].mxu0
        %v2235 = vadd.f32 0.0, %v2234
        %v2236 = vpop.f32.mrb[0].mxu0
        %v2237 = vpop.f32.mrb[0].mxu0
        %v2238 = vadd.f32 0.0, %v2237
        %v2239 = vpop.f32.mrb[0].mxu0
        %2240 = vmatprep.mubr.bf16.mxu0 0
        %2241 = vmatmul.mubr.bf16.gmra.mrb[0].mxu0 %v566
        %v2242 = vpop.f32.mrb[0].mxu0
        %v2243 = vadd.f32 0.0, %v2242
        %v2244 = vpop.f32.mrb[0].mxu0
        %v2245 = vpop.f32.mrb[0].mxu0
        %v2246 = vadd.f32 0.0, %v2245
        %v2247 = vpop.f32.mrb[0].mxu0
        %2248 = vmatprep.mubr.bf16.mxu0 0
        %2249 = vmatmul.mubr.bf16.gmra.mrb[0].mxu0 %v569
        %v2250 = vpop.f32.mrb[0].mxu0
        %v2251 = vadd.f32 0.0, %v2250
        %v2252 = vpop.f32.mrb[0].mxu0
        %v2253 = vpop.f32.mrb[0].mxu0
        %v2254 = vadd.f32 0.0, %v2253
        %v2255 = vpop.f32.mrb[0].mxu0
        %2256 = vmatprep.mubr.bf16.mxu0 0
        %2257 = vmatmul.mubr.bf16.gmra.mrb[0].mxu0 %v572
        %v2258 = vpop.f32.mrb[0].mxu0
        %v2259 = vadd.f32 0.0, %v2258
        %v2260 = vpop.f32.mrb[0].mxu0
        %v2261 = vpop.f32.mrb[0].mxu0
        %v2262 = vadd.f32 0.0, %v2261
        %v2263 = vpop.f32.mrb[0].mxu0
        %2264 = vmatprep.mubr.bf16.mxu0 0
        %2265 = vmatmul.mubr.bf16.gmra.mrb[0].mxu0 %v575
        %v2266 = vpop.f32.mrb[0].mxu0
        %v2267 = vadd.f32 0.0, %v2266
        %v2268 = vpop.f32.mrb[0].mxu0
        %v2269 = vpop.f32.mrb[0].mxu0
        %v2270 = vadd.f32 0.0, %v2269
        %v2271 = vpop.f32.mrb[0].mxu0
        %2272 = vmatprep.mubr.bf16.mxu0 0
        %2273 = vmatmul.mubr.bf16.gmra.mrb[0].mxu0 %v578
        %v2274 = vpop.f32.mrb[0].mxu0
        %v2275 = vadd.f32 0.0, %v2274
        %v2276 = vpop.f32.mrb[0].mxu0
        %v2277 = vpop.f32.mrb[0].mxu0
        %v2278 = vadd.f32 0.0, %v2277
        %v2279 = vpop.f32.mrb[0].mxu0
        %2280 = vmatprep.mubr.bf16.mxu0 0
        %2281 = vmatmul.mubr.bf16.gmra.mrb[0].mxu0 %v581
        %v2282 = vpop.f32.mrb[0].mxu0
        %v2283 = vadd.f32 0.0, %v2282
        %v2284 = vpop.f32.mrb[0].mxu0
        %v2285 = vpop.f32.mrb[0].mxu0
        %v2286 = vadd.f32 0.0, %v2285
        %v2287 = vpop.f32.mrb[0].mxu0
        %2288 = vmatprep.mubr.bf16.mxu0 0
        %2289 = vmatmul.mubr.bf16.gmra.mrb[0].mxu0 %v584
        %v2290 = vpop.f32.mrb[0].mxu0
        %v2291 = vadd.f32 0.0, %v2290
        %v2292 = vpop.f32.mrb[0].mxu0
        %v2293 = vpop.f32.mrb[0].mxu0
        %v2294 = vadd.f32 0.0, %v2293
        %v2295 = vpop.f32.mrb[0].mxu0
        %2296 = vmatprep.mubr.bf16.mxu0 0
        %2297 = vmatmul.mubr.bf16.gmra.mrb[0].mxu0 %v587
        %v2298 = vpop.f32.mrb[0].mxu0
        %v2299 = vadd.f32 0.0, %v2298
        %v2300 = vpop.f32.mrb[0].mxu0
        %v2301 = vpop.f32.mrb[0].mxu0
        %v2302 = vadd.f32 0.0, %v2301
        %v2303 = vpop.f32.mrb[0].mxu0
        %2304 = vmatprep.mubr.bf16.mxu0 0
        %2305 = vmatmul.mubr.bf16.gmra.mrb[0].mxu0 %v590
        %v2306 = vpop.f32.mrb[0].mxu0
        %v2307 = vadd.f32 0.0, %v2306
        %v2308 = vpop.f32.mrb[0].mxu0
        %v2309 = vpop.f32.mrb[0].mxu0
        %v2310 = vadd.f32 0.0, %v2309
        %v2311 = vpop.f32.mrb[0].mxu0
        %2312 = vmatprep.mubr.bf16.mxu0 0
        %2313 = vmatmul.mubr.bf16.gmra.mrb[0].mxu0 %v593
        %v2314 = vpop.f32.mrb[0].mxu0
        %v2315 = vadd.f32 0.0, %v2314
        %v2316 = vpop.f32.mrb[0].mxu0
        %v2317 = vpop.f32.mrb[0].mxu0
        %v2318 = vadd.f32 0.0, %v2317
        %v2319 = vpop.f32.mrb[0].mxu0
        %2320 = vmatprep.mubr.bf16.mxu0 0
        %2321 = vmatmul.mubr.bf16.gmra.mrb[0].mxu0 %v596
        %v2322 = vpop.f32.mrb[0].mxu0
        %v2323 = vadd.f32 0.0, %v2322
        %v2324 = vpop.f32.mrb[0].mxu0
        %v2325 = vpop.f32.mrb[0].mxu0
        %v2326 = vadd.f32 0.0, %v2325
        %v2327 = vpop.f32.mrb[0].mxu0
        %2328 = vmatprep.mubr.bf16.mxu0 0
        %2329 = vmatmul.mubr.bf16.gmra.mrb[0].mxu0 %v599
        %v2330 = vpop.f32.mrb[0].mxu0
        %v2331 = vadd.f32 0.0, %v2330
        %v2332 = vpop.f32.mrb[0].mxu0
        %v2333 = vpop.f32.mrb[0].mxu0
        %v2334 = vadd.f32 0.0, %v2333
        %v2335 = vpop.f32.mrb[0].mxu0
        %2336 = vmatprep.mubr.bf16.mxu0 0
        %2337 = vmatmul.mubr.bf16.gmra.mrb[0].mxu0 %v602
        %v2338 = vpop.f32.mrb[0].mxu0
        %v2339 = vadd.f32 0.0, %v2338
        %v2340 = vpop.f32.mrb[0].mxu0
        %v2341 = vpop.f32.mrb[0].mxu0
        %v2342 = vadd.f32 0.0, %v2341
        %v2343 = vpop.f32.mrb[0].mxu0
        %2344 = vmatprep.mubr.bf16.mxu0 0
        %2345 = vmatmul.mubr.bf16.gmra.mrb[0].mxu0 %v1572
        %v2346 = vpop.f32.mrb[0].mxu0
        %v2347 = vadd.f32 0.0, %v2346
        %v2348 = vpop.f32.mrb[0].mxu0
        %v2349 = vpop.f32.mrb[0].mxu0
        %v2350 = vadd.f32 0.0, %v2349
        %v2351 = vpop.f32.mrb[0].mxu0
        %2352 = vmatprep.mubr.bf16.mxu0 0
        %2353 = vmatmul.mubr.bf16.gmra.mrb[0].mxu0 %v2195
        %v2354 = vpop.f32.mrb[0].mxu0
        %v2355 = vadd.f32 0.0, %v2354
        %v2356 = vpop.f32.mrb[0].mxu0
        %v2357 = vpop.f32.mrb[0].mxu0
        %v2358 = vadd.f32 0.0, %v2357
        %v2359 = vpop.f32.mrb[0].mxu0
        %2360 = vdwg.mxu0
        %v2361 = vadd.f32 %v2149, %v2235
        %v2362 = vadd.f32 %v2150, %v2238
        %v2363 = vadd.f32 %v2151, %v2243
        %v2364 = vadd.f32 %v2152, %v2246
        %v2365 = vadd.f32 %v2153, %v2251
        %v2366 = vadd.f32 %v2154, %v2254
        %v2367 = vadd.f32 %v2155, %v2259
        %v2368 = vadd.f32 %v2156, %v2262
        %v2369 = vadd.f32 %v2157, %v2267
        %v2370 = vadd.f32 %v2158, %v2270
        %v2371 = vadd.f32 %v2159, %v2275
        %v2372 = vadd.f32 %v2160, %v2278
        %v2373 = vadd.f32 %v2161, %v2283
        %v2374 = vadd.f32 %v2162, %v2286
        %v2375 = vadd.f32 %v2163, %v2291
        %v2376 = vadd.f32 %v2164, %v2294
        %v2377 = vadd.f32 %v2165, %v2299
        %v2378 = vadd.f32 %v2166, %v2302
        %v2379 = vadd.f32 %v2167, %v2307
        %v2380 = vadd.f32 %v2168, %v2310
        %v2381 = vadd.f32 %v2169, %v2315
        %v2382 = vadd.f32 %v2170, %v2318
        %v2383 = vadd.f32 %v2171, %v2323
        %v2384 = vadd.f32 %v2172, %v2326
        %v2385 = vadd.f32 %v2173, %v2331
        %v2386 = vadd.f32 %v2174, %v2334
        %v2387 = vadd.f32 %v2175, %v2339
        %v2388 = vadd.f32 %v2176, %v2342
        %v2389 = vadd.f32 %v2177, %v2347
        %v2390 = vadd.f32 %v2178, %v2350
        %v2391 = vadd.f32 %v2179, %v2355
        %v2392 = vadd.f32 %v2180, %v2358
        %v2393 = vrot.slane %v356, 2
        %v2394 = vrot.slane %v357, 2
        %v2395 = vsel %vm981, %v2393, %v2394
        %v2396 = vrot.slane %v358, 2
        %v2397 = vsel %vm981, %v2394, %v2396
        %v2400 = vpack.c.bf16 %v2397, %v2395
        %s2401 = scalar_lea.vmem %s1, 16
        %v2402 = vld [vmem:[%s2401] sm:$0x3]
        %v2404 = vsel %vm555, %v2400, 0
        %v2407 = vsel %vm604, %v2402, 0
        %2409 = vmatprep.subr.bf16.mxu0 0
        %2410 = vmatpush1.bf16.msra.mxu0 %v2407
        %2411 = vmatprep.subr.bf16.mxu0 0
        %2412 = vmatpush1.bf16.msra.mxu0 0
        %2413 = vmatprep.subr.bf16.mxu0 0
        %2414 = vmatpush1.bf16.msra.mxu0 0
        %2415 = vmatprep.subr.bf16.mxu0 0
        %2416 = vmatpush1.bf16.msra.mxu0 0
        %2417 = vmatprep.subr.bf16.mxu0 0
        %2418 = vmatpush1.bf16.msra.mxu0 0
        %2419 = vmatprep.subr.bf16.mxu0 0
        %2420 = vmatpush1.bf16.msra.mxu0 0
        %2421 = vmatprep.subr.bf16.mxu0 0
        %2422 = vmatpush1.bf16.msra.mxu0 0
        %2423 = vmatprep.subr.bf16.mxu0 0
        %2424 = vmatpush1.bf16.msra.mxu0 0
        %2425 = vmatprep.subr.bf16.mxu0 0
        %2426 = vmatpush1.bf16.msra.mxu0 0
        %2427 = vmatprep.subr.bf16.mxu0 0
        %2428 = vmatpush1.bf16.msra.mxu0 0
        %2429 = vmatprep.subr.bf16.mxu0 0
        %2430 = vmatpush1.bf16.msra.mxu0 0
        %2431 = vmatprep.subr.bf16.mxu0 0
        %2432 = vmatpush1.bf16.msra.mxu0 0
        %2433 = vmatprep.subr.bf16.mxu0 0
        %2434 = vmatpush1.bf16.msra.mxu0 0
        %2435 = vmatprep.subr.bf16.mxu0 0
        %2436 = vmatpush1.bf16.msra.mxu0 0
        %2437 = vmatprep.subr.bf16.mxu0 0
        %2438 = vmatpush1.bf16.msra.mxu0 0
        %2439 = vmatprep.subr.bf16.mxu0 0
        %2440 = vmatpush1.bf16.msra.mxu0 0
        %2441 = vmatprep.mubr.bf16.mxu0 0
        %2442 = vmatmul.mubr.bf16.gmra.mrb[0].mxu0 %v1119
        %v2443 = vpop.f32.mrb[0].mxu0
        %v2444 = vadd.f32 0.0, %v2443
        %v2445 = vpop.f32.mrb[0].mxu0
        %v2446 = vpop.f32.mrb[0].mxu0
        %v2447 = vadd.f32 0.0, %v2446
        %v2448 = vpop.f32.mrb[0].mxu0
        %2449 = vmatprep.mubr.bf16.mxu0 0
        %2450 = vmatmul.mubr.bf16.gmra.mrb[0].mxu0 %v1122
        %v2451 = vpop.f32.mrb[0].mxu0
        %v2452 = vadd.f32 0.0, %v2451
        %v2453 = vpop.f32.mrb[0].mxu0
        %v2454 = vpop.f32.mrb[0].mxu0
        %v2455 = vadd.f32 0.0, %v2454
        %v2456 = vpop.f32.mrb[0].mxu0
        %2457 = vmatprep.mubr.bf16.mxu0 0
        %2458 = vmatmul.mubr.bf16.gmra.mrb[0].mxu0 %v1125
        %v2459 = vpop.f32.mrb[0].mxu0
        %v2460 = vadd.f32 0.0, %v2459
        %v2461 = vpop.f32.mrb[0].mxu0
        %v2462 = vpop.f32.mrb[0].mxu0
        %v2463 = vadd.f32 0.0, %v2462
        %v2464 = vpop.f32.mrb[0].mxu0
        %2465 = vmatprep.mubr.bf16.mxu0 0
        %2466 = vmatmul.mubr.bf16.gmra.mrb[0].mxu0 %v1128
        %v2467 = vpop.f32.mrb[0].mxu0
        %v2468 = vadd.f32 0.0, %v2467
        %v2469 = vpop.f32.mrb[0].mxu0
        %v2470 = vpop.f32.mrb[0].mxu0
        %v2471 = vadd.f32 0.0, %v2470
        %v2472 = vpop.f32.mrb[0].mxu0
        %2473 = vmatprep.mubr.bf16.mxu0 0
        %2474 = vmatmul.mubr.bf16.gmra.mrb[0].mxu0 %v1131
        %v2475 = vpop.f32.mrb[0].mxu0
        %v2476 = vadd.f32 0.0, %v2475
        %v2477 = vpop.f32.mrb[0].mxu0
        %v2478 = vpop.f32.mrb[0].mxu0
        %v2479 = vadd.f32 0.0, %v2478
        %v2480 = vpop.f32.mrb[0].mxu0
        %2481 = vmatprep.mubr.bf16.mxu0 0
        %2482 = vmatmul.mubr.bf16.gmra.mrb[0].mxu0 %v1134
        %v2483 = vpop.f32.mrb[0].mxu0
        %v2484 = vadd.f32 0.0, %v2483
        %v2485 = vpop.f32.mrb[0].mxu0
        %v2486 = vpop.f32.mrb[0].mxu0
        %v2487 = vadd.f32 0.0, %v2486
        %v2488 = vpop.f32.mrb[0].mxu0
        %2489 = vmatprep.mubr.bf16.mxu0 0
        %2490 = vmatmul.mubr.bf16.gmra.mrb[0].mxu0 %v1137
        %v2491 = vpop.f32.mrb[0].mxu0
        %v2492 = vadd.f32 0.0, %v2491
        %v2493 = vpop.f32.mrb[0].mxu0
        %v2494 = vpop.f32.mrb[0].mxu0
        %v2495 = vadd.f32 0.0, %v2494
        %v2496 = vpop.f32.mrb[0].mxu0
        %2497 = vmatprep.mubr.bf16.mxu0 0
        %2498 = vmatmul.mubr.bf16.gmra.mrb[0].mxu0 %v1140
        %v2499 = vpop.f32.mrb[0].mxu0
        %v2500 = vadd.f32 0.0, %v2499
        %v2501 = vpop.f32.mrb[0].mxu0
        %v2502 = vpop.f32.mrb[0].mxu0
        %v2503 = vadd.f32 0.0, %v2502
        %v2504 = vpop.f32.mrb[0].mxu0
        %2505 = vmatprep.mubr.bf16.mxu0 0
        %2506 = vmatmul.mubr.bf16.gmra.mrb[0].mxu0 %v1143
        %v2507 = vpop.f32.mrb[0].mxu0
        %v2508 = vadd.f32 0.0, %v2507
        %v2509 = vpop.f32.mrb[0].mxu0
        %v2510 = vpop.f32.mrb[0].mxu0
        %v2511 = vadd.f32 0.0, %v2510
        %v2512 = vpop.f32.mrb[0].mxu0
        %2513 = vmatprep.mubr.bf16.mxu0 0
        %2514 = vmatmul.mubr.bf16.gmra.mrb[0].mxu0 %v1146
        %v2515 = vpop.f32.mrb[0].mxu0
        %v2516 = vadd.f32 0.0, %v2515
        %v2517 = vpop.f32.mrb[0].mxu0
        %v2518 = vpop.f32.mrb[0].mxu0
        %v2519 = vadd.f32 0.0, %v2518
        %v2520 = vpop.f32.mrb[0].mxu0
        %2521 = vmatprep.mubr.bf16.mxu0 0
        %2522 = vmatmul.mubr.bf16.gmra.mrb[0].mxu0 %v1149
        %v2523 = vpop.f32.mrb[0].mxu0
        %v2524 = vadd.f32 0.0, %v2523
        %v2525 = vpop.f32.mrb[0].mxu0
        %v2526 = vpop.f32.mrb[0].mxu0
        %v2527 = vadd.f32 0.0, %v2526
        %v2528 = vpop.f32.mrb[0].mxu0
        %2529 = vmatprep.mubr.bf16.mxu0 0
        %2530 = vmatmul.mubr.bf16.gmra.mrb[0].mxu0 %v1152
        %v2531 = vpop.f32.mrb[0].mxu0
        %v2532 = vadd.f32 0.0, %v2531
        %v2533 = vpop.f32.mrb[0].mxu0
        %v2534 = vpop.f32.mrb[0].mxu0
        %v2535 = vadd.f32 0.0, %v2534
        %v2536 = vpop.f32.mrb[0].mxu0
        %2537 = vmatprep.mubr.bf16.mxu0 0
        %2538 = vmatmul.mubr.bf16.gmra.mrb[0].mxu0 %v1155
        %v2539 = vpop.f32.mrb[0].mxu0
        %v2540 = vadd.f32 0.0, %v2539
        %v2541 = vpop.f32.mrb[0].mxu0
        %v2542 = vpop.f32.mrb[0].mxu0
        %v2543 = vadd.f32 0.0, %v2542
        %v2544 = vpop.f32.mrb[0].mxu0
        %2545 = vmatprep.mubr.bf16.mxu0 0
        %2546 = vmatmul.mubr.bf16.gmra.mrb[0].mxu0 %v1158
        %v2547 = vpop.f32.mrb[0].mxu0
        %v2548 = vadd.f32 0.0, %v2547
        %v2549 = vpop.f32.mrb[0].mxu0
        %v2550 = vpop.f32.mrb[0].mxu0
        %v2551 = vadd.f32 0.0, %v2550
        %v2552 = vpop.f32.mrb[0].mxu0
        %2553 = vmatprep.mubr.bf16.mxu0 0
        %2554 = vmatmul.mubr.bf16.gmra.mrb[0].mxu0 %v1781
        %v2555 = vpop.f32.mrb[0].mxu0
        %v2556 = vadd.f32 0.0, %v2555
        %v2557 = vpop.f32.mrb[0].mxu0
        %v2558 = vpop.f32.mrb[0].mxu0
        %v2559 = vadd.f32 0.0, %v2558
        %v2560 = vpop.f32.mrb[0].mxu0
        %2561 = vmatprep.mubr.bf16.mxu0 0
        %2562 = vmatmul.mubr.bf16.gmra.mrb[0].mxu0 %v2404
        %v2563 = vpop.f32.mrb[0].mxu0
        %v2564 = vadd.f32 0.0, %v2563
        %v2565 = vpop.f32.mrb[0].mxu0
        %v2566 = vpop.f32.mrb[0].mxu0
        %v2567 = vadd.f32 0.0, %v2566
        %v2568 = vpop.f32.mrb[0].mxu0
        %2569 = vdwg.mxu0
        %v2570 = vadd.f32 %v2361, %v2444
        %v2571 = vadd.f32 %v2362, %v2447
        %v2572 = vadd.f32 %v2363, %v2452
        %v2573 = vadd.f32 %v2364, %v2455
        %v2574 = vadd.f32 %v2365, %v2460
        %v2575 = vadd.f32 %v2366, %v2463
        %v2576 = vadd.f32 %v2367, %v2468
        %v2577 = vadd.f32 %v2368, %v2471
        %v2578 = vadd.f32 %v2369, %v2476
        %v2579 = vadd.f32 %v2370, %v2479
        %v2580 = vadd.f32 %v2371, %v2484
        %v2581 = vadd.f32 %v2372, %v2487
        %v2582 = vadd.f32 %v2373, %v2492
        %v2583 = vadd.f32 %v2374, %v2495
        %v2584 = vadd.f32 %v2375, %v2500
        %v2585 = vadd.f32 %v2376, %v2503
        %v2586 = vadd.f32 %v2377, %v2508
        %v2587 = vadd.f32 %v2378, %v2511
        %v2588 = vadd.f32 %v2379, %v2516
        %v2589 = vadd.f32 %v2380, %v2519
        %v2590 = vadd.f32 %v2381, %v2524
        %v2591 = vadd.f32 %v2382, %v2527
        %v2592 = vadd.f32 %v2383, %v2532
        %v2593 = vadd.f32 %v2384, %v2535
        %v2594 = vadd.f32 %v2385, %v2540
        %v2595 = vadd.f32 %v2386, %v2543
        %v2596 = vadd.f32 %v2387, %v2548
        %v2597 = vadd.f32 %v2388, %v2551
        %v2598 = vadd.f32 %v2389, %v2556
        %v2599 = vadd.f32 %v2390, %v2559
        %v2600 = vadd.f32 %v2391, %v2564
        %v2601 = vadd.f32 %v2392, %v2567
        %2602 = vst [vmem:[#allocation2] sm:$0xff] %v2570
        %2603 = vst [vmem:[#allocation2 + $0x8] sm:$0xff] %v2571
        %2604 = vst [vmem:[#allocation2 + $0x10] sm:$0xff] %v2572
        %2605 = vst [vmem:[#allocation2 + $0x18] sm:$0xff] %v2573
        %2606 = vst [vmem:[#allocation2 + $0x20] sm:$0xff] %v2574
        %2607 = vst [vmem:[#allocation2 + $0x28] sm:$0xff] %v2575
        %2608 = vst [vmem:[#allocation2 + $0x30] sm:$0xff] %v2576
        %2609 = vst [vmem:[#allocation2 + $0x38] sm:$0xff] %v2577
        %2610 = vst [vmem:[#allocation2 + $0x40] sm:$0xff] %v2578
        %2611 = vst [vmem:[#allocation2 + $0x48] sm:$0xff] %v2579
        %2612 = vst [vmem:[#allocation2 + $0x50] sm:$0xff] %v2580
        %2613 = vst [vmem:[#allocation2 + $0x58] sm:$0xff] %v2581
        %2614 = vst [vmem:[#allocation2 + $0x60] sm:$0xff] %v2582
        %2615 = vst [vmem:[#allocation2 + $0x68] sm:$0xff] %v2583
        %2616 = vst [vmem:[#allocation2 + $0x70] sm:$0xff] %v2584
        %2617 = vst [vmem:[#allocation2 + $0x78] sm:$0xff] %v2585
        %2618 = vst [vmem:[#allocation2 + $0x80] sm:$0xff] %v2586
        %2619 = vst [vmem:[#allocation2 + $0x88] sm:$0xff] %v2587
        %2620 = vst [vmem:[#allocation2 + $0x90] sm:$0xff] %v2588
        %2621 = vst [vmem:[#allocation2 + $0x98] sm:$0xff] %v2589
        %2622 = vst [vmem:[#allocation2 + $0xa0] sm:$0xff] %v2590
        %2623 = vst [vmem:[#allocation2 + $0xa8] sm:$0xff] %v2591
        %2624 = vst [vmem:[#allocation2 + $0xb0] sm:$0xff] %v2592
        %2625 = vst [vmem:[#allocation2 + $0xb8] sm:$0xff] %v2593
        %2626 = vst [vmem:[#allocation2 + $0xc0] sm:$0xff] %v2594
        %2627 = vst [vmem:[#allocation2 + $0xc8] sm:$0xff] %v2595
        %2628 = vst [vmem:[#allocation2 + $0xd0] sm:$0xff] %v2596
        %2629 = vst [vmem:[#allocation2 + $0xd8] sm:$0xff] %v2597
        %2630 = vst [vmem:[#allocation2 + $0xe0] sm:$0xff] %v2598
        %2631 = vst [vmem:[#allocation2 + $0xe8] sm:$0xff] %v2599
        %2632 = vst [vmem:[#allocation2 + $0xf0] sm:$0xff] %v2600
        %2633 = vst [vmem:[#allocation2 + $0xf8] sm:$0xff] %v2601
        %v2634 = vadd.f32 %v2570, %v2571
        %v2635 = vadd.f32 %v2634, %v2572
        %v2636 = vadd.f32 %v2635, %v2573
        %v2637 = vadd.f32 %v2636, %v2574
        %v2638 = vadd.f32 %v2637, %v2575
        %v2639 = vadd.f32 %v2638, %v2576
        %v2640 = vadd.f32 %v2639, %v2577
        %v2641 = vadd.f32 %v2640, %v2578
        %v2642 = vadd.f32 %v2641, %v2579
        %v2643 = vadd.f32 %v2642, %v2580
        %v2644 = vadd.f32 %v2643, %v2581
        %v2645 = vadd.f32 %v2644, %v2582
        %v2646 = vadd.f32 %v2645, %v2583
        %v2647 = vadd.f32 %v2646, %v2584
        %v2648 = vadd.f32 %v2647, %v2585
        %v2649 = vadd.f32 %v2648, %v2586
        %v2650 = vadd.f32 %v2649, %v2587
        %v2651 = vadd.f32 %v2650, %v2588
        %v2652 = vadd.f32 %v2651, %v2589
        %v2653 = vadd.f32 %v2652, %v2590
        %v2654 = vadd.f32 %v2653, %v2591
        %v2655 = vadd.f32 %v2654, %v2592
        %v2656 = vadd.f32 %v2655, %v2593
        %v2657 = vadd.f32 %v2656, %v2594
        %v2658 = vadd.f32 %v2657, %v2595
        %v2659 = vadd.f32 %v2658, %v2596
        %v2660 = vadd.f32 %v2659, %v2597
        %v2661 = vadd.f32 %v2660, %v2598
        %v2662 = vadd.f32 %v2661, %v2599
        %v2663 = vadd.f32 %v2662, %v2600
        %v2664 = vadd.f32 %v2663, %v2601
        %v2665 = vrot.slane %v2664, 4
        %v2666 = vadd.f32 %v2664, %v2665
        %v2667 = vrot.slane %v2666, 2
        %v2668 = vadd.f32 %v2666, %v2667
        %v2669 = vrot.slane %v2668, 1
        %v2670 = vadd.f32 %v2668, %v2669
        %v2671 = vmul.f32 %v2570, %v2570
        %v2672 = vmul.f32 %v2571, %v2571
        %v2673 = vmul.f32 %v2572, %v2572
        %v2674 = vmul.f32 %v2573, %v2573
        %v2675 = vmul.f32 %v2574, %v2574
        %v2676 = vmul.f32 %v2575, %v2575
        %v2677 = vmul.f32 %v2576, %v2576
        %v2678 = vmul.f32 %v2577, %v2577
        %v2679 = vmul.f32 %v2578, %v2578
        %v2680 = vmul.f32 %v2579, %v2579
        %v2681 = vmul.f32 %v2580, %v2580
        %v2682 = vmul.f32 %v2581, %v2581
        %v2683 = vmul.f32 %v2582, %v2582
        %v2684 = vmul.f32 %v2583, %v2583
        %v2685 = vmul.f32 %v2584, %v2584
        %v2686 = vmul.f32 %v2585, %v2585
        %v2687 = vmul.f32 %v2586, %v2586
        %v2688 = vmul.f32 %v2587, %v2587
        %v2689 = vmul.f32 %v2588, %v2588
        %v2690 = vmul.f32 %v2589, %v2589
        %v2691 = vmul.f32 %v2590, %v2590
        %v2692 = vmul.f32 %v2591, %v2591
        %v2693 = vmul.f32 %v2592, %v2592
        %v2694 = vmul.f32 %v2593, %v2593
        %v2695 = vmul.f32 %v2594, %v2594
        %v2696 = vmul.f32 %v2595, %v2595
        %v2697 = vmul.f32 %v2596, %v2596
        %v2698 = vmul.f32 %v2597, %v2597
        %v2699 = vmul.f32 %v2598, %v2598
        %v2700 = vmul.f32 %v2599, %v2599
        %v2701 = vmul.f32 %v2600, %v2600
        %v2702 = vmul.f32 %v2601, %v2601
        %v2703 = vadd.f32 %v2671, %v2672
        %v2704 = vadd.f32 %v2703, %v2673
        %v2705 = vadd.f32 %v2704, %v2674
        %v2706 = vadd.f32 %v2705, %v2675
        %v2707 = vadd.f32 %v2706, %v2676
        %v2708 = vadd.f32 %v2707, %v2677
        %v2709 = vadd.f32 %v2708, %v2678
        %v2710 = vadd.f32 %v2709, %v2679
        %v2711 = vadd.f32 %v2710, %v2680
        %v2712 = vadd.f32 %v2711, %v2681
        %v2713 = vadd.f32 %v2712, %v2682
        %v2714 = vadd.f32 %v2713, %v2683
        %v2715 = vadd.f32 %v2714, %v2684
        %v2716 = vadd.f32 %v2715, %v2685
        %v2717 = vadd.f32 %v2716, %v2686
        %v2718 = vadd.f32 %v2717, %v2687
        %v2719 = vadd.f32 %v2718, %v2688
        %v2720 = vadd.f32 %v2719, %v2689
        %v2721 = vadd.f32 %v2720, %v2690
        %v2722 = vadd.f32 %v2721, %v2691
        %v2723 = vadd.f32 %v2722, %v2692
        %v2724 = vadd.f32 %v2723, %v2693
        %v2725 = vadd.f32 %v2724, %v2694
        %v2726 = vadd.f32 %v2725, %v2695
        %v2727 = vadd.f32 %v2726, %v2696
        %v2728 = vadd.f32 %v2727, %v2697
        %v2729 = vadd.f32 %v2728, %v2698
        %v2730 = vadd.f32 %v2729, %v2699
        %v2731 = vadd.f32 %v2730, %v2700
        %v2732 = vadd.f32 %v2731, %v2701
        %v2733 = vadd.f32 %v2732, %v2702
        %v2734 = vrot.slane %v2733, 4
        %v2735 = vadd.f32 %v2733, %v2734
        %v2736 = vrot.slane %v2735, 2
        %v2737 = vadd.f32 %v2735, %v2736
        %v2738 = vrot.slane %v2737, 1
        %v2739 = vadd.f32 %v2737, %v2738
        %v2740 = vld [vmem:[%s4] sm:$0xff]
        %v2741 = vld [vmem:[%s4 + $0x8] sm:$0xff]
        %v2742 = vld [vmem:[%s4 + $0x10] sm:$0xff]
        %v2743 = vld [vmem:[%s4 + $0x18] sm:$0xff]
        %v2744 = vld [vmem:[%s4 + $0x20] sm:$0xff]
        %v2745 = vld [vmem:[%s4 + $0x28] sm:$0xff]
        %v2746 = vld [vmem:[%s4 + $0x30] sm:$0xff]
        %v2747 = vld [vmem:[%s4 + $0x38] sm:$0xff]
        %v2748 = vld [vmem:[%s4 + $0x40] sm:$0xff]
        %v2749 = vld [vmem:[%s4 + $0x48] sm:$0xff]
        %v2750 = vld [vmem:[%s4 + $0x50] sm:$0xff]
        %v2751 = vld [vmem:[%s4 + $0x58] sm:$0xff]
        %v2752 = vld [vmem:[%s4 + $0x60] sm:$0xff]
        %v2753 = vld [vmem:[%s4 + $0x68] sm:$0xff]
        %v2754 = vld [vmem:[%s4 + $0x70] sm:$0xff]
        %v2755 = vld [vmem:[%s4 + $0x78] sm:$0xff]
        %2756 = vmatprep.subr.mxu0 0.0
        %2757 = vmatpush1.msra.mxu0 %v2740
        %2758 = vmatprep.subr.mxu0 0.0
        %2759 = vmatpush1.msra.mxu0 %v2741
        %2760 = vmatprep.subr.mxu0 0.0
        %2761 = vmatpush1.msra.mxu0 %v2742
        %2762 = vmatprep.subr.mxu0 0.0
        %2763 = vmatpush1.msra.mxu0 %v2743
        %2764 = vmatprep.subr.mxu0 0.0
        %2765 = vmatpush1.msra.mxu0 %v2744
        %2766 = vmatprep.subr.mxu0 0.0
        %2767 = vmatpush1.msra.mxu0 %v2745
        %2768 = vmatprep.subr.mxu0 0.0
        %2769 = vmatpush1.msra.mxu0 %v2746
        %2770 = vmatprep.subr.mxu0 0.0
        %2771 = vmatpush1.msra.mxu0 %v2747
        %2772 = vmatprep.subr.mxu0 0.0
        %2773 = vmatpush1.msra.mxu0 %v2748
        %2774 = vmatprep.subr.mxu0 0.0
        %2775 = vmatpush1.msra.mxu0 %v2749
        %2776 = vmatprep.subr.mxu0 0.0
        %2777 = vmatpush1.msra.mxu0 %v2750
        %2778 = vmatprep.subr.mxu0 0.0
        %2779 = vmatpush1.msra.mxu0 %v2751
        %2780 = vmatprep.subr.mxu0 0.0
        %2781 = vmatpush1.msra.mxu0 %v2752
        %2782 = vmatprep.subr.mxu0 0.0
        %2783 = vmatpush1.msra.mxu0 %v2753
        %2784 = vmatprep.subr.mxu0 0.0
        %2785 = vmatpush1.msra.mxu0 %v2754
        %2786 = vmatprep.subr.mxu0 0.0
        %2787 = vmatpush1.msra.mxu0 %v2755
        %2788 = vmatprep.subr.mxu0 0.0
        %2789 = vmatpush1.msra.mxu0 0.0
        %2790 = vmatprep.subr.mxu0 0.0
        %2791 = vmatpush1.msra.mxu0 0.0
        %2792 = vmatprep.subr.mxu0 0.0
        %2793 = vmatpush1.msra.mxu0 0.0
        %2794 = vmatprep.subr.mxu0 0.0
        %2795 = vmatpush1.msra.mxu0 0.0
        %2796 = vmatprep.subr.mxu0 0.0
        %2797 = vmatpush1.msra.mxu0 0.0
        %2798 = vmatprep.subr.mxu0 0.0
        %2799 = vmatpush1.msra.mxu0 0.0
        %2800 = vmatprep.subr.mxu0 0.0
        %2801 = vmatpush1.msra.mxu0 0.0
        %2802 = vmatprep.subr.mxu0 0.0
        %2803 = vmatpush1.msra.mxu0 0.0
        %2804 = vmatprep.subr.mxu0 0.0
        %2805 = vmatpush1.msra.mxu0 0.0
        %2806 = vmatprep.subr.mxu0 0.0
        %2807 = vmatpush1.msra.mxu0 0.0
        %2808 = vmatprep.subr.mxu0 0.0
        %2809 = vmatpush1.msra.mxu0 0.0
        %2810 = vmatprep.subr.mxu0 0.0
        %2811 = vmatpush1.msra.mxu0 0.0
        %2812 = vmatprep.subr.mxu0 0.0
        %2813 = vmatpush1.msra.mxu0 0.0
        %2814 = vmatprep.subr.mxu0 0.0
        %2815 = vmatpush1.msra.mxu0 0.0
        %2816 = vmatprep.subr.mxu0 0.0
        %2817 = vmatpush1.msra.mxu0 0.0
        %2818 = vmatprep.subr.mxu0 0.0
        %2819 = vmatpush1.msra.mxu0 0.0
        %2820 = vmatprep.mubr.f32.mxu0 0.0
        %2821 = vmatmul.mubr.f32.gmra.mrb[0].mxu0 %v2670
        %v2822 = vpop.f32.mrb[0].mxu0
        %v2823 = vadd.f32 0.0, %v2822
        %v2824 = vpop.f32.mrb[0].mxu0
        %2825 = vdwg.mxu0
        %v2826 = vmul.f32 %v2823, 0.00390625
        %2827 = vmatprep.subr.mxu0 0.0
        %2828 = vmatpush1.msra.mxu0 %v2740
        %2829 = vmatprep.subr.mxu0 0.0
        %2830 = vmatpush1.msra.mxu0 %v2741
        %2831 = vmatprep.subr.mxu0 0.0
        %2832 = vmatpush1.msra.mxu0 %v2742
        %2833 = vmatprep.subr.mxu0 0.0
        %2834 = vmatpush1.msra.mxu0 %v2743
        %2835 = vmatprep.subr.mxu0 0.0
        %2836 = vmatpush1.msra.mxu0 %v2744
        %2837 = vmatprep.subr.mxu0 0.0
        %2838 = vmatpush1.msra.mxu0 %v2745
        %2839 = vmatprep.subr.mxu0 0.0
        %2840 = vmatpush1.msra.mxu0 %v2746
        %2841 = vmatprep.subr.mxu0 0.0
        %2842 = vmatpush1.msra.mxu0 %v2747
        %2843 = vmatprep.subr.mxu0 0.0
        %2844 = vmatpush1.msra.mxu0 %v2748
        %2845 = vmatprep.subr.mxu0 0.0
        %2846 = vmatpush1.msra.mxu0 %v2749
        %2847 = vmatprep.subr.mxu0 0.0
        %2848 = vmatpush1.msra.mxu0 %v2750
        %2849 = vmatprep.subr.mxu0 0.0
        %2850 = vmatpush1.msra.mxu0 %v2751
        %2851 = vmatprep.subr.mxu0 0.0
        %2852 = vmatpush1.msra.mxu0 %v2752
        %2853 = vmatprep.subr.mxu0 0.0
        %2854 = vmatpush1.msra.mxu0 %v2753
        %2855 = vmatprep.subr.mxu0 0.0
        %2856 = vmatpush1.msra.mxu0 %v2754
        %2857 = vmatprep.subr.mxu0 0.0
        %2858 = vmatpush1.msra.mxu0 %v2755
        %2859 = vmatprep.subr.mxu0 0.0
        %2860 = vmatpush1.msra.mxu0 0.0
        %2861 = vmatprep.subr.mxu0 0.0
        %2862 = vmatpush1.msra.mxu0 0.0
        %2863 = vmatprep.subr.mxu0 0.0
        %2864 = vmatpush1.msra.mxu0 0.0
        %2865 = vmatprep.subr.mxu0 0.0
        %2866 = vmatpush1.msra.mxu0 0.0
        %2867 = vmatprep.subr.mxu0 0.0
        %2868 = vmatpush1.msra.mxu0 0.0
        %2869 = vmatprep.subr.mxu0 0.0
        %2870 = vmatpush1.msra.mxu0 0.0
        %2871 = vmatprep.subr.mxu0 0.0
        %2872 = vmatpush1.msra.mxu0 0.0
        %2873 = vmatprep.subr.mxu0 0.0
        %2874 = vmatpush1.msra.mxu0 0.0
        %2875 = vmatprep.subr.mxu0 0.0
        %2876 = vmatpush1.msra.mxu0 0.0
        %2877 = vmatprep.subr.mxu0 0.0
        %2878 = vmatpush1.msra.mxu0 0.0
        %2879 = vmatprep.subr.mxu0 0.0
        %2880 = vmatpush1.msra.mxu0 0.0
        %2881 = vmatprep.subr.mxu0 0.0
        %2882 = vmatpush1.msra.mxu0 0.0
        %2883 = vmatprep.subr.mxu0 0.0
        %2884 = vmatpush1.msra.mxu0 0.0
        %2885 = vmatprep.subr.mxu0 0.0
        %2886 = vmatpush1.msra.mxu0 0.0
        %2887 = vmatprep.subr.mxu0 0.0
        %2888 = vmatpush1.msra.mxu0 0.0
        %2889 = vmatprep.subr.mxu0 0.0
        %2890 = vmatpush1.msra.mxu0 0.0
        %2891 = vmatprep.mubr.f32.mxu0 0.0
        %2892 = vmatmul.mubr.f32.gmra.mrb[0].mxu0 %v2739
        %v2893 = vpop.f32.mrb[0].mxu0
        %v2894 = vadd.f32 0.0, %v2893
        %v2895 = vpop.f32.mrb[0].mxu0
        %2896 = vdwg.mxu0
        %v2897 = vmul.f32 %v2894, 0.00390625
        %v2898 = vmul.f32 %v2826, %v2826
        %v2899 = vsub.f32 %v2897, %v2898
        %v2900 = vmax.f32 %v2899, 0.0
        %v2901 = vadd.f32 %v2900, 1e-05
        %v2902 = vrsqrt.pop %v2901
        %v2903 = vld [vmem:[%s5] sm:$0xff]
        %v2904 = vld [vmem:[%s5 + $0x8] sm:$0xff]
        %v2905 = vld [vmem:[%s5 + $0x10] sm:$0xff]
        %v2906 = vld [vmem:[%s5 + $0x18] sm:$0xff]
        %vm2907 = vcmask 261120
        %v2909 = vsel %vm2907, %v2826, 0
        %2911 = vmatprep.subr.mxu0 0.0
        %2912 = vmatpush1.msra.mxu0 %v2903
        %2913 = vmatprep.subr.mxu0 0.0
        %2914 = vmatpush1.msra.mxu0 %v2904
        %2915 = vmatprep.subr.mxu0 0.0
        %2916 = vmatpush1.msra.mxu0 %v2905
        %2917 = vmatprep.subr.mxu0 0.0
        %2918 = vmatpush1.msra.mxu0 %v2906
        %2919 = vmatprep.subr.mxu0 0.0
        %2920 = vmatpush1.msra.mxu0 0.0
        %2921 = vmatprep.subr.mxu0 0.0
        %2922 = vmatpush1.msra.mxu0 0.0
        %2923 = vmatprep.subr.mxu0 0.0
        %2924 = vmatpush1.msra.mxu0 0.0
        %2925 = vmatprep.subr.mxu0 0.0
        %2926 = vmatpush1.msra.mxu0 0.0
        %2927 = vmatprep.subr.mxu0 0.0
        %2928 = vmatpush1.msra.mxu0 0.0
        %2929 = vmatprep.subr.mxu0 0.0
        %2930 = vmatpush1.msra.mxu0 0.0
        %2931 = vmatprep.subr.mxu0 0.0
        %2932 = vmatpush1.msra.mxu0 0.0
        %2933 = vmatprep.subr.mxu0 0.0
        %2934 = vmatpush1.msra.mxu0 0.0
        %2935 = vmatprep.subr.mxu0 0.0
        %2936 = vmatpush1.msra.mxu0 0.0
        %2937 = vmatprep.subr.mxu0 0.0
        %2938 = vmatpush1.msra.mxu0 0.0
        %2939 = vmatprep.subr.mxu0 0.0
        %2940 = vmatpush1.msra.mxu0 0.0
        %2941 = vmatprep.subr.mxu0 0.0
        %2942 = vmatpush1.msra.mxu0 0.0
        %2943 = vmatprep.subr.mxu0 0.0
        %2944 = vmatpush1.msra.mxu0 0.0
        %2945 = vmatprep.subr.mxu0 0.0
        %2946 = vmatpush1.msra.mxu0 0.0
        %2947 = vmatprep.subr.mxu0 0.0
        %2948 = vmatpush1.msra.mxu0 0.0
        %2949 = vmatprep.subr.mxu0 0.0
        %2950 = vmatpush1.msra.mxu0 0.0
        %2951 = vmatprep.subr.mxu0 0.0
        %2952 = vmatpush1.msra.mxu0 0.0
        %2953 = vmatprep.subr.mxu0 0.0
        %2954 = vmatpush1.msra.mxu0 0.0
        %2955 = vmatprep.subr.mxu0 0.0
        %2956 = vmatpush1.msra.mxu0 0.0
        %2957 = vmatprep.subr.mxu0 0.0
        %2958 = vmatpush1.msra.mxu0 0.0
        %2959 = vmatprep.subr.mxu0 0.0
        %2960 = vmatpush1.msra.mxu0 0.0
        %2961 = vmatprep.subr.mxu0 0.0
        %2962 = vmatpush1.msra.mxu0 0.0
        %2963 = vmatprep.subr.mxu0 0.0
        %2964 = vmatpush1.msra.mxu0 0.0
        %2965 = vmatprep.subr.mxu0 0.0
        %2966 = vmatpush1.msra.mxu0 0.0
        %2967 = vmatprep.subr.mxu0 0.0
        %2968 = vmatpush1.msra.mxu0 0.0
        %2969 = vmatprep.subr.mxu0 0.0
        %2970 = vmatpush1.msra.mxu0 0.0
        %2971 = vmatprep.subr.mxu0 0.0
        %2972 = vmatpush1.msra.mxu0 0.0
        %2973 = vmatprep.subr.mxu0 0.0
        %2974 = vmatpush1.msra.mxu0 0.0
        %2975 = vmatprep.mubr.f32.mxu0 0.0
        %2976 = vmatmul.mubr.f32.gmra.mrb[0].mxu0 %v2909
        %v2977 = vpop.f32.mrb[0].mxu0
        %v2978 = vadd.f32 0.0, %v2977
        %v2979 = vpop.f32.mrb[0].mxu0
        %2980 = vdwg.mxu0
        %v2982 = vsel %vm2907, %v2902, 0
        %2984 = vmatprep.subr.mxu0 0.0
        %2985 = vmatpush1.msra.mxu0 %v2903
        %2986 = vmatprep.subr.mxu0 0.0
        %2987 = vmatpush1.msra.mxu0 %v2904
        %2988 = vmatprep.subr.mxu0 0.0
        %2989 = vmatpush1.msra.mxu0 %v2905
        %2990 = vmatprep.subr.mxu0 0.0
        %2991 = vmatpush1.msra.mxu0 %v2906
        %2992 = vmatprep.subr.mxu0 0.0
        %2993 = vmatpush1.msra.mxu0 0.0
        %2994 = vmatprep.subr.mxu0 0.0
        %2995 = vmatpush1.msra.mxu0 0.0
        %2996 = vmatprep.subr.mxu0 0.0
        %2997 = vmatpush1.msra.mxu0 0.0
        %2998 = vmatprep.subr.mxu0 0.0
        %2999 = vmatpush1.msra.mxu0 0.0
        %3000 = vmatprep.subr.mxu0 0.0
        %3001 = vmatpush1.msra.mxu0 0.0
        %3002 = vmatprep.subr.mxu0 0.0
        %3003 = vmatpush1.msra.mxu0 0.0
        %3004 = vmatprep.subr.mxu0 0.0
        %3005 = vmatpush1.msra.mxu0 0.0
        %3006 = vmatprep.subr.mxu0 0.0
        %3007 = vmatpush1.msra.mxu0 0.0
        %3008 = vmatprep.subr.mxu0 0.0
        %3009 = vmatpush1.msra.mxu0 0.0
        %3010 = vmatprep.subr.mxu0 0.0
        %3011 = vmatpush1.msra.mxu0 0.0
        %3012 = vmatprep.subr.mxu0 0.0
        %3013 = vmatpush1.msra.mxu0 0.0
        %3014 = vmatprep.subr.mxu0 0.0
        %3015 = vmatpush1.msra.mxu0 0.0
        %3016 = vmatprep.subr.mxu0 0.0
        %3017 = vmatpush1.msra.mxu0 0.0
        %3018 = vmatprep.subr.mxu0 0.0
        %3019 = vmatpush1.msra.mxu0 0.0
        %3020 = vmatprep.subr.mxu0 0.0
        %3021 = vmatpush1.msra.mxu0 0.0
        %3022 = vmatprep.subr.mxu0 0.0
        %3023 = vmatpush1.msra.mxu0 0.0
        %3024 = vmatprep.subr.mxu0 0.0
        %3025 = vmatpush1.msra.mxu0 0.0
        %3026 = vmatprep.subr.mxu0 0.0
        %3027 = vmatpush1.msra.mxu0 0.0
        %3028 = vmatprep.subr.mxu0 0.0
        %3029 = vmatpush1.msra.mxu0 0.0
        %3030 = vmatprep.subr.mxu0 0.0
        %3031 = vmatpush1.msra.mxu0 0.0
        %3032 = vmatprep.subr.mxu0 0.0
        %3033 = vmatpush1.msra.mxu0 0.0
        %3034 = vmatprep.subr.mxu0 0.0
        %3035 = vmatpush1.msra.mxu0 0.0
        %3036 = vmatprep.subr.mxu0 0.0
        %3037 = vmatpush1.msra.mxu0 0.0
        %3038 = vmatprep.subr.mxu0 0.0
        %3039 = vmatpush1.msra.mxu0 0.0
        %3040 = vmatprep.subr.mxu0 0.0
        %3041 = vmatpush1.msra.mxu0 0.0
        %3042 = vmatprep.subr.mxu0 0.0
        %3043 = vmatpush1.msra.mxu0 0.0
        %3044 = vmatprep.subr.mxu0 0.0
        %3045 = vmatpush1.msra.mxu0 0.0
        %3046 = vmatprep.subr.mxu0 0.0
        %3047 = vmatpush1.msra.mxu0 0.0
        %3048 = vmatprep.mubr.f32.mxu0 0.0
        %3049 = vmatmul.mubr.f32.gmra.mrb[0].mxu0 %v2982
        %v3050 = vpop.f32.mrb[0].mxu0
        %v3051 = vadd.f32 0.0, %v3050
        %v3052 = vpop.f32.mrb[0].mxu0
        %3053 = vdwg.mxu0
        %v3054 = vld [vmem:[%s2] sm:$0x1]
        %v3055 = vmul.f32 %v3051, %v3054
        %v3056 = vld [vmem:[%s3] sm:$0x1]
        %v3057 = vmul.f32 %v2978, %v3055
        %v3058 = vsub.f32 %v3056, %v3057
        %v3059 = vld [vmem:[#allocation2] sm:$0xff]
        %v3060 = vld [vmem:[#allocation2 + $0x8] sm:$0xff]
        %v3061 = vld [vmem:[#allocation2 + $0x10] sm:$0xff]
        %v3062 = vld [vmem:[#allocation2 + $0x18] sm:$0xff]
        %v3063 = vld [vmem:[#allocation2 + $0x20] sm:$0xff]
        %v3064 = vld [vmem:[#allocation2 + $0x28] sm:$0xff]
        %v3065 = vld [vmem:[#allocation2 + $0x30] sm:$0xff]
        %v3066 = vld [vmem:[#allocation2 + $0x38] sm:$0xff]
        %v3067 = vld [vmem:[#allocation2 + $0x40] sm:$0xff]
        %v3068 = vld [vmem:[#allocation2 + $0x48] sm:$0xff]
        %v3069 = vld [vmem:[#allocation2 + $0x50] sm:$0xff]
        %v3070 = vld [vmem:[#allocation2 + $0x58] sm:$0xff]
        %v3071 = vld [vmem:[#allocation2 + $0x60] sm:$0xff]
        %v3072 = vld [vmem:[#allocation2 + $0x68] sm:$0xff]
        %v3073 = vld [vmem:[#allocation2 + $0x70] sm:$0xff]
        %v3074 = vld [vmem:[#allocation2 + $0x78] sm:$0xff]
        %v3075 = vld [vmem:[#allocation2 + $0x80] sm:$0xff]
        %v3076 = vld [vmem:[#allocation2 + $0x88] sm:$0xff]
        %v3077 = vld [vmem:[#allocation2 + $0x90] sm:$0xff]
        %v3078 = vld [vmem:[#allocation2 + $0x98] sm:$0xff]
        %v3079 = vld [vmem:[#allocation2 + $0xa0] sm:$0xff]
        %v3080 = vld [vmem:[#allocation2 + $0xa8] sm:$0xff]
        %v3081 = vld [vmem:[#allocation2 + $0xb0] sm:$0xff]
        %v3082 = vld [vmem:[#allocation2 + $0xb8] sm:$0xff]
        %v3083 = vld [vmem:[#allocation2 + $0xc0] sm:$0xff]
        %v3084 = vld [vmem:[#allocation2 + $0xc8] sm:$0xff]
        %v3085 = vld [vmem:[#allocation2 + $0xd0] sm:$0xff]
        %v3086 = vld [vmem:[#allocation2 + $0xd8] sm:$0xff]
        %v3087 = vld [vmem:[#allocation2 + $0xe0] sm:$0xff]
        %v3088 = vld [vmem:[#allocation2 + $0xe8] sm:$0xff]
        %v3089 = vld [vmem:[#allocation2 + $0xf0] sm:$0xff]
        %v3090 = vld [vmem:[#allocation2 + $0xf8] sm:$0xff]
        %v3091 = vlaneseq
        %v3092 = vshrl.u32 %v3091, 7
        %v3093 = vsub.s32 0, %v3092
        %v3094 = vrot.slane %v3055, %v3093
        %v3095 = vmul.f32 %v3059, %v3094
        %v3096 = vmul.f32 %v3060, %v3094
        %v3097 = vmul.f32 %v3061, %v3094
        %v3098 = vmul.f32 %v3062, %v3094
        %v3099 = vmul.f32 %v3063, %v3094
        %v3100 = vmul.f32 %v3064, %v3094
        %v3101 = vmul.f32 %v3065, %v3094
        %v3102 = vmul.f32 %v3066, %v3094
        %v3103 = vmul.f32 %v3067, %v3094
        %v3104 = vmul.f32 %v3068, %v3094
        %v3105 = vmul.f32 %v3069, %v3094
        %v3106 = vmul.f32 %v3070, %v3094
        %v3107 = vmul.f32 %v3071, %v3094
        %v3108 = vmul.f32 %v3072, %v3094
        %v3109 = vmul.f32 %v3073, %v3094
        %v3110 = vmul.f32 %v3074, %v3094
        %v3111 = vmul.f32 %v3075, %v3094
        %v3112 = vmul.f32 %v3076, %v3094
        %v3113 = vmul.f32 %v3077, %v3094
        %v3114 = vmul.f32 %v3078, %v3094
        %v3115 = vmul.f32 %v3079, %v3094
        %v3116 = vmul.f32 %v3080, %v3094
        %v3117 = vmul.f32 %v3081, %v3094
        %v3118 = vmul.f32 %v3082, %v3094
        %v3119 = vmul.f32 %v3083, %v3094
        %v3120 = vmul.f32 %v3084, %v3094
        %v3121 = vmul.f32 %v3085, %v3094
        %v3122 = vmul.f32 %v3086, %v3094
        %v3123 = vmul.f32 %v3087, %v3094
        %v3124 = vmul.f32 %v3088, %v3094
        %v3125 = vmul.f32 %v3089, %v3094
        %v3126 = vmul.f32 %v3090, %v3094
        %v3128 = vlaneseq
        %v3129 = vshrl.u32 %v3128, 7
        %v3130 = vsub.s32 0, %v3129
        %v3131 = vrot.slane %v3058, %v3130
        %v3133 = vadd.f32 %v3095, %v3131
        %v3134 = vadd.f32 %v3096, %v3131
        %v3135 = vadd.f32 %v3097, %v3131
        %v3136 = vadd.f32 %v3098, %v3131
        %v3137 = vadd.f32 %v3099, %v3131
        %v3138 = vadd.f32 %v3100, %v3131
        %v3139 = vadd.f32 %v3101, %v3131
        %v3140 = vadd.f32 %v3102, %v3131
        %v3141 = vadd.f32 %v3103, %v3131
        %v3142 = vadd.f32 %v3104, %v3131
        %v3143 = vadd.f32 %v3105, %v3131
        %v3144 = vadd.f32 %v3106, %v3131
        %v3145 = vadd.f32 %v3107, %v3131
        %v3146 = vadd.f32 %v3108, %v3131
        %v3147 = vadd.f32 %v3109, %v3131
        %v3148 = vadd.f32 %v3110, %v3131
        %v3149 = vadd.f32 %v3111, %v3131
        %v3150 = vadd.f32 %v3112, %v3131
        %v3151 = vadd.f32 %v3113, %v3131
        %v3152 = vadd.f32 %v3114, %v3131
        %v3153 = vadd.f32 %v3115, %v3131
        %v3154 = vadd.f32 %v3116, %v3131
        %v3155 = vadd.f32 %v3117, %v3131
        %v3156 = vadd.f32 %v3118, %v3131
        %v3157 = vadd.f32 %v3119, %v3131
        %v3158 = vadd.f32 %v3120, %v3131
        %v3159 = vadd.f32 %v3121, %v3131
        %v3160 = vadd.f32 %v3122, %v3131
        %v3161 = vadd.f32 %v3123, %v3131
        %v3162 = vadd.f32 %v3124, %v3131
        %v3163 = vadd.f32 %v3125, %v3131
        %v3164 = vadd.f32 %v3126, %v3131
        %v3165 = vmax.f32 %v3133, 0.0
        %v3166 = vmax.f32 %v3134, 0.0
        %v3167 = vmax.f32 %v3135, 0.0
        %v3168 = vmax.f32 %v3136, 0.0
        %v3169 = vmax.f32 %v3137, 0.0
        %v3170 = vmax.f32 %v3138, 0.0
        %v3171 = vmax.f32 %v3139, 0.0
        %v3172 = vmax.f32 %v3140, 0.0
        %v3173 = vmax.f32 %v3141, 0.0
        %v3174 = vmax.f32 %v3142, 0.0
        %v3175 = vmax.f32 %v3143, 0.0
        %v3176 = vmax.f32 %v3144, 0.0
        %v3177 = vmax.f32 %v3145, 0.0
        %v3178 = vmax.f32 %v3146, 0.0
        %v3179 = vmax.f32 %v3147, 0.0
        %v3180 = vmax.f32 %v3148, 0.0
        %v3181 = vmax.f32 %v3149, 0.0
        %v3182 = vmax.f32 %v3150, 0.0
        %v3183 = vmax.f32 %v3151, 0.0
        %v3184 = vmax.f32 %v3152, 0.0
        %v3185 = vmax.f32 %v3153, 0.0
        %v3186 = vmax.f32 %v3154, 0.0
        %v3187 = vmax.f32 %v3155, 0.0
        %v3188 = vmax.f32 %v3156, 0.0
        %v3189 = vmax.f32 %v3157, 0.0
        %v3190 = vmax.f32 %v3158, 0.0
        %v3191 = vmax.f32 %v3159, 0.0
        %v3192 = vmax.f32 %v3160, 0.0
        %v3193 = vmax.f32 %v3161, 0.0
        %v3194 = vmax.f32 %v3162, 0.0
        %v3195 = vmax.f32 %v3163, 0.0
        %v3196 = vmax.f32 %v3164, 0.0
        %3197 = vst [vmem:[%s244] sm:$0xff] %v3165
        %3198 = vst [vmem:[%s244 + $0x8] sm:$0xff] %v3166
        %3199 = vst [vmem:[%s244 + $0x10] sm:$0xff] %v3167
        %3200 = vst [vmem:[%s244 + $0x18] sm:$0xff] %v3168
        %3201 = vst [vmem:[%s244 + $0x20] sm:$0xff] %v3169
        %3202 = vst [vmem:[%s244 + $0x28] sm:$0xff] %v3170
        %3203 = vst [vmem:[%s244 + $0x30] sm:$0xff] %v3171
        %3204 = vst [vmem:[%s244 + $0x38] sm:$0xff] %v3172
        %3205 = vst [vmem:[%s244 + $0x40] sm:$0xff] %v3173
        %3206 = vst [vmem:[%s244 + $0x48] sm:$0xff] %v3174
        %3207 = vst [vmem:[%s244 + $0x50] sm:$0xff] %v3175
        %3208 = vst [vmem:[%s244 + $0x58] sm:$0xff] %v3176
        %3209 = vst [vmem:[%s244 + $0x60] sm:$0xff] %v3177
        %3210 = vst [vmem:[%s244 + $0x68] sm:$0xff] %v3178
        %3211 = vst [vmem:[%s244 + $0x70] sm:$0xff] %v3179
        %3212 = vst [vmem:[%s244 + $0x78] sm:$0xff] %v3180
        %3213 = vst [vmem:[%s244 + $0x80] sm:$0xff] %v3181
        %3214 = vst [vmem:[%s244 + $0x88] sm:$0xff] %v3182
        %3215 = vst [vmem:[%s244 + $0x90] sm:$0xff] %v3183
        %3216 = vst [vmem:[%s244 + $0x98] sm:$0xff] %v3184
        %3217 = vst [vmem:[%s244 + $0xa0] sm:$0xff] %v3185
        %3218 = vst [vmem:[%s244 + $0xa8] sm:$0xff] %v3186
        %3219 = vst [vmem:[%s244 + $0xb0] sm:$0xff] %v3187
        %3220 = vst [vmem:[%s244 + $0xb8] sm:$0xff] %v3188
        %3221 = vst [vmem:[%s244 + $0xc0] sm:$0xff] %v3189
        %3222 = vst [vmem:[%s244 + $0xc8] sm:$0xff] %v3190
        %3223 = vst [vmem:[%s244 + $0xd0] sm:$0xff] %v3191
        %3224 = vst [vmem:[%s244 + $0xd8] sm:$0xff] %v3192
        %3225 = vst [vmem:[%s244 + $0xe0] sm:$0xff] %v3193
        %3226 = vst [vmem:[%s244 + $0xe8] sm:$0xff] %v3194
        %3227 = vst [vmem:[%s244 + $0xf0] sm:$0xff] %v3195
        %3228 = vst [vmem:[%s244 + $0xf8] sm:$0xff] %v3196
        %s3229 = sand.u32 %s159, 1
        %s3230 = scalar_lea.sflag [#allocation4], %s3229
        %s3231 = sand.u32 %s159, 1
        %s3232 = smul.addr %s3231, 256
        %s3233 = scalar_lea.vmem [#allocation3], %s3232
        // Predicated region
        $region45: #{tpu_custom_call.1} parent=43 // pred_check
          %p3234 = pneg %p169
        $region46: #{tpu_custom_call.1} parent=43 // pred_check_branch
          %3236 = sbr.rel (%p3234) target = $region48
        $region47: #{tpu_custom_call.1} parent=43 // pred_region
          %s3238 = ssub.s32 4096, 4096
          %3239 = vsyncadd %s3230, %s3238
          %s3240 = smul.addr %s20, 32
          %s3241 = smul.addr %s3240, 128
          %s3242 = scalar_lea.hbm %s6, %s3241
          %s3243 = sshll.u32 %s3233, 4
          %s3244 = int_to_ptr.vmem [resolvable:$true] %s3243
          %3249 = dma.vmem_to_hbm [thread:$0]  %s3244, 4096, %s3242, %s3230, 128, 128, 8
        $region48: #{tpu_custom_call.1} parent=43 // pred_fallthru
          _
      $region44: #{tpu_custom_call.1} parent=5 // pred_fallthru
        _
      %p3250 = scmp.le.s32.totalorder 2, %s15
      // Predicated region
      $region49: #{tpu_custom_call.1} parent=5 // pred_check
        %p3251 = pneg %p3250
      $region50: #{tpu_custom_call.1} parent=5 // pred_check_branch
        %3253 = sbr.rel (%p3251) target = $region52
      $region51: #{tpu_custom_call.1} parent=5 // pred_region
        %s3254 = ssub.s32 %s15, 2
        // Predicated region
        $region53: #{tpu_custom_call.1} parent=51 // pred_check
          %p3255 = pneg %p175
        $region54: #{tpu_custom_call.1} parent=51 // pred_check_branch
          %3257 = sbr.rel (%p3255) target = $region56
        $region55: #{tpu_custom_call.1} parent=51 // pred_region
          %s3258 = sand.u32 %s160, 1
          %s3259 = scalar_lea.sflag [#allocation4], %s3258
          %s3260 = sand.u32 %s160, 1
          %s3261 = smul.addr %s3260, 256
          %s3262 = scalar_lea.vmem [#allocation3], %s3261
          %3263 = dma.done %s3259, 4096
        $region56: #{tpu_custom_call.1} parent=51 // pred_fallthru
          _
      $region52: #{tpu_custom_call.1} parent=5 // pred_fallthru
        _
    $region6: #{tpu_custom_call.1} parent=1 // loop_footer
      %s19 = sadd.s32 1, %s15
    $region7: #{tpu_custom_call.1} parent=1 // loop_footer_branch
      %14 = sbr.rel target = $region3
    $region8: #{tpu_custom_call.1} parent=1 // loop_exit
      _
    %3264 = vsyncpa [#allocation4], 1
    %s3265 = scalar_lea.sflag [#allocation4], 1
    %3266 = vsyncpa %s3265, 1

</llo_original>
